<compile_context>
chip_gen: v5e
topology: v5e:2x2
jax: 0.10.0
libtpu: 0.0.40
codegen_flags: <defaults>
</compile_context>

<pallas_src>
import math
import functools

import jax
import jax.numpy as jnp
from jax import lax
from jax.experimental import pallas as pl
from jax.experimental.pallas import tpu as pltpu


def _layer_norm(y, gamma, beta, eps=1e-5):
    mu = jnp.mean(y, axis=-1, keepdims=True)
    var = jnp.mean((y - mu) ** 2, axis=-1, keepdims=True)
    return (y - mu) * lax.rsqrt(var + eps) * gamma + beta


def _gelu_exact(x):
    # F.gelu default = exact erf-based GELU
    return 0.5 * x * (1.0 + lax.erf(x * (1.0 / math.sqrt(2.0))))


def temporal_block_kernel(x_ref,
                          wq_ref, bq_ref, wk_ref, bk_ref, wv_ref, bv_ref,
                          wfc_ref, bfc_ref, g1_ref, be1_ref,
                          w1_ref, b1_ref, w2_ref, b2_ref, g2_ref, be2_ref,
                          o_ref, *, b_blk, seq_len, head_num, atten_dim):
    Bb, T, H, D = b_blk, seq_len, head_num, atten_dim
    N = Bb * T                                    # rows of the flattened slab

    x = x_ref[...].astype(jnp.float32)            # (N, C), f32 for residual/LN
    xb = x.astype(jnp.bfloat16)

    # --- QKV projections on the flattened slab (bf16 MXU, f32 accumulate) ----
    q = jnp.dot(xb, wq_ref[...], preferred_element_type=jnp.float32) + bq_ref[...]
    k = jnp.dot(xb, wk_ref[...], preferred_element_type=jnp.float32) + bk_ref[...]
    v = jnp.dot(xb, wv_ref[...], preferred_element_type=jnp.float32) + bv_ref[...]

    # --- regroup heads once into a leading batch axis: (N, H*D) -> (H*Bb, T, D)
    #     (T == 8 keeps the (Bb*T, D) -> (Bb, T, D) reshape sublane-aligned.)
    def to_heads(a):
        return jnp.concatenate(
            [a[:, h * D:(h + 1) * D].reshape(Bb, T, D) for h in range(H)], axis=0)

    qh = to_heads(q).astype(jnp.bfloat16)
    kh = to_heads(k).astype(jnp.bfloat16)
    vh = to_heads(v).astype(jnp.bfloat16)

    # --- scaled dot-product attention, batched over (head, sequence) ---------
    scale = 1.0 / math.sqrt(float(D))
    s = jnp.einsum("gqd,gkd->gqk", qh, kh,
                   preferred_element_type=jnp.float32) * scale     # (H*Bb, T, T)
    s = s - jnp.max(s, axis=-1, keepdims=True)
    p = jnp.exp(s)
    p = p * pl.reciprocal(jnp.sum(p, axis=-1, keepdims=True), approx=True)
    ctx = jnp.einsum("gqk,gkd->gqd", p.astype(jnp.bfloat16), vh,
                     preferred_element_type=jnp.float32)           # (H*Bb, T, D)

    # --- output projection: head re-merge folded into fc (sublane W slices) --
    wfc = wfc_ref[...]                                             # (H*D, C) bf16
    attn_out = bfc_ref[...]                                        # (1, C) f32
    for h in range(H):
        ctx_h = ctx[h * Bb:(h + 1) * Bb].reshape(N, D).astype(jnp.bfloat16)
        attn_out = attn_out + jnp.dot(ctx_h, wfc[h * D:(h + 1) * D, :],
                                      preferred_element_type=jnp.float32)

    y = _layer_norm(attn_out + x, g1_ref[...], be1_ref[...])       # (N, C), f32

    # --- feed-forward (1x1 convs == per-timestep linear) ---------------------
    h1 = jnp.dot(y.astype(jnp.bfloat16), w1_ref[...],
                 preferred_element_type=jnp.float32) + b1_ref[...]  # (N, FF)
    h1 = _gelu_exact(h1)
    h2 = jnp.dot(h1.astype(jnp.bfloat16), w2_ref[...],
                 preferred_element_type=jnp.float32) + b2_ref[...]  # (N, C)

    out = _layer_norm(h2 + y, g2_ref[...], be2_ref[...])
    o_ref[...] = out.astype(o_ref.dtype)


def temporal_transformer_block(x, params, *, head_num, atten_dim, batch_block=8):
    """x: (B, T, model_dim) float32.  params: dict of 2-D f32 arrays (see init)."""
    B, T, C = x.shape
    b_blk = min(batch_block, B)
    assert B % b_blk == 0, "batch must be divisible by the batch block"
    assert (b_blk * T) % 8 == 0, "flattened rows per block must be sublane aligned"

    names = ("wq", "bq", "wk", "bk", "wv", "bv",
             "wfc", "bfc", "g1", "be1",
             "w1", "b1", "w2", "b2", "g2", "be2")
    matmul_weights = {"wq", "wk", "wv", "wfc", "w1", "w2"}
    plist = []
    for n in names:
        p = params[n]
        if n in matmul_weights:
            p = p.astype(jnp.bfloat16)      # bf16 weights: MXU-rate + half the DMA
        plist.append(p)

    x_flat = x.reshape(B * T, C)            # flattened (batch*time, channels) slab

    in_specs = [pl.BlockSpec((b_blk * T, C), lambda i: (i, 0))]
    for p in plist:
        in_specs.append(pl.BlockSpec(p.shape, lambda i, _nd=p.ndim: (0,) * _nd))

    kernel = functools.partial(temporal_block_kernel,
                               b_blk=b_blk, seq_len=T,
                               head_num=head_num, atten_dim=atten_dim)

    out_flat = pl.pallas_call(
        kernel,
        out_shape=jax.ShapeDtypeStruct((B * T, C), x.dtype),
        grid_spec=pltpu.PrefetchScalarGridSpec(
            num_scalar_prefetch=0,
            grid=(B // b_blk,),
            in_specs=in_specs,
            out_specs=pl.BlockSpec((b_blk * T, C), lambda i: (i, 0)),
        ),
        compiler_params=pltpu.CompilerParams(
            dimension_semantics=("parallel",),
            vmem_limit_bytes=48 * 1024 * 1024,
        ),
    )(x_flat, *plist)

    return out_flat.reshape(B, T, C)


def init_params(key, model_dim, ff_dim, atten_dim, head_num):
    """Deterministic synthetic parameters (matching the module's shapes).

    Weight matrices are stored pre-transposed as (in, out) so the kernel computes
    x @ W; biases are (1, out)."""
    hd = atten_dim * head_num
    ks = jax.random.split(key, 12)

    def lin(k, fan_in, fan_out):
        return (jax.random.normal(k, (fan_in, fan_out), jnp.float32)
                / jnp.sqrt(jnp.float32(fan_in)))

    def vec(k, n, scale=0.02):
        return scale * jax.random.normal(k, (1, n), jnp.float32)

    gain = math.sqrt(2.0 / (1.0 + 0.01 ** 2))   # kaiming_normal (leaky_relu) gain

    return dict(
        wq=lin(ks[0], model_dim, hd),   bq=vec(ks[1], hd),
        wk=lin(ks[2], model_dim, hd),   bk=vec(ks[3], hd),
        wv=lin(ks[4], model_dim, hd),   bv=vec(ks[5], hd),
        wfc=lin(ks[6], hd, model_dim),  bfc=vec(ks[7], model_dim),
        g1=jnp.ones((1, model_dim), jnp.float32),
        be1=jnp.zeros((1, model_dim), jnp.float32),
        w1=gain * lin(ks[8], model_dim, ff_dim),  b1=vec(ks[9], ff_dim),
        w2=gain * lin(ks[10], ff_dim, model_dim), b2=vec(ks[11], model_dim),
        g2=jnp.ones((1, model_dim), jnp.float32),
        be2=jnp.zeros((1, model_dim), jnp.float32),
    )


def reference_forward(x, p, *, head_num, atten_dim, matmul_dtype=jnp.bfloat16):
    """Pure-JAX reference mirroring the PyTorch forward (eval mode) with the same
    precision policy as the kernel (bf16 matmul inputs, f32 everything else)."""
    B, T, C = x.shape
    H, D = head_num, atten_dim

    def mm(a, w):
        return jnp.einsum("...i,ij->...j", a.astype(matmul_dtype),
                          w.astype(matmul_dtype),
                          preferred_element_type=jnp.float32)

    q = mm(x, p["wq"]) + p["bq"]
    k = mm(x, p["wk"]) + p["bk"]
    v = mm(x, p["wv"]) + p["bv"]

    def split(a):  # (B, T, H*D) -> (B, H, T, D)
        return a.reshape(B, T, H, D).transpose(0, 2, 1, 3)

    qh, kh, vh = split(q), split(k), split(v)
    s = jnp.einsum("bhqd,bhkd->bhqk", qh.astype(matmul_dtype),
                   kh.astype(matmul_dtype),
                   preferred_element_type=jnp.float32) / math.sqrt(D)
    a = jax.nn.softmax(s, axis=-1)
    ctx = jnp.einsum("bhqk,bhkd->bhqd", a.astype(matmul_dtype),
                     vh.astype(matmul_dtype),
                     preferred_element_type=jnp.float32)
    ctx = ctx.transpose(0, 2, 1, 3).reshape(B, T, H * D)

    attn_out = mm(ctx, p["wfc"]) + p["bfc"]
    y = _layer_norm(attn_out + x, p["g1"], p["be1"])
    h1 = _gelu_exact(mm(y, p["w1"]) + p["b1"])
    h2 = mm(h1, p["w2"]) + p["b2"]
    return _layer_norm(h2 + y, p["g2"], p["be2"])


if __name__ == "__main__":
    B, T = 16, 8
    model_dim, ff_dim, atten_dim, head_num = 32, 64, 16, 4

    key = jax.random.PRNGKey(0)
    kx, kp = jax.random.split(key)
    x = jax.random.normal(kx, (B, T, model_dim), jnp.float32)
    params = init_params(kp, model_dim, ff_dim, atten_dim, head_num)

    out = temporal_transformer_block(x, params, head_num=head_num,
                                     atten_dim=atten_dim, batch_block=8)
    out = jax.block_until_ready(out)

    ref = reference_forward(x, params, head_num=head_num, atten_dim=atten_dim)
    assert out.shape == (B, T, model_dim)
    # Tolerance covers MXU accumulation-order and approx-reciprocal softmax only;
    # the reference already mirrors the kernel's bf16-matmul / f32-elementwise policy.
    assert jnp.max(jnp.abs(out - ref)) < 5e-2, "mismatch vs. pure-JAX reference"

    print("KERNEL_OK")
</pallas_src>

<mosaic_0001>
module attributes {stable_mosaic.version = 11 : i64} {
  func.func @temporal_block_kernel(%arg0: i32, %arg1: memref<64x32xf32, #tpu.memory_space<vmem>>, %arg2: memref<32x64xbf16, #tpu.memory_space<vmem>>, %arg3: memref<1x64xf32, #tpu.memory_space<vmem>>, %arg4: memref<32x64xbf16, #tpu.memory_space<vmem>>, %arg5: memref<1x64xf32, #tpu.memory_space<vmem>>, %arg6: memref<32x64xbf16, #tpu.memory_space<vmem>>, %arg7: memref<1x64xf32, #tpu.memory_space<vmem>>, %arg8: memref<64x32xbf16, #tpu.memory_space<vmem>>, %arg9: memref<1x32xf32, #tpu.memory_space<vmem>>, %arg10: memref<1x32xf32, #tpu.memory_space<vmem>>, %arg11: memref<1x32xf32, #tpu.memory_space<vmem>>, %arg12: memref<32x64xbf16, #tpu.memory_space<vmem>>, %arg13: memref<1x64xf32, #tpu.memory_space<vmem>>, %arg14: memref<64x32xbf16, #tpu.memory_space<vmem>>, %arg15: memref<1x32xf32, #tpu.memory_space<vmem>>, %arg16: memref<1x32xf32, #tpu.memory_space<vmem>>, %arg17: memref<1x32xf32, #tpu.memory_space<vmem>>, %arg18: memref<64x32xf32, #tpu.memory_space<vmem>>) attributes {dimension_semantics = [#tpu.dimension_semantics<parallel>], iteration_bounds = array<i64: 2>, scalar_prefetch = 0 : i64, scratch_operands = 0 : i64, tpu.core_type = #tpu.core_type<tc>, window_params = [{transform_indices = @transform_0, window_bounds = array<i64: 64, 32>}, {pipeline_mode = #tpu.pipeline_mode<synchronous>, transform_indices = @transform_1, window_bounds = array<i64: 32, 64>}, {pipeline_mode = #tpu.pipeline_mode<synchronous>, transform_indices = @transform_2, window_bounds = array<i64: 1, 64>}, {pipeline_mode = #tpu.pipeline_mode<synchronous>, transform_indices = @transform_3, window_bounds = array<i64: 32, 64>}, {pipeline_mode = #tpu.pipeline_mode<synchronous>, transform_indices = @transform_4, window_bounds = array<i64: 1, 64>}, {pipeline_mode = #tpu.pipeline_mode<synchronous>, transform_indices = @transform_5, window_bounds = array<i64: 32, 64>}, {pipeline_mode = #tpu.pipeline_mode<synchronous>, transform_indices = @transform_6, window_bounds = array<i64: 1, 64>}, {pipeline_mode = #tpu.pipeline_mode<synchronous>, transform_indices = @transform_7, window_bounds = array<i64: 64, 32>}, {pipeline_mode = #tpu.pipeline_mode<synchronous>, transform_indices = @transform_8, window_bounds = array<i64: 1, 32>}, {pipeline_mode = #tpu.pipeline_mode<synchronous>, transform_indices = @transform_9, window_bounds = array<i64: 1, 32>}, {pipeline_mode = #tpu.pipeline_mode<synchronous>, transform_indices = @transform_10, window_bounds = array<i64: 1, 32>}, {pipeline_mode = #tpu.pipeline_mode<synchronous>, transform_indices = @transform_11, window_bounds = array<i64: 32, 64>}, {pipeline_mode = #tpu.pipeline_mode<synchronous>, transform_indices = @transform_12, window_bounds = array<i64: 1, 64>}, {pipeline_mode = #tpu.pipeline_mode<synchronous>, transform_indices = @transform_13, window_bounds = array<i64: 64, 32>}, {pipeline_mode = #tpu.pipeline_mode<synchronous>, transform_indices = @transform_14, window_bounds = array<i64: 1, 32>}, {pipeline_mode = #tpu.pipeline_mode<synchronous>, transform_indices = @transform_15, window_bounds = array<i64: 1, 32>}, {pipeline_mode = #tpu.pipeline_mode<synchronous>, transform_indices = @transform_16, window_bounds = array<i64: 1, 32>}, {transform_indices = @transform_17, window_bounds = array<i64: 64, 32>}]} {
    %c0 = arith.constant 0 : index
    %c0_0 = arith.constant 0 : index
    %0 = vector.load %arg1[%c0, %c0_0] : memref<64x32xf32, #tpu.memory_space<vmem>>, vector<64x32xf32>
    %1 = arith.truncf %0 : vector<64x32xf32> to vector<64x32xbf16>
    %c0_1 = arith.constant 0 : index
    %c0_2 = arith.constant 0 : index
    %2 = vector.load %arg2[%c0_1, %c0_2] : memref<32x64xbf16, #tpu.memory_space<vmem>>, vector<32x64xbf16>
    %cst = arith.constant dense<0.000000e+00> : vector<64x64xf32>
    %3 = tpu.matmul %1, %2, %cst {dimension_numbers = #tpu.dot_dimension_numbers<[1], [0], [0], [1], [0, 0, 1, 1], [], []>} : vector<64x32xbf16>, vector<32x64xbf16>, vector<64x64xf32> -> vector<64x64xf32>
    %c0_3 = arith.constant 0 : index
    %c0_4 = arith.constant 0 : index
    %4 = vector.load %arg3[%c0_3, %c0_4] : memref<1x64xf32, #tpu.memory_space<vmem>>, vector<1x64xf32>
    %5 = vector.broadcast %4 : vector<1x64xf32> to vector<64x64xf32>
    %6 = arith.addf %3, %5 : vector<64x64xf32>
    %c0_5 = arith.constant 0 : index
    %c0_6 = arith.constant 0 : index
    %7 = vector.load %arg4[%c0_5, %c0_6] : memref<32x64xbf16, #tpu.memory_space<vmem>>, vector<32x64xbf16>
    %cst_7 = arith.constant dense<0.000000e+00> : vector<64x64xf32>
    %8 = tpu.matmul %1, %7, %cst_7 {dimension_numbers = #tpu.dot_dimension_numbers<[1], [0], [0], [1], [0, 0, 1, 1], [], []>} : vector<64x32xbf16>, vector<32x64xbf16>, vector<64x64xf32> -> vector<64x64xf32>
    %c0_8 = arith.constant 0 : index
    %c0_9 = arith.constant 0 : index
    %9 = vector.load %arg5[%c0_8, %c0_9] : memref<1x64xf32, #tpu.memory_space<vmem>>, vector<1x64xf32>
    %10 = vector.broadcast %9 : vector<1x64xf32> to vector<64x64xf32>
    %11 = arith.addf %8, %10 : vector<64x64xf32>
    %c0_10 = arith.constant 0 : index
    %c0_11 = arith.constant 0 : index
    %12 = vector.load %arg6[%c0_10, %c0_11] : memref<32x64xbf16, #tpu.memory_space<vmem>>, vector<32x64xbf16>
    %cst_12 = arith.constant dense<0.000000e+00> : vector<64x64xf32>
    %13 = tpu.matmul %1, %12, %cst_12 {dimension_numbers = #tpu.dot_dimension_numbers<[1], [0], [0], [1], [0, 0, 1, 1], [], []>} : vector<64x32xbf16>, vector<32x64xbf16>, vector<64x64xf32> -> vector<64x64xf32>
    %c0_13 = arith.constant 0 : index
    %c0_14 = arith.constant 0 : index
    %14 = vector.load %arg7[%c0_13, %c0_14] : memref<1x64xf32, #tpu.memory_space<vmem>>, vector<1x64xf32>
    %15 = vector.broadcast %14 : vector<1x64xf32> to vector<64x64xf32>
    %16 = arith.addf %13, %15 : vector<64x64xf32>
    %17 = vector.extract_strided_slice %6 {offsets = [0, 0], sizes = [64, 16], strides = [1, 1]} : vector<64x64xf32> to vector<64x16xf32>
    %18 = vector.shape_cast %17 : vector<64x16xf32> to vector<8x8x16xf32>
    %19 = vector.extract_strided_slice %6 {offsets = [0, 16], sizes = [64, 16], strides = [1, 1]} : vector<64x64xf32> to vector<64x16xf32>
    %20 = vector.shape_cast %19 : vector<64x16xf32> to vector<8x8x16xf32>
    %21 = vector.extract_strided_slice %6 {offsets = [0, 32], sizes = [64, 16], strides = [1, 1]} : vector<64x64xf32> to vector<64x16xf32>
    %22 = vector.shape_cast %21 : vector<64x16xf32> to vector<8x8x16xf32>
    %23 = vector.extract_strided_slice %6 {offsets = [0, 48], sizes = [64, 16], strides = [1, 1]} : vector<64x64xf32> to vector<64x16xf32>
    %24 = vector.shape_cast %23 : vector<64x16xf32> to vector<8x8x16xf32>
    %25 = tpu.concatenate %18, %20, %22, %24 in 0 : vector<8x8x16xf32>, vector<8x8x16xf32>, vector<8x8x16xf32>, vector<8x8x16xf32> -> vector<32x8x16xf32>
    %26 = arith.truncf %25 : vector<32x8x16xf32> to vector<32x8x16xbf16>
    %27 = vector.extract_strided_slice %11 {offsets = [0, 0], sizes = [64, 16], strides = [1, 1]} : vector<64x64xf32> to vector<64x16xf32>
    %28 = vector.shape_cast %27 : vector<64x16xf32> to vector<8x8x16xf32>
    %29 = vector.extract_strided_slice %11 {offsets = [0, 16], sizes = [64, 16], strides = [1, 1]} : vector<64x64xf32> to vector<64x16xf32>
    %30 = vector.shape_cast %29 : vector<64x16xf32> to vector<8x8x16xf32>
    %31 = vector.extract_strided_slice %11 {offsets = [0, 32], sizes = [64, 16], strides = [1, 1]} : vector<64x64xf32> to vector<64x16xf32>
    %32 = vector.shape_cast %31 : vector<64x16xf32> to vector<8x8x16xf32>
    %33 = vector.extract_strided_slice %11 {offsets = [0, 48], sizes = [64, 16], strides = [1, 1]} : vector<64x64xf32> to vector<64x16xf32>
    %34 = vector.shape_cast %33 : vector<64x16xf32> to vector<8x8x16xf32>
    %35 = tpu.concatenate %28, %30, %32, %34 in 0 : vector<8x8x16xf32>, vector<8x8x16xf32>, vector<8x8x16xf32>, vector<8x8x16xf32> -> vector<32x8x16xf32>
    %36 = arith.truncf %35 : vector<32x8x16xf32> to vector<32x8x16xbf16>
    %37 = vector.extract_strided_slice %16 {offsets = [0, 0], sizes = [64, 16], strides = [1, 1]} : vector<64x64xf32> to vector<64x16xf32>
    %38 = vector.shape_cast %37 : vector<64x16xf32> to vector<8x8x16xf32>
    %39 = vector.extract_strided_slice %16 {offsets = [0, 16], sizes = [64, 16], strides = [1, 1]} : vector<64x64xf32> to vector<64x16xf32>
    %40 = vector.shape_cast %39 : vector<64x16xf32> to vector<8x8x16xf32>
    %41 = vector.extract_strided_slice %16 {offsets = [0, 32], sizes = [64, 16], strides = [1, 1]} : vector<64x64xf32> to vector<64x16xf32>
    %42 = vector.shape_cast %41 : vector<64x16xf32> to vector<8x8x16xf32>
    %43 = vector.extract_strided_slice %16 {offsets = [0, 48], sizes = [64, 16], strides = [1, 1]} : vector<64x64xf32> to vector<64x16xf32>
    %44 = vector.shape_cast %43 : vector<64x16xf32> to vector<8x8x16xf32>
    %45 = tpu.concatenate %38, %40, %42, %44 in 0 : vector<8x8x16xf32>, vector<8x8x16xf32>, vector<8x8x16xf32>, vector<8x8x16xf32> -> vector<32x8x16xf32>
    %46 = arith.truncf %45 : vector<32x8x16xf32> to vector<32x8x16xbf16>
    "tpu.trace_start"() <{level = 10 : i32, message = "gqd,gkd->gqk"}> : () -> ()
    %cst_15 = arith.constant dense<0.000000e+00> : vector<32x8x8xf32>
    %47 = tpu.matmul %26, %36, %cst_15 {dimension_numbers = #tpu.dot_dimension_numbers<[2], [2], [1], [1], [0, 0, 0, 1, 1, 1], [0], [0]>} : vector<32x8x16xbf16>, vector<32x8x16xbf16>, vector<32x8x8xf32> -> vector<32x8x8xf32>
    "tpu.trace_stop"() : () -> ()
    %cst_16 = arith.constant 2.500000e-01 : f32
    %48 = vector.broadcast %cst_16 : f32 to vector<32x8x8xf32>
    %49 = arith.mulf %47, %48 : vector<32x8x8xf32>
    %cst_17 = arith.constant dense<0xFF800000> : vector<32x8xf32>
    %50 = vector.multi_reduction <maximumf>, %49, %cst_17 [2] : vector<32x8x8xf32> to vector<32x8xf32>
    %51 = vector.shape_cast %50 : vector<32x8xf32> to vector<32x8x1xf32>
    %52 = vector.broadcast %51 : vector<32x8x1xf32> to vector<32x8x8xf32>
    %53 = arith.subf %49, %52 : vector<32x8x8xf32>
    %54 = math.exp %53 : vector<32x8x8xf32>
    %cst_18 = arith.constant dense<0.000000e+00> : vector<32x8xf32>
    %55 = vector.multi_reduction <add>, %54, %cst_18 [2] : vector<32x8x8xf32> to vector<32x8xf32>
    %56 = vector.shape_cast %55 : vector<32x8xf32> to vector<32x8x1xf32>
    %57 = tpu.reciprocal %56 {approx = true} : vector<32x8x1xf32> -> vector<32x8x1xf32>
    %58 = vector.broadcast %57 : vector<32x8x1xf32> to vector<32x8x8xf32>
    %59 = arith.mulf %54, %58 : vector<32x8x8xf32>
    %60 = arith.truncf %59 : vector<32x8x8xf32> to vector<32x8x8xbf16>
    "tpu.trace_start"() <{level = 10 : i32, message = "gqk,gkd->gqd"}> : () -> ()
    %cst_19 = arith.constant dense<0.000000e+00> : vector<32x8x16xf32>
    %61 = tpu.matmul %60, %46, %cst_19 {dimension_numbers = #tpu.dot_dimension_numbers<[2], [1], [1], [2], [0, 0, 0, 1, 1, 2], [0], [0]>} : vector<32x8x8xbf16>, vector<32x8x16xbf16>, vector<32x8x16xf32> -> vector<32x8x16xf32>
    "tpu.trace_stop"() : () -> ()
    %c0_20 = arith.constant 0 : index
    %c0_21 = arith.constant 0 : index
    %62 = vector.load %arg8[%c0_20, %c0_21] : memref<64x32xbf16, #tpu.memory_space<vmem>>, vector<64x32xbf16>
    %c0_22 = arith.constant 0 : index
    %c0_23 = arith.constant 0 : index
    %63 = vector.load %arg9[%c0_22, %c0_23] : memref<1x32xf32, #tpu.memory_space<vmem>>, vector<1x32xf32>
    %64 = vector.extract_strided_slice %61 {offsets = [0, 0, 0], sizes = [8, 8, 16], strides = [1, 1, 1]} : vector<32x8x16xf32> to vector<8x8x16xf32>
    %65 = vector.shape_cast %64 : vector<8x8x16xf32> to vector<64x16xf32>
    %66 = arith.truncf %65 : vector<64x16xf32> to vector<64x16xbf16>
    %67 = vector.extract_strided_slice %62 {offsets = [0, 0], sizes = [16, 32], strides = [1, 1]} : vector<64x32xbf16> to vector<16x32xbf16>
    %cst_24 = arith.constant dense<0.000000e+00> : vector<64x32xf32>
    %68 = tpu.matmul %66, %67, %cst_24 {dimension_numbers = #tpu.dot_dimension_numbers<[1], [0], [0], [1], [0, 0, 1, 1], [], []>} : vector<64x16xbf16>, vector<16x32xbf16>, vector<64x32xf32> -> vector<64x32xf32>
    %69 = vector.broadcast %63 : vector<1x32xf32> to vector<64x32xf32>
    %70 = arith.addf %69, %68 : vector<64x32xf32>
    %71 = vector.extract_strided_slice %61 {offsets = [8, 0, 0], sizes = [8, 8, 16], strides = [1, 1, 1]} : vector<32x8x16xf32> to vector<8x8x16xf32>
    %72 = vector.shape_cast %71 : vector<8x8x16xf32> to vector<64x16xf32>
    %73 = arith.truncf %72 : vector<64x16xf32> to vector<64x16xbf16>
    %74 = vector.extract_strided_slice %62 {offsets = [16, 0], sizes = [16, 32], strides = [1, 1]} : vector<64x32xbf16> to vector<16x32xbf16>
    %cst_25 = arith.constant dense<0.000000e+00> : vector<64x32xf32>
    %75 = tpu.matmul %73, %74, %cst_25 {dimension_numbers = #tpu.dot_dimension_numbers<[1], [0], [0], [1], [0, 0, 1, 1], [], []>} : vector<64x16xbf16>, vector<16x32xbf16>, vector<64x32xf32> -> vector<64x32xf32>
    %76 = arith.addf %70, %75 : vector<64x32xf32>
    %77 = vector.extract_strided_slice %61 {offsets = [16, 0, 0], sizes = [8, 8, 16], strides = [1, 1, 1]} : vector<32x8x16xf32> to vector<8x8x16xf32>
    %78 = vector.shape_cast %77 : vector<8x8x16xf32> to vector<64x16xf32>
    %79 = arith.truncf %78 : vector<64x16xf32> to vector<64x16xbf16>
    %80 = vector.extract_strided_slice %62 {offsets = [32, 0], sizes = [16, 32], strides = [1, 1]} : vector<64x32xbf16> to vector<16x32xbf16>
    %cst_26 = arith.constant dense<0.000000e+00> : vector<64x32xf32>
    %81 = tpu.matmul %79, %80, %cst_26 {dimension_numbers = #tpu.dot_dimension_numbers<[1], [0], [0], [1], [0, 0, 1, 1], [], []>} : vector<64x16xbf16>, vector<16x32xbf16>, vector<64x32xf32> -> vector<64x32xf32>
    %82 = arith.addf %76, %81 : vector<64x32xf32>
    %83 = vector.extract_strided_slice %61 {offsets = [24, 0, 0], sizes = [8, 8, 16], strides = [1, 1, 1]} : vector<32x8x16xf32> to vector<8x8x16xf32>
    %84 = vector.shape_cast %83 : vector<8x8x16xf32> to vector<64x16xf32>
    %85 = arith.truncf %84 : vector<64x16xf32> to vector<64x16xbf16>
    %86 = vector.extract_strided_slice %62 {offsets = [48, 0], sizes = [16, 32], strides = [1, 1]} : vector<64x32xbf16> to vector<16x32xbf16>
    %cst_27 = arith.constant dense<0.000000e+00> : vector<64x32xf32>
    %87 = tpu.matmul %85, %86, %cst_27 {dimension_numbers = #tpu.dot_dimension_numbers<[1], [0], [0], [1], [0, 0, 1, 1], [], []>} : vector<64x16xbf16>, vector<16x32xbf16>, vector<64x32xf32> -> vector<64x32xf32>
    %88 = arith.addf %82, %87 : vector<64x32xf32>
    %89 = arith.addf %88, %0 : vector<64x32xf32>
    %c0_28 = arith.constant 0 : index
    %c0_29 = arith.constant 0 : index
    %90 = vector.load %arg10[%c0_28, %c0_29] : memref<1x32xf32, #tpu.memory_space<vmem>>, vector<1x32xf32>
    %c0_30 = arith.constant 0 : index
    %c0_31 = arith.constant 0 : index
    %91 = vector.load %arg11[%c0_30, %c0_31] : memref<1x32xf32, #tpu.memory_space<vmem>>, vector<1x32xf32>
    %cst_32 = arith.constant dense<0.000000e+00> : vector<64xf32>
    %92 = vector.multi_reduction <add>, %89, %cst_32 [1] : vector<64x32xf32> to vector<64xf32>
    %93 = vector.shape_cast %92 : vector<64xf32> to vector<64x1xf32>
    %cst_33 = arith.constant 3.200000e+01 : f32
    %94 = vector.broadcast %cst_33 : f32 to vector<64x1xf32>
    %95 = arith.divf %93, %94 : vector<64x1xf32>
    %96 = vector.broadcast %95 : vector<64x1xf32> to vector<64x32xf32>
    %97 = arith.subf %89, %96 : vector<64x32xf32>
    %98 = arith.mulf %97, %97 : vector<64x32xf32>
    %cst_34 = arith.constant dense<0.000000e+00> : vector<64xf32>
    %99 = vector.multi_reduction <add>, %98, %cst_34 [1] : vector<64x32xf32> to vector<64xf32>
    %100 = vector.shape_cast %99 : vector<64xf32> to vector<64x1xf32>
    %cst_35 = arith.constant 3.200000e+01 : f32
    %101 = vector.broadcast %cst_35 : f32 to vector<64x1xf32>
    %102 = arith.divf %100, %101 : vector<64x1xf32>
    %103 = vector.broadcast %95 : vector<64x1xf32> to vector<64x32xf32>
    %104 = arith.subf %89, %103 : vector<64x32xf32>
    %cst_36 = arith.constant 9.99999974E-6 : f32
    %105 = vector.broadcast %cst_36 : f32 to vector<64x1xf32>
    %106 = arith.addf %102, %105 : vector<64x1xf32>
    %107 = math.rsqrt %106 : vector<64x1xf32>
    %108 = vector.broadcast %107 : vector<64x1xf32> to vector<64x32xf32>
    %109 = arith.mulf %104, %108 : vector<64x32xf32>
    %110 = vector.broadcast %90 : vector<1x32xf32> to vector<64x32xf32>
    %111 = arith.mulf %109, %110 : vector<64x32xf32>
    %112 = vector.broadcast %91 : vector<1x32xf32> to vector<64x32xf32>
    %113 = arith.addf %111, %112 : vector<64x32xf32>
    %114 = arith.truncf %113 : vector<64x32xf32> to vector<64x32xbf16>
    %c0_37 = arith.constant 0 : index
    %c0_38 = arith.constant 0 : index
    %115 = vector.load %arg12[%c0_37, %c0_38] : memref<32x64xbf16, #tpu.memory_space<vmem>>, vector<32x64xbf16>
    %cst_39 = arith.constant dense<0.000000e+00> : vector<64x64xf32>
    %116 = tpu.matmul %114, %115, %cst_39 {dimension_numbers = #tpu.dot_dimension_numbers<[1], [0], [0], [1], [0, 0, 1, 1], [], []>} : vector<64x32xbf16>, vector<32x64xbf16>, vector<64x64xf32> -> vector<64x64xf32>
    %c0_40 = arith.constant 0 : index
    %c0_41 = arith.constant 0 : index
    %117 = vector.load %arg13[%c0_40, %c0_41] : memref<1x64xf32, #tpu.memory_space<vmem>>, vector<1x64xf32>
    %118 = vector.broadcast %117 : vector<1x64xf32> to vector<64x64xf32>
    %119 = arith.addf %116, %118 : vector<64x64xf32>
    %cst_42 = arith.constant 5.000000e-01 : f32
    %120 = vector.broadcast %cst_42 : f32 to vector<64x64xf32>
    %121 = arith.mulf %120, %119 : vector<64x64xf32>
    %cst_43 = arith.constant 0.707106769 : f32
    %122 = vector.broadcast %cst_43 : f32 to vector<64x64xf32>
    %123 = arith.mulf %119, %122 : vector<64x64xf32>
    %124 = math.erf %123 : vector<64x64xf32>
    %cst_44 = arith.constant 1.000000e+00 : f32
    %125 = vector.broadcast %cst_44 : f32 to vector<64x64xf32>
    %126 = arith.addf %125, %124 : vector<64x64xf32>
    %127 = arith.mulf %121, %126 : vector<64x64xf32>
    %128 = arith.truncf %127 : vector<64x64xf32> to vector<64x64xbf16>
    %c0_45 = arith.constant 0 : index
    %c0_46 = arith.constant 0 : index
    %129 = vector.load %arg14[%c0_45, %c0_46] : memref<64x32xbf16, #tpu.memory_space<vmem>>, vector<64x32xbf16>
    %cst_47 = arith.constant dense<0.000000e+00> : vector<64x32xf32>
    %130 = tpu.matmul %128, %129, %cst_47 {dimension_numbers = #tpu.dot_dimension_numbers<[1], [0], [0], [1], [0, 0, 1, 1], [], []>} : vector<64x64xbf16>, vector<64x32xbf16>, vector<64x32xf32> -> vector<64x32xf32>
    %c0_48 = arith.constant 0 : index
    %c0_49 = arith.constant 0 : index
    %131 = vector.load %arg15[%c0_48, %c0_49] : memref<1x32xf32, #tpu.memory_space<vmem>>, vector<1x32xf32>
    %132 = vector.broadcast %131 : vector<1x32xf32> to vector<64x32xf32>
    %133 = arith.addf %130, %132 : vector<64x32xf32>
    %134 = arith.addf %133, %113 : vector<64x32xf32>
    %c0_50 = arith.constant 0 : index
    %c0_51 = arith.constant 0 : index
    %135 = vector.load %arg16[%c0_50, %c0_51] : memref<1x32xf32, #tpu.memory_space<vmem>>, vector<1x32xf32>
    %c0_52 = arith.constant 0 : index
    %c0_53 = arith.constant 0 : index
    %136 = vector.load %arg17[%c0_52, %c0_53] : memref<1x32xf32, #tpu.memory_space<vmem>>, vector<1x32xf32>
    %cst_54 = arith.constant dense<0.000000e+00> : vector<64xf32>
    %137 = vector.multi_reduction <add>, %134, %cst_54 [1] : vector<64x32xf32> to vector<64xf32>
    %138 = vector.shape_cast %137 : vector<64xf32> to vector<64x1xf32>
    %cst_55 = arith.constant 3.200000e+01 : f32
    %139 = vector.broadcast %cst_55 : f32 to vector<64x1xf32>
    %140 = arith.divf %138, %139 : vector<64x1xf32>
    %141 = vector.broadcast %140 : vector<64x1xf32> to vector<64x32xf32>
    %142 = arith.subf %134, %141 : vector<64x32xf32>
    %143 = arith.mulf %142, %142 : vector<64x32xf32>
    %cst_56 = arith.constant dense<0.000000e+00> : vector<64xf32>
    %144 = vector.multi_reduction <add>, %143, %cst_56 [1] : vector<64x32xf32> to vector<64xf32>
    %145 = vector.shape_cast %144 : vector<64xf32> to vector<64x1xf32>
    %cst_57 = arith.constant 3.200000e+01 : f32
    %146 = vector.broadcast %cst_57 : f32 to vector<64x1xf32>
    %147 = arith.divf %145, %146 : vector<64x1xf32>
    %148 = vector.broadcast %140 : vector<64x1xf32> to vector<64x32xf32>
    %149 = arith.subf %134, %148 : vector<64x32xf32>
    %cst_58 = arith.constant 9.99999974E-6 : f32
    %150 = vector.broadcast %cst_58 : f32 to vector<64x1xf32>
    %151 = arith.addf %147, %150 : vector<64x1xf32>
    %152 = math.rsqrt %151 : vector<64x1xf32>
    %153 = vector.broadcast %152 : vector<64x1xf32> to vector<64x32xf32>
    %154 = arith.mulf %149, %153 : vector<64x32xf32>
    %155 = vector.broadcast %135 : vector<1x32xf32> to vector<64x32xf32>
    %156 = arith.mulf %154, %155 : vector<64x32xf32>
    %157 = vector.broadcast %136 : vector<1x32xf32> to vector<64x32xf32>
    %158 = arith.addf %156, %157 : vector<64x32xf32>
    %c0_59 = arith.constant 0 : index
    %c0_60 = arith.constant 0 : index
    %159 = vector.load %arg18[%c0_59, %c0_60] : memref<64x32xf32, #tpu.memory_space<vmem>>, vector<64x32xf32>
    tpu.vector_store %arg18[%c0_59, %c0_60], %158 {strides = array<i32>} : memref<64x32xf32, #tpu.memory_space<vmem>>, vector<64x32xf32>,
    return
  }
  func.func @transform_0(%arg0: i32) -> (i32, i32) {
    %c0_i32 = arith.constant 0 : i32
    %c0_i32_0 = arith.constant 0 : i32
    return %arg0, %c0_i32 : i32, i32
  }
  func.func @transform_1(%arg0: i32) -> (i32, i32) {
    %c0_i32 = arith.constant 0 : i32
    %c0_i32_0 = arith.constant 0 : i32
    %c0_i32_1 = arith.constant 0 : i32
    return %c0_i32, %c0_i32_0 : i32, i32
  }
  func.func @transform_2(%arg0: i32) -> (i32, i32) {
    %c0_i32 = arith.constant 0 : i32
    %c0_i32_0 = arith.constant 0 : i32
    %c0_i32_1 = arith.constant 0 : i32
    return %c0_i32, %c0_i32_0 : i32, i32
  }
  func.func @transform_3(%arg0: i32) -> (i32, i32) {
    %c0_i32 = arith.constant 0 : i32
    %c0_i32_0 = arith.constant 0 : i32
    %c0_i32_1 = arith.constant 0 : i32
    return %c0_i32, %c0_i32_0 : i32, i32
  }
  func.func @transform_4(%arg0: i32) -> (i32, i32) {
    %c0_i32 = arith.constant 0 : i32
    %c0_i32_0 = arith.constant 0 : i32
    %c0_i32_1 = arith.constant 0 : i32
    return %c0_i32, %c0_i32_0 : i32, i32
  }
  func.func @transform_5(%arg0: i32) -> (i32, i32) {
    %c0_i32 = arith.constant 0 : i32
    %c0_i32_0 = arith.constant 0 : i32
    %c0_i32_1 = arith.constant 0 : i32
    return %c0_i32, %c0_i32_0 : i32, i32
  }
  func.func @transform_6(%arg0: i32) -> (i32, i32) {
    %c0_i32 = arith.constant 0 : i32
    %c0_i32_0 = arith.constant 0 : i32
    %c0_i32_1 = arith.constant 0 : i32
    return %c0_i32, %c0_i32_0 : i32, i32
  }
  func.func @transform_7(%arg0: i32) -> (i32, i32) {
    %c0_i32 = arith.constant 0 : i32
    %c0_i32_0 = arith.constant 0 : i32
    %c0_i32_1 = arith.constant 0 : i32
    return %c0_i32, %c0_i32_0 : i32, i32
  }
  func.func @transform_8(%arg0: i32) -> (i32, i32) {
    %c0_i32 = arith.constant 0 : i32
    %c0_i32_0 = arith.constant 0 : i32
    %c0_i32_1 = arith.constant 0 : i32
    return %c0_i32, %c0_i32_0 : i32, i32
  }
  func.func @transform_9(%arg0: i32) -> (i32, i32) {
    %c0_i32 = arith.constant 0 : i32
    %c0_i32_0 = arith.constant 0 : i32
    %c0_i32_1 = arith.constant 0 : i32
    return %c0_i32, %c0_i32_0 : i32, i32
  }
  func.func @transform_10(%arg0: i32) -> (i32, i32) {
    %c0_i32 = arith.constant 0 : i32
    %c0_i32_0 = arith.constant 0 : i32
    %c0_i32_1 = arith.constant 0 : i32
    return %c0_i32, %c0_i32_0 : i32, i32
  }
  func.func @transform_11(%arg0: i32) -> (i32, i32) {
    %c0_i32 = arith.constant 0 : i32
    %c0_i32_0 = arith.constant 0 : i32
    %c0_i32_1 = arith.constant 0 : i32
    return %c0_i32, %c0_i32_0 : i32, i32
  }
  func.func @transform_12(%arg0: i32) -> (i32, i32) {
    %c0_i32 = arith.constant 0 : i32
    %c0_i32_0 = arith.constant 0 : i32
    %c0_i32_1 = arith.constant 0 : i32
    return %c0_i32, %c0_i32_0 : i32, i32
  }
  func.func @transform_13(%arg0: i32) -> (i32, i32) {
    %c0_i32 = arith.constant 0 : i32
    %c0_i32_0 = arith.constant 0 : i32
    %c0_i32_1 = arith.constant 0 : i32
    return %c0_i32, %c0_i32_0 : i32, i32
  }
  func.func @transform_14(%arg0: i32) -> (i32, i32) {
    %c0_i32 = arith.constant 0 : i32
    %c0_i32_0 = arith.constant 0 : i32
    %c0_i32_1 = arith.constant 0 : i32
    return %c0_i32, %c0_i32_0 : i32, i32
  }
  func.func @transform_15(%arg0: i32) -> (i32, i32) {
    %c0_i32 = arith.constant 0 : i32
    %c0_i32_0 = arith.constant 0 : i32
    %c0_i32_1 = arith.constant 0 : i32
    return %c0_i32, %c0_i32_0 : i32, i32
  }
  func.func @transform_16(%arg0: i32) -> (i32, i32) {
    %c0_i32 = arith.constant 0 : i32
    %c0_i32_0 = arith.constant 0 : i32
    %c0_i32_1 = arith.constant 0 : i32
    return %c0_i32, %c0_i32_0 : i32, i32
  }
  func.func @transform_17(%arg0: i32) -> (i32, i32) {
    %c0_i32 = arith.constant 0 : i32
    %c0_i32_0 = arith.constant 0 : i32
    return %arg0, %c0_i32 : i32, i32
  }
}

</mosaic_0001>

<llo_original>
// kernel: tpu_custom_call.1
$region0: #{tpu_custom_call.1}
  #allocation0 [shape = 'u32[]', space=smem, size = 0x4, offset = 0x4, fixed_abs, tag = 'smem constant byte address 0x4 - core index']
  #allocation1 [shape = 'u32[72,128]{1,0:T(1,128)}', space=vmem, size = 0x9000, scoped, tag = 'internal scratch']
  %s0 = inlined_call_operand.vmem [shape: f32[128,32], index: 0, kind: input, shape index: {}]
  %s1 = inlined_call_operand.vmem [shape: bf16[32,64], index: 1, kind: input, shape index: {}]
  %s2 = inlined_call_operand.vmem [shape: f32[1,64], index: 2, kind: input, shape index: {}]
  %s3 = inlined_call_operand.vmem [shape: bf16[32,64], index: 3, kind: input, shape index: {}]
  %s4 = inlined_call_operand.vmem [shape: f32[1,64], index: 4, kind: input, shape index: {}]
  %s5 = inlined_call_operand.vmem [shape: bf16[32,64], index: 5, kind: input, shape index: {}]
  %s6 = inlined_call_operand.vmem [shape: f32[1,64], index: 6, kind: input, shape index: {}]
  %s7 = inlined_call_operand.vmem [shape: bf16[64,32], index: 7, kind: input, shape index: {}]
  %s8 = inlined_call_operand.vmem [shape: f32[1,32], index: 8, kind: input, shape index: {}]
  %s9 = inlined_call_operand.vmem [shape: f32[1,32], index: 9, kind: input, shape index: {}]
  %s10 = inlined_call_operand.vmem [shape: f32[1,32], index: 10, kind: input, shape index: {}]
  %s11 = inlined_call_operand.vmem [shape: bf16[32,64], index: 11, kind: input, shape index: {}]
  %s12 = inlined_call_operand.vmem [shape: f32[1,64], index: 12, kind: input, shape index: {}]
  %s13 = inlined_call_operand.vmem [shape: bf16[64,32], index: 13, kind: input, shape index: {}]
  %s14 = inlined_call_operand.vmem [shape: f32[1,32], index: 14, kind: input, shape index: {}]
  %s15 = inlined_call_operand.vmem [shape: f32[1,32], index: 15, kind: input, shape index: {}]
  %s16 = inlined_call_operand.vmem [shape: f32[1,32], index: 16, kind: input, shape index: {}]
  %s17 = inlined_call_operand.vmem [shape: f32[128,32], index: 17, kind: output, shape index: {}]
  %s18 = sld [smem:[#allocation0]]
  $region101: #{tpu_custom_call.1} parent=0
    _
  %s20 = ssub.s32 1, %s18
  %s21 = scalar_select 0, %s20, %s18
  loop: start=0, step=1, limit=4
  $region2: #{tpu_custom_call.1} parent=0 // loop_pre_header
    _
  $region3: #{tpu_custom_call.1} parent=0 // loop_header
    %s23 = sphi 0, %s27
    %p24 = scmp.ge.s32.totalorder %s23, 4
    %s33 = sphi 0, %s35
    %s36 = sphi 0, %s33
    %s37 = sphi 0, %s36
    %s53 = sphi 0, %s37
    %s57 = sphi 0, %s57
    %s59 = sphi 0, %s57
    %s60 = sphi 0, %s59
    %s74 = sphi 0, %s60
    %s78 = sphi 0, %s78
    %s80 = sphi 0, %s78
    %s81 = sphi 0, %s80
    %s95 = sphi 0, %s81
    %s99 = sphi 0, %s99
    %s101 = sphi 0, %s99
    %s102 = sphi 0, %s101
    %s116 = sphi 0, %s102
    %s120 = sphi 0, %s120
    %s122 = sphi 0, %s120
    %s123 = sphi 0, %s122
    %s137 = sphi 0, %s123
    %s141 = sphi 0, %s141
    %s143 = sphi 0, %s141
    %s144 = sphi 0, %s143
    %s158 = sphi 0, %s144
    %s162 = sphi 0, %s162
    %s164 = sphi 0, %s162
    %s165 = sphi 0, %s164
    %s179 = sphi 0, %s165
    %s183 = sphi 0, %s183
    %s185 = sphi 0, %s183
    %s186 = sphi 0, %s185
    %s200 = sphi 0, %s186
    %s204 = sphi 0, %s204
    %s206 = sphi 0, %s204
    %s207 = sphi 0, %s206
    %s221 = sphi 0, %s207
    %s225 = sphi 0, %s225
    %s227 = sphi 0, %s225
    %s228 = sphi 0, %s227
    %s242 = sphi 0, %s228
    %s246 = sphi 0, %s246
    %s248 = sphi 0, %s246
    %s249 = sphi 0, %s248
    %s263 = sphi 0, %s249
    %s267 = sphi 0, %s267
    %s269 = sphi 0, %s267
    %s270 = sphi 0, %s269
    %s284 = sphi 0, %s270
    %s288 = sphi 0, %s288
    %s290 = sphi 0, %s288
    %s291 = sphi 0, %s290
    %s305 = sphi 0, %s291
    %s309 = sphi 0, %s309
    %s311 = sphi 0, %s309
    %s312 = sphi 0, %s311
    %s326 = sphi 0, %s312
    %s330 = sphi 0, %s330
    %s332 = sphi 0, %s330
    %s333 = sphi 0, %s332
    %s347 = sphi 0, %s333
    %s351 = sphi 0, %s351
    %s353 = sphi 0, %s351
    %s354 = sphi 0, %s353
    %s368 = sphi 0, %s354
    %s372 = sphi 0, %s372
    %s374 = sphi 0, %s372
    %s375 = sphi 0, %s374
    %s389 = sphi 0, %s375
    %s395 = sphi 0, %s397
    %s398 = sphi 0, %s395
    %s399 = sphi 0, %s398
    %s415 = sphi 0, %s399
  $region4: #{tpu_custom_call.1} parent=0 // loop_header_branch
    %26 = sbr.rel (%p24) target = $region8
  $region5: #{tpu_custom_call.1} parent=0 // loop_body
    %s28 = ssub.s32 %s23, 1
    %s29 = ssub.s32 %s23, 2
    %s30 = sadd.s32 %s23, 1
    %s31 = ssub.s32 %s23, %s30
    %p32 = scmp.eq.s32.totalorder %s31, 0
    %s34 = sadd.s32 %s33, 1
    %s35 = scalar_select %p32, %s33, %s34
    %p38 = pneg %p32
    %p39 = scmp.eq.s32.totalorder %s23, 1
    %p40 = por %p38, %p39
    %p41 = scmp.ne.s32.totalorder %s33, %s36
    %p42 = scmp.eq.s32.totalorder %s23, 0
    %p43 = por %p41, %p42
    %p44 = scmp.ne.s32.totalorder %s33, %s36
    %p45 = scmp.eq.s32.totalorder %s28, 1
    %p46 = por %p44, %p45
    %p47 = scmp.ne.s32.totalorder %s36, %s37
    %p48 = scmp.eq.s32.totalorder %s28, 0
    %p49 = por %p47, %p48
    %p50 = scmp.ne.s32.totalorder %s36, %s37
    %p51 = scmp.eq.s32.totalorder %s29, 1
    %p52 = por %p50, %p51
    %p54 = scmp.ne.s32.totalorder %s37, %s53
    %p55 = scmp.eq.s32.totalorder %s29, 0
    %p56 = por %p54, %p55
    %s58 = sadd.s32 %s57, 1
    %p61 = scmp.eq.s32.totalorder %s23, 1
    %p62 = scmp.ne.s32.totalorder %s57, %s59
    %p63 = scmp.eq.s32.totalorder %s23, 0
    %p64 = por %p62, %p63
    %p65 = scmp.ne.s32.totalorder %s57, %s59
    %p66 = scmp.eq.s32.totalorder %s28, 1
    %p67 = por %p65, %p66
    %p68 = scmp.ne.s32.totalorder %s59, %s60
    %p69 = scmp.eq.s32.totalorder %s28, 0
    %p70 = por %p68, %p69
    %p71 = scmp.ne.s32.totalorder %s59, %s60
    %p72 = scmp.eq.s32.totalorder %s29, 1
    %p73 = por %p71, %p72
    %p75 = scmp.ne.s32.totalorder %s60, %s74
    %p76 = scmp.eq.s32.totalorder %s29, 0
    %p77 = por %p75, %p76
    %s79 = sadd.s32 %s78, 1
    %p82 = scmp.eq.s32.totalorder %s23, 1
    %p83 = scmp.ne.s32.totalorder %s78, %s80
    %p84 = scmp.eq.s32.totalorder %s23, 0
    %p85 = por %p83, %p84
    %p86 = scmp.ne.s32.totalorder %s78, %s80
    %p87 = scmp.eq.s32.totalorder %s28, 1
    %p88 = por %p86, %p87
    %p89 = scmp.ne.s32.totalorder %s80, %s81
    %p90 = scmp.eq.s32.totalorder %s28, 0
    %p91 = por %p89, %p90
    %p92 = scmp.ne.s32.totalorder %s80, %s81
    %p93 = scmp.eq.s32.totalorder %s29, 1
    %p94 = por %p92, %p93
    %p96 = scmp.ne.s32.totalorder %s81, %s95
    %p97 = scmp.eq.s32.totalorder %s29, 0
    %p98 = por %p96, %p97
    %s100 = sadd.s32 %s99, 1
    %p103 = scmp.eq.s32.totalorder %s23, 1
    %p104 = scmp.ne.s32.totalorder %s99, %s101
    %p105 = scmp.eq.s32.totalorder %s23, 0
    %p106 = por %p104, %p105
    %p107 = scmp.ne.s32.totalorder %s99, %s101
    %p108 = scmp.eq.s32.totalorder %s28, 1
    %p109 = por %p107, %p108
    %p110 = scmp.ne.s32.totalorder %s101, %s102
    %p111 = scmp.eq.s32.totalorder %s28, 0
    %p112 = por %p110, %p111
    %p113 = scmp.ne.s32.totalorder %s101, %s102
    %p114 = scmp.eq.s32.totalorder %s29, 1
    %p115 = por %p113, %p114
    %p117 = scmp.ne.s32.totalorder %s102, %s116
    %p118 = scmp.eq.s32.totalorder %s29, 0
    %p119 = por %p117, %p118
    %s121 = sadd.s32 %s120, 1
    %p124 = scmp.eq.s32.totalorder %s23, 1
    %p125 = scmp.ne.s32.totalorder %s120, %s122
    %p126 = scmp.eq.s32.totalorder %s23, 0
    %p127 = por %p125, %p126
    %p128 = scmp.ne.s32.totalorder %s120, %s122
    %p129 = scmp.eq.s32.totalorder %s28, 1
    %p130 = por %p128, %p129
    %p131 = scmp.ne.s32.totalorder %s122, %s123
    %p132 = scmp.eq.s32.totalorder %s28, 0
    %p133 = por %p131, %p132
    %p134 = scmp.ne.s32.totalorder %s122, %s123
    %p135 = scmp.eq.s32.totalorder %s29, 1
    %p136 = por %p134, %p135
    %p138 = scmp.ne.s32.totalorder %s123, %s137
    %p139 = scmp.eq.s32.totalorder %s29, 0
    %p140 = por %p138, %p139
    %s142 = sadd.s32 %s141, 1
    %p145 = scmp.eq.s32.totalorder %s23, 1
    %p146 = scmp.ne.s32.totalorder %s141, %s143
    %p147 = scmp.eq.s32.totalorder %s23, 0
    %p148 = por %p146, %p147
    %p149 = scmp.ne.s32.totalorder %s141, %s143
    %p150 = scmp.eq.s32.totalorder %s28, 1
    %p151 = por %p149, %p150
    %p152 = scmp.ne.s32.totalorder %s143, %s144
    %p153 = scmp.eq.s32.totalorder %s28, 0
    %p154 = por %p152, %p153
    %p155 = scmp.ne.s32.totalorder %s143, %s144
    %p156 = scmp.eq.s32.totalorder %s29, 1
    %p157 = por %p155, %p156
    %p159 = scmp.ne.s32.totalorder %s144, %s158
    %p160 = scmp.eq.s32.totalorder %s29, 0
    %p161 = por %p159, %p160
    %s163 = sadd.s32 %s162, 1
    %p166 = scmp.eq.s32.totalorder %s23, 1
    %p167 = scmp.ne.s32.totalorder %s162, %s164
    %p168 = scmp.eq.s32.totalorder %s23, 0
    %p169 = por %p167, %p168
    %p170 = scmp.ne.s32.totalorder %s162, %s164
    %p171 = scmp.eq.s32.totalorder %s28, 1
    %p172 = por %p170, %p171
    %p173 = scmp.ne.s32.totalorder %s164, %s165
    %p174 = scmp.eq.s32.totalorder %s28, 0
    %p175 = por %p173, %p174
    %p176 = scmp.ne.s32.totalorder %s164, %s165
    %p177 = scmp.eq.s32.totalorder %s29, 1
    %p178 = por %p176, %p177
    %p180 = scmp.ne.s32.totalorder %s165, %s179
    %p181 = scmp.eq.s32.totalorder %s29, 0
    %p182 = por %p180, %p181
    %s184 = sadd.s32 %s183, 1
    %p187 = scmp.eq.s32.totalorder %s23, 1
    %p188 = scmp.ne.s32.totalorder %s183, %s185
    %p189 = scmp.eq.s32.totalorder %s23, 0
    %p190 = por %p188, %p189
    %p191 = scmp.ne.s32.totalorder %s183, %s185
    %p192 = scmp.eq.s32.totalorder %s28, 1
    %p193 = por %p191, %p192
    %p194 = scmp.ne.s32.totalorder %s185, %s186
    %p195 = scmp.eq.s32.totalorder %s28, 0
    %p196 = por %p194, %p195
    %p197 = scmp.ne.s32.totalorder %s185, %s186
    %p198 = scmp.eq.s32.totalorder %s29, 1
    %p199 = por %p197, %p198
    %p201 = scmp.ne.s32.totalorder %s186, %s200
    %p202 = scmp.eq.s32.totalorder %s29, 0
    %p203 = por %p201, %p202
    %s205 = sadd.s32 %s204, 1
    %p208 = scmp.eq.s32.totalorder %s23, 1
    %p209 = scmp.ne.s32.totalorder %s204, %s206
    %p210 = scmp.eq.s32.totalorder %s23, 0
    %p211 = por %p209, %p210
    %p212 = scmp.ne.s32.totalorder %s204, %s206
    %p213 = scmp.eq.s32.totalorder %s28, 1
    %p214 = por %p212, %p213
    %p215 = scmp.ne.s32.totalorder %s206, %s207
    %p216 = scmp.eq.s32.totalorder %s28, 0
    %p217 = por %p215, %p216
    %p218 = scmp.ne.s32.totalorder %s206, %s207
    %p219 = scmp.eq.s32.totalorder %s29, 1
    %p220 = por %p218, %p219
    %p222 = scmp.ne.s32.totalorder %s207, %s221
    %p223 = scmp.eq.s32.totalorder %s29, 0
    %p224 = por %p222, %p223
    %s226 = sadd.s32 %s225, 1
    %p229 = scmp.eq.s32.totalorder %s23, 1
    %p230 = scmp.ne.s32.totalorder %s225, %s227
    %p231 = scmp.eq.s32.totalorder %s23, 0
    %p232 = por %p230, %p231
    %p233 = scmp.ne.s32.totalorder %s225, %s227
    %p234 = scmp.eq.s32.totalorder %s28, 1
    %p235 = por %p233, %p234
    %p236 = scmp.ne.s32.totalorder %s227, %s228
    %p237 = scmp.eq.s32.totalorder %s28, 0
    %p238 = por %p236, %p237
    %p239 = scmp.ne.s32.totalorder %s227, %s228
    %p240 = scmp.eq.s32.totalorder %s29, 1
    %p241 = por %p239, %p240
    %p243 = scmp.ne.s32.totalorder %s228, %s242
    %p244 = scmp.eq.s32.totalorder %s29, 0
    %p245 = por %p243, %p244
    %s247 = sadd.s32 %s246, 1
    %p250 = scmp.eq.s32.totalorder %s23, 1
    %p251 = scmp.ne.s32.totalorder %s246, %s248
    %p252 = scmp.eq.s32.totalorder %s23, 0
    %p253 = por %p251, %p252
    %p254 = scmp.ne.s32.totalorder %s246, %s248
    %p255 = scmp.eq.s32.totalorder %s28, 1
    %p256 = por %p254, %p255
    %p257 = scmp.ne.s32.totalorder %s248, %s249
    %p258 = scmp.eq.s32.totalorder %s28, 0
    %p259 = por %p257, %p258
    %p260 = scmp.ne.s32.totalorder %s248, %s249
    %p261 = scmp.eq.s32.totalorder %s29, 1
    %p262 = por %p260, %p261
    %p264 = scmp.ne.s32.totalorder %s249, %s263
    %p265 = scmp.eq.s32.totalorder %s29, 0
    %p266 = por %p264, %p265
    %s268 = sadd.s32 %s267, 1
    %p271 = scmp.eq.s32.totalorder %s23, 1
    %p272 = scmp.ne.s32.totalorder %s267, %s269
    %p273 = scmp.eq.s32.totalorder %s23, 0
    %p274 = por %p272, %p273
    %p275 = scmp.ne.s32.totalorder %s267, %s269
    %p276 = scmp.eq.s32.totalorder %s28, 1
    %p277 = por %p275, %p276
    %p278 = scmp.ne.s32.totalorder %s269, %s270
    %p279 = scmp.eq.s32.totalorder %s28, 0
    %p280 = por %p278, %p279
    %p281 = scmp.ne.s32.totalorder %s269, %s270
    %p282 = scmp.eq.s32.totalorder %s29, 1
    %p283 = por %p281, %p282
    %p285 = scmp.ne.s32.totalorder %s270, %s284
    %p286 = scmp.eq.s32.totalorder %s29, 0
    %p287 = por %p285, %p286
    %s289 = sadd.s32 %s288, 1
    %p292 = scmp.eq.s32.totalorder %s23, 1
    %p293 = scmp.ne.s32.totalorder %s288, %s290
    %p294 = scmp.eq.s32.totalorder %s23, 0
    %p295 = por %p293, %p294
    %p296 = scmp.ne.s32.totalorder %s288, %s290
    %p297 = scmp.eq.s32.totalorder %s28, 1
    %p298 = por %p296, %p297
    %p299 = scmp.ne.s32.totalorder %s290, %s291
    %p300 = scmp.eq.s32.totalorder %s28, 0
    %p301 = por %p299, %p300
    %p302 = scmp.ne.s32.totalorder %s290, %s291
    %p303 = scmp.eq.s32.totalorder %s29, 1
    %p304 = por %p302, %p303
    %p306 = scmp.ne.s32.totalorder %s291, %s305
    %p307 = scmp.eq.s32.totalorder %s29, 0
    %p308 = por %p306, %p307
    %s310 = sadd.s32 %s309, 1
    %p313 = scmp.eq.s32.totalorder %s23, 1
    %p314 = scmp.ne.s32.totalorder %s309, %s311
    %p315 = scmp.eq.s32.totalorder %s23, 0
    %p316 = por %p314, %p315
    %p317 = scmp.ne.s32.totalorder %s309, %s311
    %p318 = scmp.eq.s32.totalorder %s28, 1
    %p319 = por %p317, %p318
    %p320 = scmp.ne.s32.totalorder %s311, %s312
    %p321 = scmp.eq.s32.totalorder %s28, 0
    %p322 = por %p320, %p321
    %p323 = scmp.ne.s32.totalorder %s311, %s312
    %p324 = scmp.eq.s32.totalorder %s29, 1
    %p325 = por %p323, %p324
    %p327 = scmp.ne.s32.totalorder %s312, %s326
    %p328 = scmp.eq.s32.totalorder %s29, 0
    %p329 = por %p327, %p328
    %s331 = sadd.s32 %s330, 1
    %p334 = scmp.eq.s32.totalorder %s23, 1
    %p335 = scmp.ne.s32.totalorder %s330, %s332
    %p336 = scmp.eq.s32.totalorder %s23, 0
    %p337 = por %p335, %p336
    %p338 = scmp.ne.s32.totalorder %s330, %s332
    %p339 = scmp.eq.s32.totalorder %s28, 1
    %p340 = por %p338, %p339
    %p341 = scmp.ne.s32.totalorder %s332, %s333
    %p342 = scmp.eq.s32.totalorder %s28, 0
    %p343 = por %p341, %p342
    %p344 = scmp.ne.s32.totalorder %s332, %s333
    %p345 = scmp.eq.s32.totalorder %s29, 1
    %p346 = por %p344, %p345
    %p348 = scmp.ne.s32.totalorder %s333, %s347
    %p349 = scmp.eq.s32.totalorder %s29, 0
    %p350 = por %p348, %p349
    %s352 = sadd.s32 %s351, 1
    %p355 = scmp.eq.s32.totalorder %s23, 1
    %p356 = scmp.ne.s32.totalorder %s351, %s353
    %p357 = scmp.eq.s32.totalorder %s23, 0
    %p358 = por %p356, %p357
    %p359 = scmp.ne.s32.totalorder %s351, %s353
    %p360 = scmp.eq.s32.totalorder %s28, 1
    %p361 = por %p359, %p360
    %p362 = scmp.ne.s32.totalorder %s353, %s354
    %p363 = scmp.eq.s32.totalorder %s28, 0
    %p364 = por %p362, %p363
    %p365 = scmp.ne.s32.totalorder %s353, %s354
    %p366 = scmp.eq.s32.totalorder %s29, 1
    %p367 = por %p365, %p366
    %p369 = scmp.ne.s32.totalorder %s354, %s368
    %p370 = scmp.eq.s32.totalorder %s29, 0
    %p371 = por %p369, %p370
    %s373 = sadd.s32 %s372, 1
    %p376 = scmp.eq.s32.totalorder %s23, 1
    %p377 = scmp.ne.s32.totalorder %s372, %s374
    %p378 = scmp.eq.s32.totalorder %s23, 0
    %p379 = por %p377, %p378
    %p380 = scmp.ne.s32.totalorder %s372, %s374
    %p381 = scmp.eq.s32.totalorder %s28, 1
    %p382 = por %p380, %p381
    %p383 = scmp.ne.s32.totalorder %s374, %s375
    %p384 = scmp.eq.s32.totalorder %s28, 0
    %p385 = por %p383, %p384
    %p386 = scmp.ne.s32.totalorder %s374, %s375
    %p387 = scmp.eq.s32.totalorder %s29, 1
    %p388 = por %p386, %p387
    %p390 = scmp.ne.s32.totalorder %s375, %s389
    %p391 = scmp.eq.s32.totalorder %s29, 0
    %p392 = por %p390, %p391
    %s393 = ssub.s32 %s23, %s30
    %p394 = scmp.eq.s32.totalorder %s393, 0
    %s396 = sadd.s32 %s395, 1
    %s397 = scalar_select %p394, %s395, %s396
    %p400 = pneg %p394
    %p401 = scmp.eq.s32.totalorder %s23, 1
    %p402 = por %p400, %p401
    %p403 = scmp.ne.s32.totalorder %s395, %s398
    %p404 = scmp.eq.s32.totalorder %s23, 0
    %p405 = por %p403, %p404
    %p406 = scmp.ne.s32.totalorder %s395, %s398
    %p407 = scmp.eq.s32.totalorder %s28, 1
    %p408 = por %p406, %p407
    %p409 = scmp.ne.s32.totalorder %s398, %s399
    %p410 = scmp.eq.s32.totalorder %s28, 0
    %p411 = por %p409, %p410
    %p412 = scmp.ne.s32.totalorder %s398, %s399
    %p413 = scmp.eq.s32.totalorder %s29, 1
    %p414 = por %p412, %p413
    %p416 = scmp.ne.s32.totalorder %s399, %s415
    %p417 = scmp.eq.s32.totalorder %s29, 0
    %p418 = por %p416, %p417
    %p419 = scmp.le.s32.totalorder 1, %s23
    %p420 = scmp.lt.s32.totalorder %s23, 3
    %p421 = pnand %p419, %p420
    %p422 = pneg %p421
    // Predicated region
    $region9: #{tpu_custom_call.1} parent=5 // pred_check
      _
    $region10: #{tpu_custom_call.1} parent=5 // pred_check_branch
      %424 = sbr.rel (%p421) target = $region12
    $region11: #{tpu_custom_call.1} parent=5 // pred_region
      %s425 = ssub.s32 %s23, 1
      // Predicated region
      $region13: #{tpu_custom_call.1} parent=11 // pred_check
        %p426 = pneg %p70
      $region14: #{tpu_custom_call.1} parent=11 // pred_check_branch
        %428 = sbr.rel (%p426) target = $region16
      $region15: #{tpu_custom_call.1} parent=11 // pred_region
        _
      $region16: #{tpu_custom_call.1} parent=11 // pred_fallthru
        _
      // Predicated region
      $region17: #{tpu_custom_call.1} parent=11 // pred_check
        %p429 = pneg %p91
      $region18: #{tpu_custom_call.1} parent=11 // pred_check_branch
        %431 = sbr.rel (%p429) target = $region20
      $region19: #{tpu_custom_call.1} parent=11 // pred_region
        _
      $region20: #{tpu_custom_call.1} parent=11 // pred_fallthru
        _
      // Predicated region
      $region21: #{tpu_custom_call.1} parent=11 // pred_check
        %p432 = pneg %p112
      $region22: #{tpu_custom_call.1} parent=11 // pred_check_branch
        %434 = sbr.rel (%p432) target = $region24
      $region23: #{tpu_custom_call.1} parent=11 // pred_region
        _
      $region24: #{tpu_custom_call.1} parent=11 // pred_fallthru
        _
      // Predicated region
      $region25: #{tpu_custom_call.1} parent=11 // pred_check
        %p435 = pneg %p133
      $region26: #{tpu_custom_call.1} parent=11 // pred_check_branch
        %437 = sbr.rel (%p435) target = $region28
      $region27: #{tpu_custom_call.1} parent=11 // pred_region
        _
      $region28: #{tpu_custom_call.1} parent=11 // pred_fallthru
        _
      // Predicated region
      $region29: #{tpu_custom_call.1} parent=11 // pred_check
        %p438 = pneg %p154
      $region30: #{tpu_custom_call.1} parent=11 // pred_check_branch
        %440 = sbr.rel (%p438) target = $region32
      $region31: #{tpu_custom_call.1} parent=11 // pred_region
        _
      $region32: #{tpu_custom_call.1} parent=11 // pred_fallthru
        _
      // Predicated region
      $region33: #{tpu_custom_call.1} parent=11 // pred_check
        %p441 = pneg %p175
      $region34: #{tpu_custom_call.1} parent=11 // pred_check_branch
        %443 = sbr.rel (%p441) target = $region36
      $region35: #{tpu_custom_call.1} parent=11 // pred_region
        _
      $region36: #{tpu_custom_call.1} parent=11 // pred_fallthru
        _
      // Predicated region
      $region37: #{tpu_custom_call.1} parent=11 // pred_check
        %p444 = pneg %p196
      $region38: #{tpu_custom_call.1} parent=11 // pred_check_branch
        %446 = sbr.rel (%p444) target = $region40
      $region39: #{tpu_custom_call.1} parent=11 // pred_region
        _
      $region40: #{tpu_custom_call.1} parent=11 // pred_fallthru
        _
      // Predicated region
      $region41: #{tpu_custom_call.1} parent=11 // pred_check
        %p447 = pneg %p217
      $region42: #{tpu_custom_call.1} parent=11 // pred_check_branch
        %449 = sbr.rel (%p447) target = $region44
      $region43: #{tpu_custom_call.1} parent=11 // pred_region
        _
      $region44: #{tpu_custom_call.1} parent=11 // pred_fallthru
        _
      // Predicated region
      $region45: #{tpu_custom_call.1} parent=11 // pred_check
        %p450 = pneg %p238
      $region46: #{tpu_custom_call.1} parent=11 // pred_check_branch
        %452 = sbr.rel (%p450) target = $region48
      $region47: #{tpu_custom_call.1} parent=11 // pred_region
        _
      $region48: #{tpu_custom_call.1} parent=11 // pred_fallthru
        _
      // Predicated region
      $region49: #{tpu_custom_call.1} parent=11 // pred_check
        %p453 = pneg %p259
      $region50: #{tpu_custom_call.1} parent=11 // pred_check_branch
        %455 = sbr.rel (%p453) target = $region52
      $region51: #{tpu_custom_call.1} parent=11 // pred_region
        _
      $region52: #{tpu_custom_call.1} parent=11 // pred_fallthru
        _
      // Predicated region
      $region53: #{tpu_custom_call.1} parent=11 // pred_check
        %p456 = pneg %p280
      $region54: #{tpu_custom_call.1} parent=11 // pred_check_branch
        %458 = sbr.rel (%p456) target = $region56
      $region55: #{tpu_custom_call.1} parent=11 // pred_region
        _
      $region56: #{tpu_custom_call.1} parent=11 // pred_fallthru
        _
      // Predicated region
      $region57: #{tpu_custom_call.1} parent=11 // pred_check
        %p459 = pneg %p301
      $region58: #{tpu_custom_call.1} parent=11 // pred_check_branch
        %461 = sbr.rel (%p459) target = $region60
      $region59: #{tpu_custom_call.1} parent=11 // pred_region
        _
      $region60: #{tpu_custom_call.1} parent=11 // pred_fallthru
        _
      // Predicated region
      $region61: #{tpu_custom_call.1} parent=11 // pred_check
        %p462 = pneg %p322
      $region62: #{tpu_custom_call.1} parent=11 // pred_check_branch
        %464 = sbr.rel (%p462) target = $region64
      $region63: #{tpu_custom_call.1} parent=11 // pred_region
        _
      $region64: #{tpu_custom_call.1} parent=11 // pred_fallthru
        _
      // Predicated region
      $region65: #{tpu_custom_call.1} parent=11 // pred_check
        %p465 = pneg %p343
      $region66: #{tpu_custom_call.1} parent=11 // pred_check_branch
        %467 = sbr.rel (%p465) target = $region68
      $region67: #{tpu_custom_call.1} parent=11 // pred_region
        _
      $region68: #{tpu_custom_call.1} parent=11 // pred_fallthru
        _
      // Predicated region
      $region69: #{tpu_custom_call.1} parent=11 // pred_check
        %p468 = pneg %p364
      $region70: #{tpu_custom_call.1} parent=11 // pred_check_branch
        %470 = sbr.rel (%p468) target = $region72
      $region71: #{tpu_custom_call.1} parent=11 // pred_region
        _
      $region72: #{tpu_custom_call.1} parent=11 // pred_fallthru
        _
      // Predicated region
      $region73: #{tpu_custom_call.1} parent=11 // pred_check
        %p471 = pneg %p385
      $region74: #{tpu_custom_call.1} parent=11 // pred_check_branch
        %473 = sbr.rel (%p471) target = $region76
      $region75: #{tpu_custom_call.1} parent=11 // pred_region
        _
      $region76: #{tpu_custom_call.1} parent=11 // pred_fallthru
        _
    $region12: #{tpu_custom_call.1} parent=5 // pred_fallthru
      _
    %p474 = scmp.lt.s32.totalorder %s23, 2
    // Predicated region
    $region77: #{tpu_custom_call.1} parent=5 // pred_check
      %p475 = pneg %p474
    $region78: #{tpu_custom_call.1} parent=5 // pred_check_branch
      %477 = sbr.rel (%p475) target = $region80
    $region79: #{tpu_custom_call.1} parent=5 // pred_region
      // Predicated region
      $region81: #{tpu_custom_call.1} parent=79 // pred_check
        %p478 = pneg %p43
      $region82: #{tpu_custom_call.1} parent=79 // pred_check_branch
        %480 = sbr.rel (%p478) target = $region84
      $region83: #{tpu_custom_call.1} parent=79 // pred_region
        %s481 = smul.u32 8, %s23
        %p482 = scmp.lt.s32.totalorder %s481, 15
        %s483 = scalar_select %p482, %s481, 15
        %s484 = smul.addr %s483, 8
        %s485 = scalar_lea.vmem %s0, %s484
        %s486 = smul.u32 8, %s23
      $region84: #{tpu_custom_call.1} parent=79 // pred_fallthru
        _
    $region80: #{tpu_custom_call.1} parent=5 // pred_fallthru
      _
    %p487 = scmp.le.s32.totalorder 1, %s23
    %p488 = scmp.lt.s32.totalorder %s23, 3
    %p489 = pnand %p487, %p488
    %p490 = pneg %p489
    // Predicated region
    $region85: #{tpu_custom_call.1} parent=5 // pred_check
      _
    $region86: #{tpu_custom_call.1} parent=5 // pred_check_branch
      %492 = sbr.rel (%p489) target = $region88
    $region87: #{tpu_custom_call.1} parent=5 // pred_region
      %s493 = ssub.s32 %s23, 1
      %s494 = smul.u32 8, %s28
      %p495 = scmp.lt.s32.totalorder %s494, 15
      %s496 = scalar_select %p495, %s494, 15
      %s497 = smul.addr %s496, 8
      %s498 = scalar_lea.vmem %s0, %s497
      %p499 = pneg %p49
      %p500 = pneg %p46
      %p501 = pneg %p70
      %p502 = pneg %p67
      %p503 = pneg %p91
      %p504 = pneg %p88
      %p505 = pneg %p112
      %p506 = pneg %p109
      %p507 = pneg %p133
      %p508 = pneg %p130
      %p509 = pneg %p154
      %p510 = pneg %p151
      %p511 = pneg %p175
      %p512 = pneg %p172
      %p513 = pneg %p196
      %p514 = pneg %p193
      %p515 = pneg %p217
      %p516 = pneg %p214
      %p517 = pneg %p238
      %p518 = pneg %p235
      %p519 = pneg %p259
      %p520 = pneg %p256
      %p521 = pneg %p280
      %p522 = pneg %p277
      %p523 = pneg %p301
      %p524 = pneg %p298
      %p525 = pneg %p322
      %p526 = pneg %p319
      %p527 = pneg %p343
      %p528 = pneg %p340
      %p529 = pneg %p364
      %p530 = pneg %p361
      %p531 = pneg %p385
      %p532 = pneg %p382
      %p533 = pneg %p411
      %p534 = pneg %p408
      %s535 = smul.u32 8, %s28
      %p536 = scmp.lt.s32.totalorder %s535, 15
      %s537 = scalar_select %p536, %s535, 15
      %s538 = smul.addr %s537, 8
      %s539 = scalar_lea.vmem %s17, %s538
      %s540 = smul.u32 8, %s28
      %p541 = scmp.lt.s32.totalorder %s540, 15
      %s542 = scalar_select %p541, %s540, 15
      %s543 = smul.addr %s542, 8
      %s544 = scalar_lea.vmem %s0, %s543
      %s545 = smul.u32 8, %s28
      %s546 = smul.u32 8, %s28
      %p547 = scmp.lt.s32.totalorder %s546, 15
      %s548 = scalar_select %p547, %s546, 15
      %s549 = smul.addr %s548, 8
      %s550 = scalar_lea.vmem %s17, %s549
      %s551 = smul.u32 8, %s28
      %v553 = vld [vmem:[%s544] sm:$0xff]
      %v554 = vld [vmem:[%s544 + $0x8] sm:$0xff]
      %v555 = vld [vmem:[%s544 + $0x10] sm:$0xff]
      %v556 = vld [vmem:[%s544 + $0x18] sm:$0xff]
      %v557 = vld [vmem:[%s544 + $0x20] sm:$0xff]
      %v558 = vld [vmem:[%s544 + $0x28] sm:$0xff]
      %v559 = vld [vmem:[%s544 + $0x30] sm:$0xff]
      %v560 = vld [vmem:[%s544 + $0x38] sm:$0xff]
      %v561 = vpack.c.bf16 %v554, %v553
      %v562 = vpack.c.bf16 %v556, %v555
      %v563 = vpack.c.bf16 %v558, %v557
      %v564 = vpack.c.bf16 %v560, %v559
      %v565 = vld [vmem:[%s1] sm:$0xf]
      %v566 = vld [vmem:[%s1 + $0x4] sm:$0xf]
      %v567 = vld [vmem:[%s1 + $0x8] sm:$0xf]
      %v568 = vld [vmem:[%s1 + $0xc] sm:$0xf]
      %v569 = vld [vmem:[%s2] sm:$0x1]
      %v571 = vperm.slane %v569, 0
      %v577 = vunpack.c.l.b16 %v565
      %v578 = vunpack.c.l.b16 %v566
      %v579 = vunpack.c.l.b16 %v567
      %v580 = vunpack.c.l.b16 %v568
      %v581 = vpack.c.b16 %v578, %v577
      %v582 = vpack.c.b16 %v580, %v579
      %vm585 = vcmask 261120
      %v587 = vsel %vm585, %v561, 0
      %v590 = vsel %vm585, %v562, 0
      %v593 = vsel %vm585, %v563, 0
      %v596 = vsel %vm585, %v564, 0
      %598 = vmatpush.bf16.msra.mxu0 0
      %599 = vmatpush.bf16.msra.mxu0 0
      %600 = vmatpush.bf16.msra.mxu0 0
      %601 = vmatpush.bf16.msra.mxu0 0
      %602 = vmatpush.bf16.msra.mxu0 0
      %603 = vmatpush.bf16.msra.mxu0 0
      %604 = vmatpush.bf16.msra.mxu0 %v582
      %605 = vmatpush.bf16.msra.mxu0 %v581
      %606 = vmatmul.bf16.gmra.mxu0 %v587
      %v607 = vpop.f32.mrf.mxu0
      %v608 = vadd.f32 %v571, %v607
      %v609 = vpop.f32.mrf.mxu0
      %v610 = vadd.f32 %v571, %v609
      %611 = vmatmul.bf16.gmra.mxu0 %v590
      %v612 = vpop.f32.mrf.mxu0
      %v613 = vadd.f32 %v571, %v612
      %v614 = vpop.f32.mrf.mxu0
      %v615 = vadd.f32 %v571, %v614
      %616 = vmatmul.bf16.gmra.mxu0 %v593
      %v617 = vpop.f32.mrf.mxu0
      %v618 = vadd.f32 %v571, %v617
      %v619 = vpop.f32.mrf.mxu0
      %v620 = vadd.f32 %v571, %v619
      %621 = vmatmul.bf16.gmra.mxu0 %v596
      %v622 = vpop.f32.mrf.mxu0
      %v623 = vadd.f32 %v571, %v622
      %v624 = vpop.f32.mrf.mxu0
      %v625 = vadd.f32 %v571, %v624
      %626 = vdwg.mxu0
      %v627 = vld [vmem:[%s3] sm:$0xf]
      %v628 = vld [vmem:[%s3 + $0x4] sm:$0xf]
      %v629 = vld [vmem:[%s3 + $0x8] sm:$0xf]
      %v630 = vld [vmem:[%s3 + $0xc] sm:$0xf]
      %v631 = vld [vmem:[%s4] sm:$0x1]
      %v633 = vperm.slane %v631, 0
      %v639 = vunpack.c.l.b16 %v627
      %v640 = vunpack.c.l.b16 %v628
      %v641 = vunpack.c.l.b16 %v629
      %v642 = vunpack.c.l.b16 %v630
      %v643 = vpack.c.b16 %v640, %v639
      %v644 = vpack.c.b16 %v642, %v641
      %647 = vmatpush.bf16.msra.mxu0 0
      %648 = vmatpush.bf16.msra.mxu0 0
      %649 = vmatpush.bf16.msra.mxu0 0
      %650 = vmatpush.bf16.msra.mxu0 0
      %651 = vmatpush.bf16.msra.mxu0 0
      %652 = vmatpush.bf16.msra.mxu0 0
      %653 = vmatpush.bf16.msra.mxu0 %v644
      %654 = vmatpush.bf16.msra.mxu0 %v643
      %655 = vmatmul.bf16.gmra.mxu0 %v587
      %v656 = vpop.f32.mrf.mxu0
      %v657 = vadd.f32 %v633, %v656
      %v658 = vpop.f32.mrf.mxu0
      %v659 = vadd.f32 %v633, %v658
      %660 = vmatmul.bf16.gmra.mxu0 %v590
      %v661 = vpop.f32.mrf.mxu0
      %v662 = vadd.f32 %v633, %v661
      %v663 = vpop.f32.mrf.mxu0
      %v664 = vadd.f32 %v633, %v663
      %665 = vmatmul.bf16.gmra.mxu0 %v593
      %v666 = vpop.f32.mrf.mxu0
      %v667 = vadd.f32 %v633, %v666
      %v668 = vpop.f32.mrf.mxu0
      %v669 = vadd.f32 %v633, %v668
      %670 = vmatmul.bf16.gmra.mxu0 %v596
      %v671 = vpop.f32.mrf.mxu0
      %v672 = vadd.f32 %v633, %v671
      %v673 = vpop.f32.mrf.mxu0
      %v674 = vadd.f32 %v633, %v673
      %675 = vdwg.mxu0
      %v676 = vld [vmem:[%s5] sm:$0xf]
      %v677 = vld [vmem:[%s5 + $0x4] sm:$0xf]
      %v678 = vld [vmem:[%s5 + $0x8] sm:$0xf]
      %v679 = vld [vmem:[%s5 + $0xc] sm:$0xf]
      %v680 = vld [vmem:[%s6] sm:$0x1]
      %v682 = vperm.slane %v680, 0
      %v688 = vunpack.c.l.b16 %v676
      %v689 = vunpack.c.l.b16 %v677
      %v690 = vunpack.c.l.b16 %v678
      %v691 = vunpack.c.l.b16 %v679
      %v692 = vpack.c.b16 %v689, %v688
      %v693 = vpack.c.b16 %v691, %v690
      %696 = vmatpush.bf16.msra.mxu0 0
      %697 = vmatpush.bf16.msra.mxu0 0
      %698 = vmatpush.bf16.msra.mxu0 0
      %699 = vmatpush.bf16.msra.mxu0 0
      %700 = vmatpush.bf16.msra.mxu0 0
      %701 = vmatpush.bf16.msra.mxu0 0
      %702 = vmatpush.bf16.msra.mxu0 %v693
      %703 = vmatpush.bf16.msra.mxu0 %v692
      %704 = vmatmul.bf16.gmra.mxu0 %v587
      %v705 = vpop.f32.mrf.mxu0
      %v706 = vadd.f32 %v682, %v705
      %v707 = vpop.f32.mrf.mxu0
      %v708 = vadd.f32 %v682, %v707
      %709 = vmatmul.bf16.gmra.mxu0 %v590
      %v710 = vpop.f32.mrf.mxu0
      %v711 = vadd.f32 %v682, %v710
      %v712 = vpop.f32.mrf.mxu0
      %v713 = vadd.f32 %v682, %v712
      %714 = vmatmul.bf16.gmra.mxu0 %v593
      %v715 = vpop.f32.mrf.mxu0
      %v716 = vadd.f32 %v682, %v715
      %v717 = vpop.f32.mrf.mxu0
      %v718 = vadd.f32 %v682, %v717
      %719 = vmatmul.bf16.gmra.mxu0 %v596
      %v720 = vpop.f32.mrf.mxu0
      %v721 = vadd.f32 %v682, %v720
      %v722 = vpop.f32.mrf.mxu0
      %v723 = vadd.f32 %v682, %v722
      %724 = vdwg.mxu0
      %733 = vrot.lane.b32.xlu0 %v608, 112
      %v734 = vpop.permute.xlu0 %733
      %735 = vrot.lane.b32.xlu0 %v610, 112
      %v736 = vpop.permute.xlu0 %735
      %737 = vrot.lane.b32.xlu0 %v613, 112
      %v738 = vpop.permute.xlu0 %737
      %739 = vrot.lane.b32.xlu0 %v615, 112
      %v740 = vpop.permute.xlu0 %739
      %741 = vrot.lane.b32.xlu0 %v618, 112
      %v742 = vpop.permute.xlu0 %741
      %743 = vrot.lane.b32.xlu0 %v620, 112
      %v744 = vpop.permute.xlu0 %743
      %745 = vrot.lane.b32.xlu0 %v623, 112
      %v746 = vpop.permute.xlu0 %745
      %747 = vrot.lane.b32.xlu0 %v625, 112
      %v748 = vpop.permute.xlu0 %747
      %757 = vrot.lane.b32.xlu0 %v608, 96
      %v758 = vpop.permute.xlu0 %757
      %759 = vrot.lane.b32.xlu0 %v610, 96
      %v760 = vpop.permute.xlu0 %759
      %761 = vrot.lane.b32.xlu0 %v613, 96
      %v762 = vpop.permute.xlu0 %761
      %763 = vrot.lane.b32.xlu0 %v615, 96
      %v764 = vpop.permute.xlu0 %763
      %765 = vrot.lane.b32.xlu0 %v618, 96
      %v766 = vpop.permute.xlu0 %765
      %767 = vrot.lane.b32.xlu0 %v620, 96
      %v768 = vpop.permute.xlu0 %767
      %769 = vrot.lane.b32.xlu0 %v623, 96
      %v770 = vpop.permute.xlu0 %769
      %771 = vrot.lane.b32.xlu0 %v625, 96
      %v772 = vpop.permute.xlu0 %771
      %781 = vrot.lane.b32.xlu0 %v608, 80
      %v782 = vpop.permute.xlu0 %781
      %783 = vrot.lane.b32.xlu0 %v610, 80
      %v784 = vpop.permute.xlu0 %783
      %785 = vrot.lane.b32.xlu0 %v613, 80
      %v786 = vpop.permute.xlu0 %785
      %787 = vrot.lane.b32.xlu0 %v615, 80
      %v788 = vpop.permute.xlu0 %787
      %789 = vrot.lane.b32.xlu0 %v618, 80
      %v790 = vpop.permute.xlu0 %789
      %791 = vrot.lane.b32.xlu0 %v620, 80
      %v792 = vpop.permute.xlu0 %791
      %793 = vrot.lane.b32.xlu0 %v623, 80
      %v794 = vpop.permute.xlu0 %793
      %795 = vrot.lane.b32.xlu0 %v625, 80
      %v796 = vpop.permute.xlu0 %795
      %v805 = vpack.c.bf16 %v608, %v608
      %v806 = vpack.c.bf16 %v610, %v610
      %v807 = vpack.c.bf16 %v613, %v613
      %v808 = vpack.c.bf16 %v615, %v615
      %v809 = vpack.c.bf16 %v618, %v618
      %v810 = vpack.c.bf16 %v620, %v620
      %v811 = vpack.c.bf16 %v623, %v623
      %v812 = vpack.c.bf16 %v625, %v625
      %v813 = vpack.c.bf16 %v734, %v734
      %v814 = vpack.c.bf16 %v736, %v736
      %v815 = vpack.c.bf16 %v738, %v738
      %v816 = vpack.c.bf16 %v740, %v740
      %v817 = vpack.c.bf16 %v742, %v742
      %v818 = vpack.c.bf16 %v744, %v744
      %v819 = vpack.c.bf16 %v746, %v746
      %v820 = vpack.c.bf16 %v748, %v748
      %v821 = vpack.c.bf16 %v758, %v758
      %v822 = vpack.c.bf16 %v760, %v760
      %v823 = vpack.c.bf16 %v762, %v762
      %v824 = vpack.c.bf16 %v764, %v764
      %v825 = vpack.c.bf16 %v766, %v766
      %v826 = vpack.c.bf16 %v768, %v768
      %v827 = vpack.c.bf16 %v770, %v770
      %v828 = vpack.c.bf16 %v772, %v772
      %v829 = vpack.c.bf16 %v782, %v782
      %v830 = vpack.c.bf16 %v784, %v784
      %v831 = vpack.c.bf16 %v786, %v786
      %v832 = vpack.c.bf16 %v788, %v788
      %v833 = vpack.c.bf16 %v790, %v790
      %v834 = vpack.c.bf16 %v792, %v792
      %v835 = vpack.c.bf16 %v794, %v794
      %v836 = vpack.c.bf16 %v796, %v796
      %845 = vrot.lane.b32.xlu0 %v657, 112
      %v846 = vpop.permute.xlu0 %845
      %847 = vrot.lane.b32.xlu0 %v659, 112
      %v848 = vpop.permute.xlu0 %847
      %849 = vrot.lane.b32.xlu0 %v662, 112
      %v850 = vpop.permute.xlu0 %849
      %851 = vrot.lane.b32.xlu0 %v664, 112
      %v852 = vpop.permute.xlu0 %851
      %853 = vrot.lane.b32.xlu0 %v667, 112
      %v854 = vpop.permute.xlu0 %853
      %855 = vrot.lane.b32.xlu0 %v669, 112
      %v856 = vpop.permute.xlu0 %855
      %857 = vrot.lane.b32.xlu0 %v672, 112
      %v858 = vpop.permute.xlu0 %857
      %859 = vrot.lane.b32.xlu0 %v674, 112
      %v860 = vpop.permute.xlu0 %859
      %869 = vrot.lane.b32.xlu0 %v657, 96
      %v870 = vpop.permute.xlu0 %869
      %871 = vrot.lane.b32.xlu0 %v659, 96
      %v872 = vpop.permute.xlu0 %871
      %873 = vrot.lane.b32.xlu0 %v662, 96
      %v874 = vpop.permute.xlu0 %873
      %875 = vrot.lane.b32.xlu0 %v664, 96
      %v876 = vpop.permute.xlu0 %875
      %877 = vrot.lane.b32.xlu0 %v667, 96
      %v878 = vpop.permute.xlu0 %877
      %879 = vrot.lane.b32.xlu0 %v669, 96
      %v880 = vpop.permute.xlu0 %879
      %881 = vrot.lane.b32.xlu0 %v672, 96
      %v882 = vpop.permute.xlu0 %881
      %883 = vrot.lane.b32.xlu0 %v674, 96
      %v884 = vpop.permute.xlu0 %883
      %893 = vrot.lane.b32.xlu0 %v657, 80
      %v894 = vpop.permute.xlu0 %893
      %895 = vrot.lane.b32.xlu0 %v659, 80
      %v896 = vpop.permute.xlu0 %895
      %897 = vrot.lane.b32.xlu0 %v662, 80
      %v898 = vpop.permute.xlu0 %897
      %899 = vrot.lane.b32.xlu0 %v664, 80
      %v900 = vpop.permute.xlu0 %899
      %901 = vrot.lane.b32.xlu0 %v667, 80
      %v902 = vpop.permute.xlu0 %901
      %903 = vrot.lane.b32.xlu0 %v669, 80
      %v904 = vpop.permute.xlu0 %903
      %905 = vrot.lane.b32.xlu0 %v672, 80
      %v906 = vpop.permute.xlu0 %905
      %907 = vrot.lane.b32.xlu0 %v674, 80
      %v908 = vpop.permute.xlu0 %907
      %v917 = vpack.c.bf16 %v657, %v657
      %v918 = vpack.c.bf16 %v659, %v659
      %v919 = vpack.c.bf16 %v662, %v662
      %v920 = vpack.c.bf16 %v664, %v664
      %v921 = vpack.c.bf16 %v667, %v667
      %v922 = vpack.c.bf16 %v669, %v669
      %v923 = vpack.c.bf16 %v672, %v672
      %v924 = vpack.c.bf16 %v674, %v674
      %v925 = vpack.c.bf16 %v846, %v846
      %v926 = vpack.c.bf16 %v848, %v848
      %v927 = vpack.c.bf16 %v850, %v850
      %v928 = vpack.c.bf16 %v852, %v852
      %v929 = vpack.c.bf16 %v854, %v854
      %v930 = vpack.c.bf16 %v856, %v856
      %v931 = vpack.c.bf16 %v858, %v858
      %v932 = vpack.c.bf16 %v860, %v860
      %v933 = vpack.c.bf16 %v870, %v870
      %v934 = vpack.c.bf16 %v872, %v872
      %v935 = vpack.c.bf16 %v874, %v874
      %v936 = vpack.c.bf16 %v876, %v876
      %v937 = vpack.c.bf16 %v878, %v878
      %v938 = vpack.c.bf16 %v880, %v880
      %v939 = vpack.c.bf16 %v882, %v882
      %v940 = vpack.c.bf16 %v884, %v884
      %v941 = vpack.c.bf16 %v894, %v894
      %v942 = vpack.c.bf16 %v896, %v896
      %v943 = vpack.c.bf16 %v898, %v898
      %v944 = vpack.c.bf16 %v900, %v900
      %v945 = vpack.c.bf16 %v902, %v902
      %v946 = vpack.c.bf16 %v904, %v904
      %v947 = vpack.c.bf16 %v906, %v906
      %v948 = vpack.c.bf16 %v908, %v908
      %957 = vrot.lane.b32.xlu0 %v706, 112
      %v958 = vpop.permute.xlu0 %957
      %959 = vrot.lane.b32.xlu0 %v708, 112
      %v960 = vpop.permute.xlu0 %959
      %961 = vrot.lane.b32.xlu0 %v711, 112
      %v962 = vpop.permute.xlu0 %961
      %963 = vrot.lane.b32.xlu0 %v713, 112
      %v964 = vpop.permute.xlu0 %963
      %965 = vrot.lane.b32.xlu0 %v716, 112
      %v966 = vpop.permute.xlu0 %965
      %967 = vrot.lane.b32.xlu0 %v718, 112
      %v968 = vpop.permute.xlu0 %967
      %969 = vrot.lane.b32.xlu0 %v721, 112
      %v970 = vpop.permute.xlu0 %969
      %971 = vrot.lane.b32.xlu0 %v723, 112
      %v972 = vpop.permute.xlu0 %971
      %981 = vrot.lane.b32.xlu0 %v706, 96
      %v982 = vpop.permute.xlu0 %981
      %983 = vrot.lane.b32.xlu0 %v708, 96
      %v984 = vpop.permute.xlu0 %983
      %985 = vrot.lane.b32.xlu0 %v711, 96
      %v986 = vpop.permute.xlu0 %985
      %987 = vrot.lane.b32.xlu0 %v713, 96
      %v988 = vpop.permute.xlu0 %987
      %989 = vrot.lane.b32.xlu0 %v716, 96
      %v990 = vpop.permute.xlu0 %989
      %991 = vrot.lane.b32.xlu0 %v718, 96
      %v992 = vpop.permute.xlu0 %991
      %993 = vrot.lane.b32.xlu0 %v721, 96
      %v994 = vpop.permute.xlu0 %993
      %995 = vrot.lane.b32.xlu0 %v723, 96
      %v996 = vpop.permute.xlu0 %995
      %1005 = vrot.lane.b32.xlu0 %v706, 80
      %v1006 = vpop.permute.xlu0 %1005
      %1007 = vrot.lane.b32.xlu0 %v708, 80
      %v1008 = vpop.permute.xlu0 %1007
      %1009 = vrot.lane.b32.xlu0 %v711, 80
      %v1010 = vpop.permute.xlu0 %1009
      %1011 = vrot.lane.b32.xlu0 %v713, 80
      %v1012 = vpop.permute.xlu0 %1011
      %1013 = vrot.lane.b32.xlu0 %v716, 80
      %v1014 = vpop.permute.xlu0 %1013
      %1015 = vrot.lane.b32.xlu0 %v718, 80
      %v1016 = vpop.permute.xlu0 %1015
      %1017 = vrot.lane.b32.xlu0 %v721, 80
      %v1018 = vpop.permute.xlu0 %1017
      %1019 = vrot.lane.b32.xlu0 %v723, 80
      %v1020 = vpop.permute.xlu0 %1019
      %v1029 = vpack.c.bf16 %v706, %v706
      %v1030 = vpack.c.bf16 %v708, %v708
      %v1031 = vpack.c.bf16 %v711, %v711
      %v1032 = vpack.c.bf16 %v713, %v713
      %v1033 = vpack.c.bf16 %v716, %v716
      %v1034 = vpack.c.bf16 %v718, %v718
      %v1035 = vpack.c.bf16 %v721, %v721
      %v1036 = vpack.c.bf16 %v723, %v723
      %v1037 = vpack.c.bf16 %v958, %v958
      %v1038 = vpack.c.bf16 %v960, %v960
      %v1039 = vpack.c.bf16 %v962, %v962
      %v1040 = vpack.c.bf16 %v964, %v964
      %v1041 = vpack.c.bf16 %v966, %v966
      %v1042 = vpack.c.bf16 %v968, %v968
      %v1043 = vpack.c.bf16 %v970, %v970
      %v1044 = vpack.c.bf16 %v972, %v972
      %v1045 = vpack.c.bf16 %v982, %v982
      %v1046 = vpack.c.bf16 %v984, %v984
      %v1047 = vpack.c.bf16 %v986, %v986
      %v1048 = vpack.c.bf16 %v988, %v988
      %v1049 = vpack.c.bf16 %v990, %v990
      %v1050 = vpack.c.bf16 %v992, %v992
      %v1051 = vpack.c.bf16 %v994, %v994
      %v1052 = vpack.c.bf16 %v996, %v996
      %v1053 = vpack.c.bf16 %v1006, %v1006
      %v1054 = vpack.c.bf16 %v1008, %v1008
      %v1055 = vpack.c.bf16 %v1010, %v1010
      %v1056 = vpack.c.bf16 %v1012, %v1012
      %v1057 = vpack.c.bf16 %v1014, %v1014
      %v1058 = vpack.c.bf16 %v1016, %v1016
      %v1059 = vpack.c.bf16 %v1018, %v1018
      %v1060 = vpack.c.bf16 %v1020, %v1020
      %vm1061 = vcmask 130048
      %v1063 = vsel %vm1061, %v805, 0
      %v1066 = vsel %vm1061, %v917, 0
      %1068 = vmatpush.bf16.xpose.msra.mxu0 0
      %1069 = vmatpush.bf16.xpose.msra.mxu0 0
      %1070 = vmatpush.bf16.xpose.msra.mxu0 0
      %1071 = vmatpush.bf16.xpose.msra.mxu0 0
      %1072 = vmatpush.bf16.xpose.msra.mxu0 0
      %1073 = vmatpush.bf16.xpose.msra.mxu0 0
      %1074 = vmatpush.bf16.xpose.msra.mxu0 0
      %1075 = vmatpush.bf16.xpose.msra.mxu0 %v1066
      %1076 = vmatmul.bf16.gmra.mxu0 %v1063
      %v1077 = vpop.f32.mrf.mxu0
      %v1078 = vadd.f32 0.0, %v1077
      %v1079 = vpop.f32.mrf.mxu0
      %1080 = vdwg.mxu0
      %v1082 = vsel %vm1061, %v806, 0
      %v1085 = vsel %vm1061, %v918, 0
      %1087 = vmatpush.bf16.xpose.msra.mxu0 0
      %1088 = vmatpush.bf16.xpose.msra.mxu0 0
      %1089 = vmatpush.bf16.xpose.msra.mxu0 0
      %1090 = vmatpush.bf16.xpose.msra.mxu0 0
      %1091 = vmatpush.bf16.xpose.msra.mxu0 0
      %1092 = vmatpush.bf16.xpose.msra.mxu0 0
      %1093 = vmatpush.bf16.xpose.msra.mxu0 0
      %1094 = vmatpush.bf16.xpose.msra.mxu0 %v1085
      %1095 = vmatmul.bf16.gmra.mxu0 %v1082
      %v1096 = vpop.f32.mrf.mxu0
      %v1097 = vadd.f32 0.0, %v1096
      %v1098 = vpop.f32.mrf.mxu0
      %1099 = vdwg.mxu0
      %v1101 = vsel %vm1061, %v807, 0
      %v1104 = vsel %vm1061, %v919, 0
      %1106 = vmatpush.bf16.xpose.msra.mxu0 0
      %1107 = vmatpush.bf16.xpose.msra.mxu0 0
      %1108 = vmatpush.bf16.xpose.msra.mxu0 0
      %1109 = vmatpush.bf16.xpose.msra.mxu0 0
      %1110 = vmatpush.bf16.xpose.msra.mxu0 0
      %1111 = vmatpush.bf16.xpose.msra.mxu0 0
      %1112 = vmatpush.bf16.xpose.msra.mxu0 0
      %1113 = vmatpush.bf16.xpose.msra.mxu0 %v1104
      %1114 = vmatmul.bf16.gmra.mxu0 %v1101
      %v1115 = vpop.f32.mrf.mxu0
      %v1116 = vadd.f32 0.0, %v1115
      %v1117 = vpop.f32.mrf.mxu0
      %1118 = vdwg.mxu0
      %v1120 = vsel %vm1061, %v808, 0
      %v1123 = vsel %vm1061, %v920, 0
      %1125 = vmatpush.bf16.xpose.msra.mxu0 0
      %1126 = vmatpush.bf16.xpose.msra.mxu0 0
      %1127 = vmatpush.bf16.xpose.msra.mxu0 0
      %1128 = vmatpush.bf16.xpose.msra.mxu0 0
      %1129 = vmatpush.bf16.xpose.msra.mxu0 0
      %1130 = vmatpush.bf16.xpose.msra.mxu0 0
      %1131 = vmatpush.bf16.xpose.msra.mxu0 0
      %1132 = vmatpush.bf16.xpose.msra.mxu0 %v1123
      %1133 = vmatmul.bf16.gmra.mxu0 %v1120
      %v1134 = vpop.f32.mrf.mxu0
      %v1135 = vadd.f32 0.0, %v1134
      %v1136 = vpop.f32.mrf.mxu0
      %1137 = vdwg.mxu0
      %v1139 = vsel %vm1061, %v809, 0
      %v1142 = vsel %vm1061, %v921, 0
      %1144 = vmatpush.bf16.xpose.msra.mxu0 0
      %1145 = vmatpush.bf16.xpose.msra.mxu0 0
      %1146 = vmatpush.bf16.xpose.msra.mxu0 0
      %1147 = vmatpush.bf16.xpose.msra.mxu0 0
      %1148 = vmatpush.bf16.xpose.msra.mxu0 0
      %1149 = vmatpush.bf16.xpose.msra.mxu0 0
      %1150 = vmatpush.bf16.xpose.msra.mxu0 0
      %1151 = vmatpush.bf16.xpose.msra.mxu0 %v1142
      %1152 = vmatmul.bf16.gmra.mxu0 %v1139
      %v1153 = vpop.f32.mrf.mxu0
      %v1154 = vadd.f32 0.0, %v1153
      %v1155 = vpop.f32.mrf.mxu0
      %1156 = vdwg.mxu0
      %v1158 = vsel %vm1061, %v810, 0
      %v1161 = vsel %vm1061, %v922, 0
      %1163 = vmatpush.bf16.xpose.msra.mxu0 0
      %1164 = vmatpush.bf16.xpose.msra.mxu0 0
      %1165 = vmatpush.bf16.xpose.msra.mxu0 0
      %1166 = vmatpush.bf16.xpose.msra.mxu0 0
      %1167 = vmatpush.bf16.xpose.msra.mxu0 0
      %1168 = vmatpush.bf16.xpose.msra.mxu0 0
      %1169 = vmatpush.bf16.xpose.msra.mxu0 0
      %1170 = vmatpush.bf16.xpose.msra.mxu0 %v1161
      %1171 = vmatmul.bf16.gmra.mxu0 %v1158
      %v1172 = vpop.f32.mrf.mxu0
      %v1173 = vadd.f32 0.0, %v1172
      %v1174 = vpop.f32.mrf.mxu0
      %1175 = vdwg.mxu0
      %v1177 = vsel %vm1061, %v811, 0
      %v1180 = vsel %vm1061, %v923, 0
      %1182 = vmatpush.bf16.xpose.msra.mxu0 0
      %1183 = vmatpush.bf16.xpose.msra.mxu0 0
      %1184 = vmatpush.bf16.xpose.msra.mxu0 0
      %1185 = vmatpush.bf16.xpose.msra.mxu0 0
      %1186 = vmatpush.bf16.xpose.msra.mxu0 0
      %1187 = vmatpush.bf16.xpose.msra.mxu0 0
      %1188 = vmatpush.bf16.xpose.msra.mxu0 0
      %1189 = vmatpush.bf16.xpose.msra.mxu0 %v1180
      %1190 = vmatmul.bf16.gmra.mxu0 %v1177
      %v1191 = vpop.f32.mrf.mxu0
      %v1192 = vadd.f32 0.0, %v1191
      %v1193 = vpop.f32.mrf.mxu0
      %1194 = vdwg.mxu0
      %v1196 = vsel %vm1061, %v812, 0
      %v1199 = vsel %vm1061, %v924, 0
      %1201 = vmatpush.bf16.xpose.msra.mxu0 0
      %1202 = vmatpush.bf16.xpose.msra.mxu0 0
      %1203 = vmatpush.bf16.xpose.msra.mxu0 0
      %1204 = vmatpush.bf16.xpose.msra.mxu0 0
      %1205 = vmatpush.bf16.xpose.msra.mxu0 0
      %1206 = vmatpush.bf16.xpose.msra.mxu0 0
      %1207 = vmatpush.bf16.xpose.msra.mxu0 0
      %1208 = vmatpush.bf16.xpose.msra.mxu0 %v1199
      %1209 = vmatmul.bf16.gmra.mxu0 %v1196
      %v1210 = vpop.f32.mrf.mxu0
      %v1211 = vadd.f32 0.0, %v1210
      %v1212 = vpop.f32.mrf.mxu0
      %1213 = vdwg.mxu0
      %v1215 = vsel %vm1061, %v813, 0
      %v1218 = vsel %vm1061, %v925, 0
      %1220 = vmatpush.bf16.xpose.msra.mxu0 0
      %1221 = vmatpush.bf16.xpose.msra.mxu0 0
      %1222 = vmatpush.bf16.xpose.msra.mxu0 0
      %1223 = vmatpush.bf16.xpose.msra.mxu0 0
      %1224 = vmatpush.bf16.xpose.msra.mxu0 0
      %1225 = vmatpush.bf16.xpose.msra.mxu0 0
      %1226 = vmatpush.bf16.xpose.msra.mxu0 0
      %1227 = vmatpush.bf16.xpose.msra.mxu0 %v1218
      %1228 = vmatmul.bf16.gmra.mxu0 %v1215
      %v1229 = vpop.f32.mrf.mxu0
      %v1230 = vadd.f32 0.0, %v1229
      %v1231 = vpop.f32.mrf.mxu0
      %1232 = vdwg.mxu0
      %v1234 = vsel %vm1061, %v814, 0
      %v1237 = vsel %vm1061, %v926, 0
      %1239 = vmatpush.bf16.xpose.msra.mxu0 0
      %1240 = vmatpush.bf16.xpose.msra.mxu0 0
      %1241 = vmatpush.bf16.xpose.msra.mxu0 0
      %1242 = vmatpush.bf16.xpose.msra.mxu0 0
      %1243 = vmatpush.bf16.xpose.msra.mxu0 0
      %1244 = vmatpush.bf16.xpose.msra.mxu0 0
      %1245 = vmatpush.bf16.xpose.msra.mxu0 0
      %1246 = vmatpush.bf16.xpose.msra.mxu0 %v1237
      %1247 = vmatmul.bf16.gmra.mxu0 %v1234
      %v1248 = vpop.f32.mrf.mxu0
      %v1249 = vadd.f32 0.0, %v1248
      %v1250 = vpop.f32.mrf.mxu0
      %1251 = vdwg.mxu0
      %v1253 = vsel %vm1061, %v815, 0
      %v1256 = vsel %vm1061, %v927, 0
      %1258 = vmatpush.bf16.xpose.msra.mxu0 0
      %1259 = vmatpush.bf16.xpose.msra.mxu0 0
      %1260 = vmatpush.bf16.xpose.msra.mxu0 0
      %1261 = vmatpush.bf16.xpose.msra.mxu0 0
      %1262 = vmatpush.bf16.xpose.msra.mxu0 0
      %1263 = vmatpush.bf16.xpose.msra.mxu0 0
      %1264 = vmatpush.bf16.xpose.msra.mxu0 0
      %1265 = vmatpush.bf16.xpose.msra.mxu0 %v1256
      %1266 = vmatmul.bf16.gmra.mxu0 %v1253
      %v1267 = vpop.f32.mrf.mxu0
      %v1268 = vadd.f32 0.0, %v1267
      %v1269 = vpop.f32.mrf.mxu0
      %1270 = vdwg.mxu0
      %v1272 = vsel %vm1061, %v816, 0
      %v1275 = vsel %vm1061, %v928, 0
      %1277 = vmatpush.bf16.xpose.msra.mxu0 0
      %1278 = vmatpush.bf16.xpose.msra.mxu0 0
      %1279 = vmatpush.bf16.xpose.msra.mxu0 0
      %1280 = vmatpush.bf16.xpose.msra.mxu0 0
      %1281 = vmatpush.bf16.xpose.msra.mxu0 0
      %1282 = vmatpush.bf16.xpose.msra.mxu0 0
      %1283 = vmatpush.bf16.xpose.msra.mxu0 0
      %1284 = vmatpush.bf16.xpose.msra.mxu0 %v1275
      %1285 = vmatmul.bf16.gmra.mxu0 %v1272
      %v1286 = vpop.f32.mrf.mxu0
      %v1287 = vadd.f32 0.0, %v1286
      %v1288 = vpop.f32.mrf.mxu0
      %1289 = vdwg.mxu0
      %v1291 = vsel %vm1061, %v817, 0
      %v1294 = vsel %vm1061, %v929, 0
      %1296 = vmatpush.bf16.xpose.msra.mxu0 0
      %1297 = vmatpush.bf16.xpose.msra.mxu0 0
      %1298 = vmatpush.bf16.xpose.msra.mxu0 0
      %1299 = vmatpush.bf16.xpose.msra.mxu0 0
      %1300 = vmatpush.bf16.xpose.msra.mxu0 0
      %1301 = vmatpush.bf16.xpose.msra.mxu0 0
      %1302 = vmatpush.bf16.xpose.msra.mxu0 0
      %1303 = vmatpush.bf16.xpose.msra.mxu0 %v1294
      %1304 = vmatmul.bf16.gmra.mxu0 %v1291
      %v1305 = vpop.f32.mrf.mxu0
      %v1306 = vadd.f32 0.0, %v1305
      %v1307 = vpop.f32.mrf.mxu0
      %1308 = vdwg.mxu0
      %v1310 = vsel %vm1061, %v818, 0
      %v1313 = vsel %vm1061, %v930, 0
      %1315 = vmatpush.bf16.xpose.msra.mxu0 0
      %1316 = vmatpush.bf16.xpose.msra.mxu0 0
      %1317 = vmatpush.bf16.xpose.msra.mxu0 0
      %1318 = vmatpush.bf16.xpose.msra.mxu0 0
      %1319 = vmatpush.bf16.xpose.msra.mxu0 0
      %1320 = vmatpush.bf16.xpose.msra.mxu0 0
      %1321 = vmatpush.bf16.xpose.msra.mxu0 0
      %1322 = vmatpush.bf16.xpose.msra.mxu0 %v1313
      %1323 = vmatmul.bf16.gmra.mxu0 %v1310
      %v1324 = vpop.f32.mrf.mxu0
      %v1325 = vadd.f32 0.0, %v1324
      %v1326 = vpop.f32.mrf.mxu0
      %1327 = vdwg.mxu0
      %v1329 = vsel %vm1061, %v819, 0
      %v1332 = vsel %vm1061, %v931, 0
      %1334 = vmatpush.bf16.xpose.msra.mxu0 0
      %1335 = vmatpush.bf16.xpose.msra.mxu0 0
      %1336 = vmatpush.bf16.xpose.msra.mxu0 0
      %1337 = vmatpush.bf16.xpose.msra.mxu0 0
      %1338 = vmatpush.bf16.xpose.msra.mxu0 0
      %1339 = vmatpush.bf16.xpose.msra.mxu0 0
      %1340 = vmatpush.bf16.xpose.msra.mxu0 0
      %1341 = vmatpush.bf16.xpose.msra.mxu0 %v1332
      %1342 = vmatmul.bf16.gmra.mxu0 %v1329
      %v1343 = vpop.f32.mrf.mxu0
      %v1344 = vadd.f32 0.0, %v1343
      %v1345 = vpop.f32.mrf.mxu0
      %1346 = vdwg.mxu0
      %v1348 = vsel %vm1061, %v820, 0
      %v1351 = vsel %vm1061, %v932, 0
      %1353 = vmatpush.bf16.xpose.msra.mxu0 0
      %1354 = vmatpush.bf16.xpose.msra.mxu0 0
      %1355 = vmatpush.bf16.xpose.msra.mxu0 0
      %1356 = vmatpush.bf16.xpose.msra.mxu0 0
      %1357 = vmatpush.bf16.xpose.msra.mxu0 0
      %1358 = vmatpush.bf16.xpose.msra.mxu0 0
      %1359 = vmatpush.bf16.xpose.msra.mxu0 0
      %1360 = vmatpush.bf16.xpose.msra.mxu0 %v1351
      %1361 = vmatmul.bf16.gmra.mxu0 %v1348
      %v1362 = vpop.f32.mrf.mxu0
      %v1363 = vadd.f32 0.0, %v1362
      %v1364 = vpop.f32.mrf.mxu0
      %1365 = vdwg.mxu0
      %v1367 = vsel %vm1061, %v821, 0
      %v1370 = vsel %vm1061, %v933, 0
      %1372 = vmatpush.bf16.xpose.msra.mxu0 0
      %1373 = vmatpush.bf16.xpose.msra.mxu0 0
      %1374 = vmatpush.bf16.xpose.msra.mxu0 0
      %1375 = vmatpush.bf16.xpose.msra.mxu0 0
      %1376 = vmatpush.bf16.xpose.msra.mxu0 0
      %1377 = vmatpush.bf16.xpose.msra.mxu0 0
      %1378 = vmatpush.bf16.xpose.msra.mxu0 0
      %1379 = vmatpush.bf16.xpose.msra.mxu0 %v1370
      %1380 = vmatmul.bf16.gmra.mxu0 %v1367
      %v1381 = vpop.f32.mrf.mxu0
      %v1382 = vadd.f32 0.0, %v1381
      %v1383 = vpop.f32.mrf.mxu0
      %1384 = vdwg.mxu0
      %v1386 = vsel %vm1061, %v822, 0
      %v1389 = vsel %vm1061, %v934, 0
      %1391 = vmatpush.bf16.xpose.msra.mxu0 0
      %1392 = vmatpush.bf16.xpose.msra.mxu0 0
      %1393 = vmatpush.bf16.xpose.msra.mxu0 0
      %1394 = vmatpush.bf16.xpose.msra.mxu0 0
      %1395 = vmatpush.bf16.xpose.msra.mxu0 0
      %1396 = vmatpush.bf16.xpose.msra.mxu0 0
      %1397 = vmatpush.bf16.xpose.msra.mxu0 0
      %1398 = vmatpush.bf16.xpose.msra.mxu0 %v1389
      %1399 = vmatmul.bf16.gmra.mxu0 %v1386
      %v1400 = vpop.f32.mrf.mxu0
      %v1401 = vadd.f32 0.0, %v1400
      %v1402 = vpop.f32.mrf.mxu0
      %1403 = vdwg.mxu0
      %v1405 = vsel %vm1061, %v823, 0
      %v1408 = vsel %vm1061, %v935, 0
      %1410 = vmatpush.bf16.xpose.msra.mxu0 0
      %1411 = vmatpush.bf16.xpose.msra.mxu0 0
      %1412 = vmatpush.bf16.xpose.msra.mxu0 0
      %1413 = vmatpush.bf16.xpose.msra.mxu0 0
      %1414 = vmatpush.bf16.xpose.msra.mxu0 0
      %1415 = vmatpush.bf16.xpose.msra.mxu0 0
      %1416 = vmatpush.bf16.xpose.msra.mxu0 0
      %1417 = vmatpush.bf16.xpose.msra.mxu0 %v1408
      %1418 = vmatmul.bf16.gmra.mxu0 %v1405
      %v1419 = vpop.f32.mrf.mxu0
      %v1420 = vadd.f32 0.0, %v1419
      %v1421 = vpop.f32.mrf.mxu0
      %1422 = vdwg.mxu0
      %v1424 = vsel %vm1061, %v824, 0
      %v1427 = vsel %vm1061, %v936, 0
      %1429 = vmatpush.bf16.xpose.msra.mxu0 0
      %1430 = vmatpush.bf16.xpose.msra.mxu0 0
      %1431 = vmatpush.bf16.xpose.msra.mxu0 0
      %1432 = vmatpush.bf16.xpose.msra.mxu0 0
      %1433 = vmatpush.bf16.xpose.msra.mxu0 0
      %1434 = vmatpush.bf16.xpose.msra.mxu0 0
      %1435 = vmatpush.bf16.xpose.msra.mxu0 0
      %1436 = vmatpush.bf16.xpose.msra.mxu0 %v1427
      %1437 = vmatmul.bf16.gmra.mxu0 %v1424
      %v1438 = vpop.f32.mrf.mxu0
      %v1439 = vadd.f32 0.0, %v1438
      %v1440 = vpop.f32.mrf.mxu0
      %1441 = vdwg.mxu0
      %v1443 = vsel %vm1061, %v825, 0
      %v1446 = vsel %vm1061, %v937, 0
      %1448 = vmatpush.bf16.xpose.msra.mxu0 0
      %1449 = vmatpush.bf16.xpose.msra.mxu0 0
      %1450 = vmatpush.bf16.xpose.msra.mxu0 0
      %1451 = vmatpush.bf16.xpose.msra.mxu0 0
      %1452 = vmatpush.bf16.xpose.msra.mxu0 0
      %1453 = vmatpush.bf16.xpose.msra.mxu0 0
      %1454 = vmatpush.bf16.xpose.msra.mxu0 0
      %1455 = vmatpush.bf16.xpose.msra.mxu0 %v1446
      %1456 = vmatmul.bf16.gmra.mxu0 %v1443
      %v1457 = vpop.f32.mrf.mxu0
      %v1458 = vadd.f32 0.0, %v1457
      %v1459 = vpop.f32.mrf.mxu0
      %1460 = vdwg.mxu0
      %v1462 = vsel %vm1061, %v826, 0
      %v1465 = vsel %vm1061, %v938, 0
      %1467 = vmatpush.bf16.xpose.msra.mxu0 0
      %1468 = vmatpush.bf16.xpose.msra.mxu0 0
      %1469 = vmatpush.bf16.xpose.msra.mxu0 0
      %1470 = vmatpush.bf16.xpose.msra.mxu0 0
      %1471 = vmatpush.bf16.xpose.msra.mxu0 0
      %1472 = vmatpush.bf16.xpose.msra.mxu0 0
      %1473 = vmatpush.bf16.xpose.msra.mxu0 0
      %1474 = vmatpush.bf16.xpose.msra.mxu0 %v1465
      %1475 = vmatmul.bf16.gmra.mxu0 %v1462
      %v1476 = vpop.f32.mrf.mxu0
      %v1477 = vadd.f32 0.0, %v1476
      %v1478 = vpop.f32.mrf.mxu0
      %1479 = vdwg.mxu0
      %v1481 = vsel %vm1061, %v827, 0
      %v1484 = vsel %vm1061, %v939, 0
      %1486 = vmatpush.bf16.xpose.msra.mxu0 0
      %1487 = vmatpush.bf16.xpose.msra.mxu0 0
      %1488 = vmatpush.bf16.xpose.msra.mxu0 0
      %1489 = vmatpush.bf16.xpose.msra.mxu0 0
      %1490 = vmatpush.bf16.xpose.msra.mxu0 0
      %1491 = vmatpush.bf16.xpose.msra.mxu0 0
      %1492 = vmatpush.bf16.xpose.msra.mxu0 0
      %1493 = vmatpush.bf16.xpose.msra.mxu0 %v1484
      %1494 = vmatmul.bf16.gmra.mxu0 %v1481
      %v1495 = vpop.f32.mrf.mxu0
      %v1496 = vadd.f32 0.0, %v1495
      %v1497 = vpop.f32.mrf.mxu0
      %1498 = vdwg.mxu0
      %v1500 = vsel %vm1061, %v828, 0
      %v1503 = vsel %vm1061, %v940, 0
      %1505 = vmatpush.bf16.xpose.msra.mxu0 0
      %1506 = vmatpush.bf16.xpose.msra.mxu0 0
      %1507 = vmatpush.bf16.xpose.msra.mxu0 0
      %1508 = vmatpush.bf16.xpose.msra.mxu0 0
      %1509 = vmatpush.bf16.xpose.msra.mxu0 0
      %1510 = vmatpush.bf16.xpose.msra.mxu0 0
      %1511 = vmatpush.bf16.xpose.msra.mxu0 0
      %1512 = vmatpush.bf16.xpose.msra.mxu0 %v1503
      %1513 = vmatmul.bf16.gmra.mxu0 %v1500
      %v1514 = vpop.f32.mrf.mxu0
      %v1515 = vadd.f32 0.0, %v1514
      %v1516 = vpop.f32.mrf.mxu0
      %1517 = vdwg.mxu0
      %v1519 = vsel %vm1061, %v829, 0
      %v1522 = vsel %vm1061, %v941, 0
      %1524 = vmatpush.bf16.xpose.msra.mxu0 0
      %1525 = vmatpush.bf16.xpose.msra.mxu0 0
      %1526 = vmatpush.bf16.xpose.msra.mxu0 0
      %1527 = vmatpush.bf16.xpose.msra.mxu0 0
      %1528 = vmatpush.bf16.xpose.msra.mxu0 0
      %1529 = vmatpush.bf16.xpose.msra.mxu0 0
      %1530 = vmatpush.bf16.xpose.msra.mxu0 0
      %1531 = vmatpush.bf16.xpose.msra.mxu0 %v1522
      %1532 = vmatmul.bf16.gmra.mxu0 %v1519
      %v1533 = vpop.f32.mrf.mxu0
      %v1534 = vadd.f32 0.0, %v1533
      %v1535 = vpop.f32.mrf.mxu0
      %1536 = vdwg.mxu0
      %v1538 = vsel %vm1061, %v830, 0
      %v1541 = vsel %vm1061, %v942, 0
      %1543 = vmatpush.bf16.xpose.msra.mxu0 0
      %1544 = vmatpush.bf16.xpose.msra.mxu0 0
      %1545 = vmatpush.bf16.xpose.msra.mxu0 0
      %1546 = vmatpush.bf16.xpose.msra.mxu0 0
      %1547 = vmatpush.bf16.xpose.msra.mxu0 0
      %1548 = vmatpush.bf16.xpose.msra.mxu0 0
      %1549 = vmatpush.bf16.xpose.msra.mxu0 0
      %1550 = vmatpush.bf16.xpose.msra.mxu0 %v1541
      %1551 = vmatmul.bf16.gmra.mxu0 %v1538
      %v1552 = vpop.f32.mrf.mxu0
      %v1553 = vadd.f32 0.0, %v1552
      %v1554 = vpop.f32.mrf.mxu0
      %1555 = vdwg.mxu0
      %v1557 = vsel %vm1061, %v831, 0
      %v1560 = vsel %vm1061, %v943, 0
      %1562 = vmatpush.bf16.xpose.msra.mxu0 0
      %1563 = vmatpush.bf16.xpose.msra.mxu0 0
      %1564 = vmatpush.bf16.xpose.msra.mxu0 0
      %1565 = vmatpush.bf16.xpose.msra.mxu0 0
      %1566 = vmatpush.bf16.xpose.msra.mxu0 0
      %1567 = vmatpush.bf16.xpose.msra.mxu0 0
      %1568 = vmatpush.bf16.xpose.msra.mxu0 0
      %1569 = vmatpush.bf16.xpose.msra.mxu0 %v1560
      %1570 = vmatmul.bf16.gmra.mxu0 %v1557
      %v1571 = vpop.f32.mrf.mxu0
      %v1572 = vadd.f32 0.0, %v1571
      %v1573 = vpop.f32.mrf.mxu0
      %1574 = vdwg.mxu0
      %v1576 = vsel %vm1061, %v832, 0
      %v1579 = vsel %vm1061, %v944, 0
      %1581 = vmatpush.bf16.xpose.msra.mxu0 0
      %1582 = vmatpush.bf16.xpose.msra.mxu0 0
      %1583 = vmatpush.bf16.xpose.msra.mxu0 0
      %1584 = vmatpush.bf16.xpose.msra.mxu0 0
      %1585 = vmatpush.bf16.xpose.msra.mxu0 0
      %1586 = vmatpush.bf16.xpose.msra.mxu0 0
      %1587 = vmatpush.bf16.xpose.msra.mxu0 0
      %1588 = vmatpush.bf16.xpose.msra.mxu0 %v1579
      %1589 = vmatmul.bf16.gmra.mxu0 %v1576
      %v1590 = vpop.f32.mrf.mxu0
      %v1591 = vadd.f32 0.0, %v1590
      %v1592 = vpop.f32.mrf.mxu0
      %1593 = vdwg.mxu0
      %v1595 = vsel %vm1061, %v833, 0
      %v1598 = vsel %vm1061, %v945, 0
      %1600 = vmatpush.bf16.xpose.msra.mxu0 0
      %1601 = vmatpush.bf16.xpose.msra.mxu0 0
      %1602 = vmatpush.bf16.xpose.msra.mxu0 0
      %1603 = vmatpush.bf16.xpose.msra.mxu0 0
      %1604 = vmatpush.bf16.xpose.msra.mxu0 0
      %1605 = vmatpush.bf16.xpose.msra.mxu0 0
      %1606 = vmatpush.bf16.xpose.msra.mxu0 0
      %1607 = vmatpush.bf16.xpose.msra.mxu0 %v1598
      %1608 = vmatmul.bf16.gmra.mxu0 %v1595
      %v1609 = vpop.f32.mrf.mxu0
      %v1610 = vadd.f32 0.0, %v1609
      %v1611 = vpop.f32.mrf.mxu0
      %1612 = vdwg.mxu0
      %v1614 = vsel %vm1061, %v834, 0
      %v1617 = vsel %vm1061, %v946, 0
      %1619 = vmatpush.bf16.xpose.msra.mxu0 0
      %1620 = vmatpush.bf16.xpose.msra.mxu0 0
      %1621 = vmatpush.bf16.xpose.msra.mxu0 0
      %1622 = vmatpush.bf16.xpose.msra.mxu0 0
      %1623 = vmatpush.bf16.xpose.msra.mxu0 0
      %1624 = vmatpush.bf16.xpose.msra.mxu0 0
      %1625 = vmatpush.bf16.xpose.msra.mxu0 0
      %1626 = vmatpush.bf16.xpose.msra.mxu0 %v1617
      %1627 = vmatmul.bf16.gmra.mxu0 %v1614
      %v1628 = vpop.f32.mrf.mxu0
      %v1629 = vadd.f32 0.0, %v1628
      %v1630 = vpop.f32.mrf.mxu0
      %1631 = vdwg.mxu0
      %v1633 = vsel %vm1061, %v835, 0
      %v1636 = vsel %vm1061, %v947, 0
      %1638 = vmatpush.bf16.xpose.msra.mxu0 0
      %1639 = vmatpush.bf16.xpose.msra.mxu0 0
      %1640 = vmatpush.bf16.xpose.msra.mxu0 0
      %1641 = vmatpush.bf16.xpose.msra.mxu0 0
      %1642 = vmatpush.bf16.xpose.msra.mxu0 0
      %1643 = vmatpush.bf16.xpose.msra.mxu0 0
      %1644 = vmatpush.bf16.xpose.msra.mxu0 0
      %1645 = vmatpush.bf16.xpose.msra.mxu0 %v1636
      %1646 = vmatmul.bf16.gmra.mxu0 %v1633
      %v1647 = vpop.f32.mrf.mxu0
      %v1648 = vadd.f32 0.0, %v1647
      %v1649 = vpop.f32.mrf.mxu0
      %1650 = vdwg.mxu0
      %v1652 = vsel %vm1061, %v836, 0
      %v1655 = vsel %vm1061, %v948, 0
      %1657 = vmatpush.bf16.xpose.msra.mxu0 0
      %1658 = vmatpush.bf16.xpose.msra.mxu0 0
      %1659 = vmatpush.bf16.xpose.msra.mxu0 0
      %1660 = vmatpush.bf16.xpose.msra.mxu0 0
      %1661 = vmatpush.bf16.xpose.msra.mxu0 0
      %1662 = vmatpush.bf16.xpose.msra.mxu0 0
      %1663 = vmatpush.bf16.xpose.msra.mxu0 0
      %1664 = vmatpush.bf16.xpose.msra.mxu0 %v1655
      %1665 = vmatmul.bf16.gmra.mxu0 %v1652
      %v1666 = vpop.f32.mrf.mxu0
      %v1667 = vadd.f32 0.0, %v1666
      %v1668 = vpop.f32.mrf.mxu0
      %1669 = vdwg.mxu0
      %v1670 = vmul.f32 %v1078, 0.25
      %v1671 = vmul.f32 %v1097, 0.25
      %v1672 = vmul.f32 %v1116, 0.25
      %v1673 = vmul.f32 %v1135, 0.25
      %v1674 = vmul.f32 %v1154, 0.25
      %v1675 = vmul.f32 %v1173, 0.25
      %v1676 = vmul.f32 %v1192, 0.25
      %v1677 = vmul.f32 %v1211, 0.25
      %v1678 = vmul.f32 %v1230, 0.25
      %v1679 = vmul.f32 %v1249, 0.25
      %v1680 = vmul.f32 %v1268, 0.25
      %v1681 = vmul.f32 %v1287, 0.25
      %v1682 = vmul.f32 %v1306, 0.25
      %v1683 = vmul.f32 %v1325, 0.25
      %v1684 = vmul.f32 %v1344, 0.25
      %v1685 = vmul.f32 %v1363, 0.25
      %v1686 = vmul.f32 %v1382, 0.25
      %v1687 = vmul.f32 %v1401, 0.25
      %v1688 = vmul.f32 %v1420, 0.25
      %v1689 = vmul.f32 %v1439, 0.25
      %v1690 = vmul.f32 %v1458, 0.25
      %v1691 = vmul.f32 %v1477, 0.25
      %v1692 = vmul.f32 %v1496, 0.25
      %v1693 = vmul.f32 %v1515, 0.25
      %v1694 = vmul.f32 %v1534, 0.25
      %v1695 = vmul.f32 %v1553, 0.25
      %v1696 = vmul.f32 %v1572, 0.25
      %v1697 = vmul.f32 %v1591, 0.25
      %v1698 = vmul.f32 %v1610, 0.25
      %v1699 = vmul.f32 %v1629, 0.25
      %v1700 = vmul.f32 %v1648, 0.25
      %v1701 = vmul.f32 %v1667, 0.25
      %vm1702 = vcmask 64512
      %v1703 = vsel %vm1702, %v1670, -inf
      %1704 = vmax.xlane.f32.xlu0 %v1703
      %v1705 = vpop.xlane.xlu0 %1704
      %v1706 = vsel %vm1702, %v1671, -inf
      %1707 = vmax.xlane.f32.xlu0 %v1706
      %v1708 = vpop.xlane.xlu0 %1707
      %v1709 = vsel %vm1702, %v1672, -inf
      %1710 = vmax.xlane.f32.xlu0 %v1709
      %v1711 = vpop.xlane.xlu0 %1710
      %v1712 = vsel %vm1702, %v1673, -inf
      %1713 = vmax.xlane.f32.xlu0 %v1712
      %v1714 = vpop.xlane.xlu0 %1713
      %v1715 = vsel %vm1702, %v1674, -inf
      %1716 = vmax.xlane.f32.xlu0 %v1715
      %v1717 = vpop.xlane.xlu0 %1716
      %v1718 = vsel %vm1702, %v1675, -inf
      %1719 = vmax.xlane.f32.xlu0 %v1718
      %v1720 = vpop.xlane.xlu0 %1719
      %v1721 = vsel %vm1702, %v1676, -inf
      %1722 = vmax.xlane.f32.xlu0 %v1721
      %v1723 = vpop.xlane.xlu0 %1722
      %v1724 = vsel %vm1702, %v1677, -inf
      %1725 = vmax.xlane.f32.xlu0 %v1724
      %v1726 = vpop.xlane.xlu0 %1725
      %v1727 = vsel %vm1702, %v1678, -inf
      %1728 = vmax.xlane.f32.xlu0 %v1727
      %v1729 = vpop.xlane.xlu0 %1728
      %v1730 = vsel %vm1702, %v1679, -inf
      %1731 = vmax.xlane.f32.xlu0 %v1730
      %v1732 = vpop.xlane.xlu0 %1731
      %v1733 = vsel %vm1702, %v1680, -inf
      %1734 = vmax.xlane.f32.xlu0 %v1733
      %v1735 = vpop.xlane.xlu0 %1734
      %v1736 = vsel %vm1702, %v1681, -inf
      %1737 = vmax.xlane.f32.xlu0 %v1736
      %v1738 = vpop.xlane.xlu0 %1737
      %v1739 = vsel %vm1702, %v1682, -inf
      %1740 = vmax.xlane.f32.xlu0 %v1739
      %v1741 = vpop.xlane.xlu0 %1740
      %v1742 = vsel %vm1702, %v1683, -inf
      %1743 = vmax.xlane.f32.xlu0 %v1742
      %v1744 = vpop.xlane.xlu0 %1743
      %v1745 = vsel %vm1702, %v1684, -inf
      %1746 = vmax.xlane.f32.xlu0 %v1745
      %v1747 = vpop.xlane.xlu0 %1746
      %v1748 = vsel %vm1702, %v1685, -inf
      %1749 = vmax.xlane.f32.xlu0 %v1748
      %v1750 = vpop.xlane.xlu0 %1749
      %v1751 = vsel %vm1702, %v1686, -inf
      %1752 = vmax.xlane.f32.xlu0 %v1751
      %v1753 = vpop.xlane.xlu0 %1752
      %v1754 = vsel %vm1702, %v1687, -inf
      %1755 = vmax.xlane.f32.xlu0 %v1754
      %v1756 = vpop.xlane.xlu0 %1755
      %v1757 = vsel %vm1702, %v1688, -inf
      %1758 = vmax.xlane.f32.xlu0 %v1757
      %v1759 = vpop.xlane.xlu0 %1758
      %v1760 = vsel %vm1702, %v1689, -inf
      %1761 = vmax.xlane.f32.xlu0 %v1760
      %v1762 = vpop.xlane.xlu0 %1761
      %v1763 = vsel %vm1702, %v1690, -inf
      %1764 = vmax.xlane.f32.xlu0 %v1763
      %v1765 = vpop.xlane.xlu0 %1764
      %v1766 = vsel %vm1702, %v1691, -inf
      %1767 = vmax.xlane.f32.xlu0 %v1766
      %v1768 = vpop.xlane.xlu0 %1767
      %v1769 = vsel %vm1702, %v1692, -inf
      %1770 = vmax.xlane.f32.xlu0 %v1769
      %v1771 = vpop.xlane.xlu0 %1770
      %v1772 = vsel %vm1702, %v1693, -inf
      %1773 = vmax.xlane.f32.xlu0 %v1772
      %v1774 = vpop.xlane.xlu0 %1773
      %v1775 = vsel %vm1702, %v1694, -inf
      %1776 = vmax.xlane.f32.xlu0 %v1775
      %v1777 = vpop.xlane.xlu0 %1776
      %v1778 = vsel %vm1702, %v1695, -inf
      %1779 = vmax.xlane.f32.xlu0 %v1778
      %v1780 = vpop.xlane.xlu0 %1779
      %v1781 = vsel %vm1702, %v1696, -inf
      %1782 = vmax.xlane.f32.xlu0 %v1781
      %v1783 = vpop.xlane.xlu0 %1782
      %v1784 = vsel %vm1702, %v1697, -inf
      %1785 = vmax.xlane.f32.xlu0 %v1784
      %v1786 = vpop.xlane.xlu0 %1785
      %v1787 = vsel %vm1702, %v1698, -inf
      %1788 = vmax.xlane.f32.xlu0 %v1787
      %v1789 = vpop.xlane.xlu0 %1788
      %v1790 = vsel %vm1702, %v1699, -inf
      %1791 = vmax.xlane.f32.xlu0 %v1790
      %v1792 = vpop.xlane.xlu0 %1791
      %v1793 = vsel %vm1702, %v1700, -inf
      %1794 = vmax.xlane.f32.xlu0 %v1793
      %v1795 = vpop.xlane.xlu0 %1794
      %v1796 = vsel %vm1702, %v1701, -inf
      %1797 = vmax.xlane.f32.xlu0 %v1796
      %v1798 = vpop.xlane.xlu0 %1797
      %v1799 = vsub.f32 %v1670, %v1705
      %v1800 = vsub.f32 %v1671, %v1708
      %v1801 = vsub.f32 %v1672, %v1711
      %v1802 = vsub.f32 %v1673, %v1714
      %v1803 = vsub.f32 %v1674, %v1717
      %v1804 = vsub.f32 %v1675, %v1720
      %v1805 = vsub.f32 %v1676, %v1723
      %v1806 = vsub.f32 %v1677, %v1726
      %v1807 = vsub.f32 %v1678, %v1729
      %v1808 = vsub.f32 %v1679, %v1732
      %v1809 = vsub.f32 %v1680, %v1735
      %v1810 = vsub.f32 %v1681, %v1738
      %v1811 = vsub.f32 %v1682, %v1741
      %v1812 = vsub.f32 %v1683, %v1744
      %v1813 = vsub.f32 %v1684, %v1747
      %v1814 = vsub.f32 %v1685, %v1750
      %v1815 = vsub.f32 %v1686, %v1753
      %v1816 = vsub.f32 %v1687, %v1756
      %v1817 = vsub.f32 %v1688, %v1759
      %v1818 = vsub.f32 %v1689, %v1762
      %v1819 = vsub.f32 %v1690, %v1765
      %v1820 = vsub.f32 %v1691, %v1768
      %v1821 = vsub.f32 %v1692, %v1771
      %v1822 = vsub.f32 %v1693, %v1774
      %v1823 = vsub.f32 %v1694, %v1777
      %v1824 = vsub.f32 %v1695, %v1780
      %v1825 = vsub.f32 %v1696, %v1783
      %v1826 = vsub.f32 %v1697, %v1786
      %v1827 = vsub.f32 %v1698, %v1789
      %v1828 = vsub.f32 %v1699, %v1792
      %v1829 = vsub.f32 %v1700, %v1795
      %v1830 = vsub.f32 %v1701, %v1798
      %v1831 = vmul.f32 %v1799, 1.442695
      %v1832 = vpow.pop %v1831
      %v1833 = vmul.f32 %v1800, 1.442695
      %v1834 = vpow.pop %v1833
      %v1835 = vmul.f32 %v1801, 1.442695
      %v1836 = vpow.pop %v1835
      %v1837 = vmul.f32 %v1802, 1.442695
      %v1838 = vpow.pop %v1837
      %v1839 = vmul.f32 %v1803, 1.442695
      %v1840 = vpow.pop %v1839
      %v1841 = vmul.f32 %v1804, 1.442695
      %v1842 = vpow.pop %v1841
      %v1843 = vmul.f32 %v1805, 1.442695
      %v1844 = vpow.pop %v1843
      %v1845 = vmul.f32 %v1806, 1.442695
      %v1846 = vpow.pop %v1845
      %v1847 = vmul.f32 %v1807, 1.442695
      %v1848 = vpow.pop %v1847
      %v1849 = vmul.f32 %v1808, 1.442695
      %v1850 = vpow.pop %v1849
      %v1851 = vmul.f32 %v1809, 1.442695
      %v1852 = vpow.pop %v1851
      %v1853 = vmul.f32 %v1810, 1.442695
      %v1854 = vpow.pop %v1853
      %v1855 = vmul.f32 %v1811, 1.442695
      %v1856 = vpow.pop %v1855
      %v1857 = vmul.f32 %v1812, 1.442695
      %v1858 = vpow.pop %v1857
      %v1859 = vmul.f32 %v1813, 1.442695
      %v1860 = vpow.pop %v1859
      %v1861 = vmul.f32 %v1814, 1.442695
      %v1862 = vpow.pop %v1861
      %v1863 = vmul.f32 %v1815, 1.442695
      %v1864 = vpow.pop %v1863
      %v1865 = vmul.f32 %v1816, 1.442695
      %v1866 = vpow.pop %v1865
      %v1867 = vmul.f32 %v1817, 1.442695
      %v1868 = vpow.pop %v1867
      %v1869 = vmul.f32 %v1818, 1.442695
      %v1870 = vpow.pop %v1869
      %v1871 = vmul.f32 %v1819, 1.442695
      %v1872 = vpow.pop %v1871
      %v1873 = vmul.f32 %v1820, 1.442695
      %v1874 = vpow.pop %v1873
      %v1875 = vmul.f32 %v1821, 1.442695
      %v1876 = vpow.pop %v1875
      %v1877 = vmul.f32 %v1822, 1.442695
      %v1878 = vpow.pop %v1877
      %v1879 = vmul.f32 %v1823, 1.442695
      %v1880 = vpow.pop %v1879
      %v1881 = vmul.f32 %v1824, 1.442695
      %v1882 = vpow.pop %v1881
      %v1883 = vmul.f32 %v1825, 1.442695
      %v1884 = vpow.pop %v1883
      %v1885 = vmul.f32 %v1826, 1.442695
      %v1886 = vpow.pop %v1885
      %v1887 = vmul.f32 %v1827, 1.442695
      %v1888 = vpow.pop %v1887
      %v1889 = vmul.f32 %v1828, 1.442695
      %v1890 = vpow.pop %v1889
      %v1891 = vmul.f32 %v1829, 1.442695
      %v1892 = vpow.pop %v1891
      %v1893 = vmul.f32 %v1830, 1.442695
      %v1894 = vpow.pop %v1893
      %v1895 = vsel %vm1702, %v1832, 0.0
      %1896 = vadd.xlane.f32.xlu0 %v1895
      %v1897 = vpop.xlane.xlu0 %1896
      %v1898 = vsel %vm1702, %v1834, 0.0
      %1899 = vadd.xlane.f32.xlu0 %v1898
      %v1900 = vpop.xlane.xlu0 %1899
      %v1901 = vsel %vm1702, %v1836, 0.0
      %1902 = vadd.xlane.f32.xlu0 %v1901
      %v1903 = vpop.xlane.xlu0 %1902
      %v1904 = vsel %vm1702, %v1838, 0.0
      %1905 = vadd.xlane.f32.xlu0 %v1904
      %v1906 = vpop.xlane.xlu0 %1905
      %v1907 = vsel %vm1702, %v1840, 0.0
      %1908 = vadd.xlane.f32.xlu0 %v1907
      %v1909 = vpop.xlane.xlu0 %1908
      %v1910 = vsel %vm1702, %v1842, 0.0
      %1911 = vadd.xlane.f32.xlu0 %v1910
      %v1912 = vpop.xlane.xlu0 %1911
      %v1913 = vsel %vm1702, %v1844, 0.0
      %1914 = vadd.xlane.f32.xlu0 %v1913
      %v1915 = vpop.xlane.xlu0 %1914
      %v1916 = vsel %vm1702, %v1846, 0.0
      %1917 = vadd.xlane.f32.xlu0 %v1916
      %v1918 = vpop.xlane.xlu0 %1917
      %v1919 = vsel %vm1702, %v1848, 0.0
      %1920 = vadd.xlane.f32.xlu0 %v1919
      %v1921 = vpop.xlane.xlu0 %1920
      %v1922 = vsel %vm1702, %v1850, 0.0
      %1923 = vadd.xlane.f32.xlu0 %v1922
      %v1924 = vpop.xlane.xlu0 %1923
      %v1925 = vsel %vm1702, %v1852, 0.0
      %1926 = vadd.xlane.f32.xlu0 %v1925
      %v1927 = vpop.xlane.xlu0 %1926
      %v1928 = vsel %vm1702, %v1854, 0.0
      %1929 = vadd.xlane.f32.xlu0 %v1928
      %v1930 = vpop.xlane.xlu0 %1929
      %v1931 = vsel %vm1702, %v1856, 0.0
      %1932 = vadd.xlane.f32.xlu0 %v1931
      %v1933 = vpop.xlane.xlu0 %1932
      %v1934 = vsel %vm1702, %v1858, 0.0
      %1935 = vadd.xlane.f32.xlu0 %v1934
      %v1936 = vpop.xlane.xlu0 %1935
      %v1937 = vsel %vm1702, %v1860, 0.0
      %1938 = vadd.xlane.f32.xlu0 %v1937
      %v1939 = vpop.xlane.xlu0 %1938
      %v1940 = vsel %vm1702, %v1862, 0.0
      %1941 = vadd.xlane.f32.xlu0 %v1940
      %v1942 = vpop.xlane.xlu0 %1941
      %v1943 = vsel %vm1702, %v1864, 0.0
      %1944 = vadd.xlane.f32.xlu0 %v1943
      %v1945 = vpop.xlane.xlu0 %1944
      %v1946 = vsel %vm1702, %v1866, 0.0
      %1947 = vadd.xlane.f32.xlu0 %v1946
      %v1948 = vpop.xlane.xlu0 %1947
      %v1949 = vsel %vm1702, %v1868, 0.0
      %1950 = vadd.xlane.f32.xlu0 %v1949
      %v1951 = vpop.xlane.xlu0 %1950
      %v1952 = vsel %vm1702, %v1870, 0.0
      %1953 = vadd.xlane.f32.xlu0 %v1952
      %v1954 = vpop.xlane.xlu0 %1953
      %v1955 = vsel %vm1702, %v1872, 0.0
      %1956 = vadd.xlane.f32.xlu0 %v1955
      %v1957 = vpop.xlane.xlu0 %1956
      %v1958 = vsel %vm1702, %v1874, 0.0
      %1959 = vadd.xlane.f32.xlu0 %v1958
      %v1960 = vpop.xlane.xlu0 %1959
      %v1961 = vsel %vm1702, %v1876, 0.0
      %1962 = vadd.xlane.f32.xlu0 %v1961
      %v1963 = vpop.xlane.xlu0 %1962
      %v1964 = vsel %vm1702, %v1878, 0.0
      %1965 = vadd.xlane.f32.xlu0 %v1964
      %v1966 = vpop.xlane.xlu0 %1965
      %v1967 = vsel %vm1702, %v1880, 0.0
      %1968 = vadd.xlane.f32.xlu0 %v1967
      %v1969 = vpop.xlane.xlu0 %1968
      %v1970 = vsel %vm1702, %v1882, 0.0
      %1971 = vadd.xlane.f32.xlu0 %v1970
      %v1972 = vpop.xlane.xlu0 %1971
      %v1973 = vsel %vm1702, %v1884, 0.0
      %1974 = vadd.xlane.f32.xlu0 %v1973
      %v1975 = vpop.xlane.xlu0 %1974
      %v1976 = vsel %vm1702, %v1886, 0.0
      %1977 = vadd.xlane.f32.xlu0 %v1976
      %v1978 = vpop.xlane.xlu0 %1977
      %v1979 = vsel %vm1702, %v1888, 0.0
      %1980 = vadd.xlane.f32.xlu0 %v1979
      %v1981 = vpop.xlane.xlu0 %1980
      %v1982 = vsel %vm1702, %v1890, 0.0
      %1983 = vadd.xlane.f32.xlu0 %v1982
      %v1984 = vpop.xlane.xlu0 %1983
      %v1985 = vsel %vm1702, %v1892, 0.0
      %1986 = vadd.xlane.f32.xlu0 %v1985
      %v1987 = vpop.xlane.xlu0 %1986
      %v1988 = vsel %vm1702, %v1894, 0.0
      %1989 = vadd.xlane.f32.xlu0 %v1988
      %v1990 = vpop.xlane.xlu0 %1989
      %v1991 = vrcp.pop %v1897
      %v1992 = vrcp.pop %v1900
      %v1993 = vrcp.pop %v1903
      %v1994 = vrcp.pop %v1906
      %v1995 = vrcp.pop %v1909
      %v1996 = vrcp.pop %v1912
      %v1997 = vrcp.pop %v1915
      %v1998 = vrcp.pop %v1918
      %v1999 = vrcp.pop %v1921
      %v2000 = vrcp.pop %v1924
      %v2001 = vrcp.pop %v1927
      %v2002 = vrcp.pop %v1930
      %v2003 = vrcp.pop %v1933
      %v2004 = vrcp.pop %v1936
      %v2005 = vrcp.pop %v1939
      %v2006 = vrcp.pop %v1942
      %v2007 = vrcp.pop %v1945
      %v2008 = vrcp.pop %v1948
      %v2009 = vrcp.pop %v1951
      %v2010 = vrcp.pop %v1954
      %v2011 = vrcp.pop %v1957
      %v2012 = vrcp.pop %v1960
      %v2013 = vrcp.pop %v1963
      %v2014 = vrcp.pop %v1966
      %v2015 = vrcp.pop %v1969
      %v2016 = vrcp.pop %v1972
      %v2017 = vrcp.pop %v1975
      %v2018 = vrcp.pop %v1978
      %v2019 = vrcp.pop %v1981
      %v2020 = vrcp.pop %v1984
      %v2021 = vrcp.pop %v1987
      %v2022 = vrcp.pop %v1990
      %v2023 = vmul.f32 %v1832, %v1991
      %v2024 = vmul.f32 %v1834, %v1992
      %v2025 = vmul.f32 %v1836, %v1993
      %v2026 = vmul.f32 %v1838, %v1994
      %v2027 = vmul.f32 %v1840, %v1995
      %v2028 = vmul.f32 %v1842, %v1996
      %v2029 = vmul.f32 %v1844, %v1997
      %v2030 = vmul.f32 %v1846, %v1998
      %v2031 = vmul.f32 %v1848, %v1999
      %v2032 = vmul.f32 %v1850, %v2000
      %v2033 = vmul.f32 %v1852, %v2001
      %v2034 = vmul.f32 %v1854, %v2002
      %v2035 = vmul.f32 %v1856, %v2003
      %v2036 = vmul.f32 %v1858, %v2004
      %v2037 = vmul.f32 %v1860, %v2005
      %v2038 = vmul.f32 %v1862, %v2006
      %v2039 = vmul.f32 %v1864, %v2007
      %v2040 = vmul.f32 %v1866, %v2008
      %v2041 = vmul.f32 %v1868, %v2009
      %v2042 = vmul.f32 %v1870, %v2010
      %v2043 = vmul.f32 %v1872, %v2011
      %v2044 = vmul.f32 %v1874, %v2012
      %v2045 = vmul.f32 %v1876, %v2013
      %v2046 = vmul.f32 %v1878, %v2014
      %v2047 = vmul.f32 %v1880, %v2015
      %v2048 = vmul.f32 %v1882, %v2016
      %v2049 = vmul.f32 %v1884, %v2017
      %v2050 = vmul.f32 %v1886, %v2018
      %v2051 = vmul.f32 %v1888, %v2019
      %v2052 = vmul.f32 %v1890, %v2020
      %v2053 = vmul.f32 %v1892, %v2021
      %v2054 = vmul.f32 %v1894, %v2022
      %v2055 = vpack.c.bf16 %v2023, %v2023
      %v2056 = vpack.c.bf16 %v2024, %v2024
      %v2057 = vpack.c.bf16 %v2025, %v2025
      %v2058 = vpack.c.bf16 %v2026, %v2026
      %v2059 = vpack.c.bf16 %v2027, %v2027
      %v2060 = vpack.c.bf16 %v2028, %v2028
      %v2061 = vpack.c.bf16 %v2029, %v2029
      %v2062 = vpack.c.bf16 %v2030, %v2030
      %v2063 = vpack.c.bf16 %v2031, %v2031
      %v2064 = vpack.c.bf16 %v2032, %v2032
      %v2065 = vpack.c.bf16 %v2033, %v2033
      %v2066 = vpack.c.bf16 %v2034, %v2034
      %v2067 = vpack.c.bf16 %v2035, %v2035
      %v2068 = vpack.c.bf16 %v2036, %v2036
      %v2069 = vpack.c.bf16 %v2037, %v2037
      %v2070 = vpack.c.bf16 %v2038, %v2038
      %v2071 = vpack.c.bf16 %v2039, %v2039
      %v2072 = vpack.c.bf16 %v2040, %v2040
      %v2073 = vpack.c.bf16 %v2041, %v2041
      %v2074 = vpack.c.bf16 %v2042, %v2042
      %v2075 = vpack.c.bf16 %v2043, %v2043
      %v2076 = vpack.c.bf16 %v2044, %v2044
      %v2077 = vpack.c.bf16 %v2045, %v2045
      %v2078 = vpack.c.bf16 %v2046, %v2046
      %v2079 = vpack.c.bf16 %v2047, %v2047
      %v2080 = vpack.c.bf16 %v2048, %v2048
      %v2081 = vpack.c.bf16 %v2049, %v2049
      %v2082 = vpack.c.bf16 %v2050, %v2050
      %v2083 = vpack.c.bf16 %v2051, %v2051
      %v2084 = vpack.c.bf16 %v2052, %v2052
      %v2085 = vpack.c.bf16 %v2053, %v2053
      %v2086 = vpack.c.bf16 %v2054, %v2054
      %v2088 = vsel %vm1702, %v2055, 0
      %vm2090 = vcmask 1043456
      %v2092 = vsel %vm2090, %v1029, 0
      %2094 = vmatpush.bf16.msra.mxu0 0
      %2095 = vmatpush.bf16.msra.mxu0 0
      %2096 = vmatpush.bf16.msra.mxu0 0
      %2097 = vmatpush.bf16.msra.mxu0 0
      %2098 = vmatpush.bf16.msra.mxu0 0
      %2099 = vmatpush.bf16.msra.mxu0 0
      %2100 = vmatpush.bf16.msra.mxu0 0
      %2101 = vmatpush.bf16.msra.mxu0 %v2092
      %2102 = vmatmul.bf16.gmra.mxu0 %v2088
      %v2103 = vpop.f32.mrf.mxu0
      %v2104 = vadd.f32 0.0, %v2103
      %v2105 = vpop.f32.mrf.mxu0
      %2106 = vdwg.mxu0
      %v2108 = vsel %vm1702, %v2056, 0
      %v2111 = vsel %vm2090, %v1030, 0
      %2113 = vmatpush.bf16.msra.mxu0 0
      %2114 = vmatpush.bf16.msra.mxu0 0
      %2115 = vmatpush.bf16.msra.mxu0 0
      %2116 = vmatpush.bf16.msra.mxu0 0
      %2117 = vmatpush.bf16.msra.mxu0 0
      %2118 = vmatpush.bf16.msra.mxu0 0
      %2119 = vmatpush.bf16.msra.mxu0 0
      %2120 = vmatpush.bf16.msra.mxu0 %v2111
      %2121 = vmatmul.bf16.gmra.mxu0 %v2108
      %v2122 = vpop.f32.mrf.mxu0
      %v2123 = vadd.f32 0.0, %v2122
      %v2124 = vpop.f32.mrf.mxu0
      %2125 = vdwg.mxu0
      %v2127 = vsel %vm1702, %v2057, 0
      %v2130 = vsel %vm2090, %v1031, 0
      %2132 = vmatpush.bf16.msra.mxu0 0
      %2133 = vmatpush.bf16.msra.mxu0 0
      %2134 = vmatpush.bf16.msra.mxu0 0
      %2135 = vmatpush.bf16.msra.mxu0 0
      %2136 = vmatpush.bf16.msra.mxu0 0
      %2137 = vmatpush.bf16.msra.mxu0 0
      %2138 = vmatpush.bf16.msra.mxu0 0
      %2139 = vmatpush.bf16.msra.mxu0 %v2130
      %2140 = vmatmul.bf16.gmra.mxu0 %v2127
      %v2141 = vpop.f32.mrf.mxu0
      %v2142 = vadd.f32 0.0, %v2141
      %v2143 = vpop.f32.mrf.mxu0
      %2144 = vdwg.mxu0
      %v2146 = vsel %vm1702, %v2058, 0
      %v2149 = vsel %vm2090, %v1032, 0
      %2151 = vmatpush.bf16.msra.mxu0 0
      %2152 = vmatpush.bf16.msra.mxu0 0
      %2153 = vmatpush.bf16.msra.mxu0 0
      %2154 = vmatpush.bf16.msra.mxu0 0
      %2155 = vmatpush.bf16.msra.mxu0 0
      %2156 = vmatpush.bf16.msra.mxu0 0
      %2157 = vmatpush.bf16.msra.mxu0 0
      %2158 = vmatpush.bf16.msra.mxu0 %v2149
      %2159 = vmatmul.bf16.gmra.mxu0 %v2146
      %v2160 = vpop.f32.mrf.mxu0
      %v2161 = vadd.f32 0.0, %v2160
      %v2162 = vpop.f32.mrf.mxu0
      %2163 = vdwg.mxu0
      %v2165 = vsel %vm1702, %v2059, 0
      %v2168 = vsel %vm2090, %v1033, 0
      %2170 = vmatpush.bf16.msra.mxu0 0
      %2171 = vmatpush.bf16.msra.mxu0 0
      %2172 = vmatpush.bf16.msra.mxu0 0
      %2173 = vmatpush.bf16.msra.mxu0 0
      %2174 = vmatpush.bf16.msra.mxu0 0
      %2175 = vmatpush.bf16.msra.mxu0 0
      %2176 = vmatpush.bf16.msra.mxu0 0
      %2177 = vmatpush.bf16.msra.mxu0 %v2168
      %2178 = vmatmul.bf16.gmra.mxu0 %v2165
      %v2179 = vpop.f32.mrf.mxu0
      %v2180 = vadd.f32 0.0, %v2179
      %v2181 = vpop.f32.mrf.mxu0
      %2182 = vdwg.mxu0
      %v2184 = vsel %vm1702, %v2060, 0
      %v2187 = vsel %vm2090, %v1034, 0
      %2189 = vmatpush.bf16.msra.mxu0 0
      %2190 = vmatpush.bf16.msra.mxu0 0
      %2191 = vmatpush.bf16.msra.mxu0 0
      %2192 = vmatpush.bf16.msra.mxu0 0
      %2193 = vmatpush.bf16.msra.mxu0 0
      %2194 = vmatpush.bf16.msra.mxu0 0
      %2195 = vmatpush.bf16.msra.mxu0 0
      %2196 = vmatpush.bf16.msra.mxu0 %v2187
      %2197 = vmatmul.bf16.gmra.mxu0 %v2184
      %v2198 = vpop.f32.mrf.mxu0
      %v2199 = vadd.f32 0.0, %v2198
      %v2200 = vpop.f32.mrf.mxu0
      %2201 = vdwg.mxu0
      %v2203 = vsel %vm1702, %v2061, 0
      %v2206 = vsel %vm2090, %v1035, 0
      %2208 = vmatpush.bf16.msra.mxu0 0
      %2209 = vmatpush.bf16.msra.mxu0 0
      %2210 = vmatpush.bf16.msra.mxu0 0
      %2211 = vmatpush.bf16.msra.mxu0 0
      %2212 = vmatpush.bf16.msra.mxu0 0
      %2213 = vmatpush.bf16.msra.mxu0 0
      %2214 = vmatpush.bf16.msra.mxu0 0
      %2215 = vmatpush.bf16.msra.mxu0 %v2206
      %2216 = vmatmul.bf16.gmra.mxu0 %v2203
      %v2217 = vpop.f32.mrf.mxu0
      %v2218 = vadd.f32 0.0, %v2217
      %v2219 = vpop.f32.mrf.mxu0
      %2220 = vdwg.mxu0
      %v2222 = vsel %vm1702, %v2062, 0
      %v2225 = vsel %vm2090, %v1036, 0
      %2227 = vmatpush.bf16.msra.mxu0 0
      %2228 = vmatpush.bf16.msra.mxu0 0
      %2229 = vmatpush.bf16.msra.mxu0 0
      %2230 = vmatpush.bf16.msra.mxu0 0
      %2231 = vmatpush.bf16.msra.mxu0 0
      %2232 = vmatpush.bf16.msra.mxu0 0
      %2233 = vmatpush.bf16.msra.mxu0 0
      %2234 = vmatpush.bf16.msra.mxu0 %v2225
      %2235 = vmatmul.bf16.gmra.mxu0 %v2222
      %v2236 = vpop.f32.mrf.mxu0
      %v2237 = vadd.f32 0.0, %v2236
      %v2238 = vpop.f32.mrf.mxu0
      %2239 = vdwg.mxu0
      %v2241 = vsel %vm1702, %v2063, 0
      %v2244 = vsel %vm2090, %v1037, 0
      %2246 = vmatpush.bf16.msra.mxu0 0
      %2247 = vmatpush.bf16.msra.mxu0 0
      %2248 = vmatpush.bf16.msra.mxu0 0
      %2249 = vmatpush.bf16.msra.mxu0 0
      %2250 = vmatpush.bf16.msra.mxu0 0
      %2251 = vmatpush.bf16.msra.mxu0 0
      %2252 = vmatpush.bf16.msra.mxu0 0
      %2253 = vmatpush.bf16.msra.mxu0 %v2244
      %2254 = vmatmul.bf16.gmra.mxu0 %v2241
      %v2255 = vpop.f32.mrf.mxu0
      %v2256 = vadd.f32 0.0, %v2255
      %v2257 = vpop.f32.mrf.mxu0
      %2258 = vdwg.mxu0
      %v2260 = vsel %vm1702, %v2064, 0
      %v2263 = vsel %vm2090, %v1038, 0
      %2265 = vmatpush.bf16.msra.mxu0 0
      %2266 = vmatpush.bf16.msra.mxu0 0
      %2267 = vmatpush.bf16.msra.mxu0 0
      %2268 = vmatpush.bf16.msra.mxu0 0
      %2269 = vmatpush.bf16.msra.mxu0 0
      %2270 = vmatpush.bf16.msra.mxu0 0
      %2271 = vmatpush.bf16.msra.mxu0 0
      %2272 = vmatpush.bf16.msra.mxu0 %v2263
      %2273 = vmatmul.bf16.gmra.mxu0 %v2260
      %v2274 = vpop.f32.mrf.mxu0
      %v2275 = vadd.f32 0.0, %v2274
      %v2276 = vpop.f32.mrf.mxu0
      %2277 = vdwg.mxu0
      %v2279 = vsel %vm1702, %v2065, 0
      %v2282 = vsel %vm2090, %v1039, 0
      %2284 = vmatpush.bf16.msra.mxu0 0
      %2285 = vmatpush.bf16.msra.mxu0 0
      %2286 = vmatpush.bf16.msra.mxu0 0
      %2287 = vmatpush.bf16.msra.mxu0 0
      %2288 = vmatpush.bf16.msra.mxu0 0
      %2289 = vmatpush.bf16.msra.mxu0 0
      %2290 = vmatpush.bf16.msra.mxu0 0
      %2291 = vmatpush.bf16.msra.mxu0 %v2282
      %2292 = vmatmul.bf16.gmra.mxu0 %v2279
      %v2293 = vpop.f32.mrf.mxu0
      %v2294 = vadd.f32 0.0, %v2293
      %v2295 = vpop.f32.mrf.mxu0
      %2296 = vdwg.mxu0
      %v2298 = vsel %vm1702, %v2066, 0
      %v2301 = vsel %vm2090, %v1040, 0
      %2303 = vmatpush.bf16.msra.mxu0 0
      %2304 = vmatpush.bf16.msra.mxu0 0
      %2305 = vmatpush.bf16.msra.mxu0 0
      %2306 = vmatpush.bf16.msra.mxu0 0
      %2307 = vmatpush.bf16.msra.mxu0 0
      %2308 = vmatpush.bf16.msra.mxu0 0
      %2309 = vmatpush.bf16.msra.mxu0 0
      %2310 = vmatpush.bf16.msra.mxu0 %v2301
      %2311 = vmatmul.bf16.gmra.mxu0 %v2298
      %v2312 = vpop.f32.mrf.mxu0
      %v2313 = vadd.f32 0.0, %v2312
      %v2314 = vpop.f32.mrf.mxu0
      %2315 = vdwg.mxu0
      %v2317 = vsel %vm1702, %v2067, 0
      %v2320 = vsel %vm2090, %v1041, 0
      %2322 = vmatpush.bf16.msra.mxu0 0
      %2323 = vmatpush.bf16.msra.mxu0 0
      %2324 = vmatpush.bf16.msra.mxu0 0
      %2325 = vmatpush.bf16.msra.mxu0 0
      %2326 = vmatpush.bf16.msra.mxu0 0
      %2327 = vmatpush.bf16.msra.mxu0 0
      %2328 = vmatpush.bf16.msra.mxu0 0
      %2329 = vmatpush.bf16.msra.mxu0 %v2320
      %2330 = vmatmul.bf16.gmra.mxu0 %v2317
      %v2331 = vpop.f32.mrf.mxu0
      %v2332 = vadd.f32 0.0, %v2331
      %v2333 = vpop.f32.mrf.mxu0
      %2334 = vdwg.mxu0
      %v2336 = vsel %vm1702, %v2068, 0
      %v2339 = vsel %vm2090, %v1042, 0
      %2341 = vmatpush.bf16.msra.mxu0 0
      %2342 = vmatpush.bf16.msra.mxu0 0
      %2343 = vmatpush.bf16.msra.mxu0 0
      %2344 = vmatpush.bf16.msra.mxu0 0
      %2345 = vmatpush.bf16.msra.mxu0 0
      %2346 = vmatpush.bf16.msra.mxu0 0
      %2347 = vmatpush.bf16.msra.mxu0 0
      %2348 = vmatpush.bf16.msra.mxu0 %v2339
      %2349 = vmatmul.bf16.gmra.mxu0 %v2336
      %v2350 = vpop.f32.mrf.mxu0
      %v2351 = vadd.f32 0.0, %v2350
      %v2352 = vpop.f32.mrf.mxu0
      %2353 = vdwg.mxu0
      %v2355 = vsel %vm1702, %v2069, 0
      %v2358 = vsel %vm2090, %v1043, 0
      %2360 = vmatpush.bf16.msra.mxu0 0
      %2361 = vmatpush.bf16.msra.mxu0 0
      %2362 = vmatpush.bf16.msra.mxu0 0
      %2363 = vmatpush.bf16.msra.mxu0 0
      %2364 = vmatpush.bf16.msra.mxu0 0
      %2365 = vmatpush.bf16.msra.mxu0 0
      %2366 = vmatpush.bf16.msra.mxu0 0
      %2367 = vmatpush.bf16.msra.mxu0 %v2358
      %2368 = vmatmul.bf16.gmra.mxu0 %v2355
      %v2369 = vpop.f32.mrf.mxu0
      %v2370 = vadd.f32 0.0, %v2369
      %v2371 = vpop.f32.mrf.mxu0
      %2372 = vdwg.mxu0
      %v2374 = vsel %vm1702, %v2070, 0
      %v2377 = vsel %vm2090, %v1044, 0
      %2379 = vmatpush.bf16.msra.mxu0 0
      %2380 = vmatpush.bf16.msra.mxu0 0
      %2381 = vmatpush.bf16.msra.mxu0 0
      %2382 = vmatpush.bf16.msra.mxu0 0
      %2383 = vmatpush.bf16.msra.mxu0 0
      %2384 = vmatpush.bf16.msra.mxu0 0
      %2385 = vmatpush.bf16.msra.mxu0 0
      %2386 = vmatpush.bf16.msra.mxu0 %v2377
      %2387 = vmatmul.bf16.gmra.mxu0 %v2374
      %v2388 = vpop.f32.mrf.mxu0
      %v2389 = vadd.f32 0.0, %v2388
      %v2390 = vpop.f32.mrf.mxu0
      %2391 = vdwg.mxu0
      %v2393 = vsel %vm1702, %v2071, 0
      %v2396 = vsel %vm2090, %v1045, 0
      %2398 = vmatpush.bf16.msra.mxu0 0
      %2399 = vmatpush.bf16.msra.mxu0 0
      %2400 = vmatpush.bf16.msra.mxu0 0
      %2401 = vmatpush.bf16.msra.mxu0 0
      %2402 = vmatpush.bf16.msra.mxu0 0
      %2403 = vmatpush.bf16.msra.mxu0 0
      %2404 = vmatpush.bf16.msra.mxu0 0
      %2405 = vmatpush.bf16.msra.mxu0 %v2396
      %2406 = vmatmul.bf16.gmra.mxu0 %v2393
      %v2407 = vpop.f32.mrf.mxu0
      %v2408 = vadd.f32 0.0, %v2407
      %v2409 = vpop.f32.mrf.mxu0
      %2410 = vdwg.mxu0
      %v2412 = vsel %vm1702, %v2072, 0
      %v2415 = vsel %vm2090, %v1046, 0
      %2417 = vmatpush.bf16.msra.mxu0 0
      %2418 = vmatpush.bf16.msra.mxu0 0
      %2419 = vmatpush.bf16.msra.mxu0 0
      %2420 = vmatpush.bf16.msra.mxu0 0
      %2421 = vmatpush.bf16.msra.mxu0 0
      %2422 = vmatpush.bf16.msra.mxu0 0
      %2423 = vmatpush.bf16.msra.mxu0 0
      %2424 = vmatpush.bf16.msra.mxu0 %v2415
      %2425 = vmatmul.bf16.gmra.mxu0 %v2412
      %v2426 = vpop.f32.mrf.mxu0
      %v2427 = vadd.f32 0.0, %v2426
      %v2428 = vpop.f32.mrf.mxu0
      %2429 = vdwg.mxu0
      %v2431 = vsel %vm1702, %v2073, 0
      %v2434 = vsel %vm2090, %v1047, 0
      %2436 = vmatpush.bf16.msra.mxu0 0
      %2437 = vmatpush.bf16.msra.mxu0 0
      %2438 = vmatpush.bf16.msra.mxu0 0
      %2439 = vmatpush.bf16.msra.mxu0 0
      %2440 = vmatpush.bf16.msra.mxu0 0
      %2441 = vmatpush.bf16.msra.mxu0 0
      %2442 = vmatpush.bf16.msra.mxu0 0
      %2443 = vmatpush.bf16.msra.mxu0 %v2434
      %2444 = vmatmul.bf16.gmra.mxu0 %v2431
      %v2445 = vpop.f32.mrf.mxu0
      %v2446 = vadd.f32 0.0, %v2445
      %v2447 = vpop.f32.mrf.mxu0
      %2448 = vdwg.mxu0
      %v2450 = vsel %vm1702, %v2074, 0
      %v2453 = vsel %vm2090, %v1048, 0
      %2455 = vmatpush.bf16.msra.mxu0 0
      %2456 = vmatpush.bf16.msra.mxu0 0
      %2457 = vmatpush.bf16.msra.mxu0 0
      %2458 = vmatpush.bf16.msra.mxu0 0
      %2459 = vmatpush.bf16.msra.mxu0 0
      %2460 = vmatpush.bf16.msra.mxu0 0
      %2461 = vmatpush.bf16.msra.mxu0 0
      %2462 = vmatpush.bf16.msra.mxu0 %v2453
      %2463 = vmatmul.bf16.gmra.mxu0 %v2450
      %v2464 = vpop.f32.mrf.mxu0
      %v2465 = vadd.f32 0.0, %v2464
      %v2466 = vpop.f32.mrf.mxu0
      %2467 = vdwg.mxu0
      %v2469 = vsel %vm1702, %v2075, 0
      %v2472 = vsel %vm2090, %v1049, 0
      %2474 = vmatpush.bf16.msra.mxu0 0
      %2475 = vmatpush.bf16.msra.mxu0 0
      %2476 = vmatpush.bf16.msra.mxu0 0
      %2477 = vmatpush.bf16.msra.mxu0 0
      %2478 = vmatpush.bf16.msra.mxu0 0
      %2479 = vmatpush.bf16.msra.mxu0 0
      %2480 = vmatpush.bf16.msra.mxu0 0
      %2481 = vmatpush.bf16.msra.mxu0 %v2472
      %2482 = vmatmul.bf16.gmra.mxu0 %v2469
      %v2483 = vpop.f32.mrf.mxu0
      %v2484 = vadd.f32 0.0, %v2483
      %v2485 = vpop.f32.mrf.mxu0
      %2486 = vdwg.mxu0
      %v2488 = vsel %vm1702, %v2076, 0
      %v2491 = vsel %vm2090, %v1050, 0
      %2493 = vmatpush.bf16.msra.mxu0 0
      %2494 = vmatpush.bf16.msra.mxu0 0
      %2495 = vmatpush.bf16.msra.mxu0 0
      %2496 = vmatpush.bf16.msra.mxu0 0
      %2497 = vmatpush.bf16.msra.mxu0 0
      %2498 = vmatpush.bf16.msra.mxu0 0
      %2499 = vmatpush.bf16.msra.mxu0 0
      %2500 = vmatpush.bf16.msra.mxu0 %v2491
      %2501 = vmatmul.bf16.gmra.mxu0 %v2488
      %v2502 = vpop.f32.mrf.mxu0
      %v2503 = vadd.f32 0.0, %v2502
      %v2504 = vpop.f32.mrf.mxu0
      %2505 = vdwg.mxu0
      %v2507 = vsel %vm1702, %v2077, 0
      %v2510 = vsel %vm2090, %v1051, 0
      %2512 = vmatpush.bf16.msra.mxu0 0
      %2513 = vmatpush.bf16.msra.mxu0 0
      %2514 = vmatpush.bf16.msra.mxu0 0
      %2515 = vmatpush.bf16.msra.mxu0 0
      %2516 = vmatpush.bf16.msra.mxu0 0
      %2517 = vmatpush.bf16.msra.mxu0 0
      %2518 = vmatpush.bf16.msra.mxu0 0
      %2519 = vmatpush.bf16.msra.mxu0 %v2510
      %2520 = vmatmul.bf16.gmra.mxu0 %v2507
      %v2521 = vpop.f32.mrf.mxu0
      %v2522 = vadd.f32 0.0, %v2521
      %v2523 = vpop.f32.mrf.mxu0
      %2524 = vdwg.mxu0
      %v2526 = vsel %vm1702, %v2078, 0
      %v2529 = vsel %vm2090, %v1052, 0
      %2531 = vmatpush.bf16.msra.mxu0 0
      %2532 = vmatpush.bf16.msra.mxu0 0
      %2533 = vmatpush.bf16.msra.mxu0 0
      %2534 = vmatpush.bf16.msra.mxu0 0
      %2535 = vmatpush.bf16.msra.mxu0 0
      %2536 = vmatpush.bf16.msra.mxu0 0
      %2537 = vmatpush.bf16.msra.mxu0 0
      %2538 = vmatpush.bf16.msra.mxu0 %v2529
      %2539 = vmatmul.bf16.gmra.mxu0 %v2526
      %v2540 = vpop.f32.mrf.mxu0
      %v2541 = vadd.f32 0.0, %v2540
      %v2542 = vpop.f32.mrf.mxu0
      %2543 = vdwg.mxu0
      %v2545 = vsel %vm1702, %v2079, 0
      %v2548 = vsel %vm2090, %v1053, 0
      %2550 = vmatpush.bf16.msra.mxu0 0
      %2551 = vmatpush.bf16.msra.mxu0 0
      %2552 = vmatpush.bf16.msra.mxu0 0
      %2553 = vmatpush.bf16.msra.mxu0 0
      %2554 = vmatpush.bf16.msra.mxu0 0
      %2555 = vmatpush.bf16.msra.mxu0 0
      %2556 = vmatpush.bf16.msra.mxu0 0
      %2557 = vmatpush.bf16.msra.mxu0 %v2548
      %2558 = vmatmul.bf16.gmra.mxu0 %v2545
      %v2559 = vpop.f32.mrf.mxu0
      %v2560 = vadd.f32 0.0, %v2559
      %v2561 = vpop.f32.mrf.mxu0
      %2562 = vdwg.mxu0
      %v2564 = vsel %vm1702, %v2080, 0
      %v2567 = vsel %vm2090, %v1054, 0
      %2569 = vmatpush.bf16.msra.mxu0 0
      %2570 = vmatpush.bf16.msra.mxu0 0
      %2571 = vmatpush.bf16.msra.mxu0 0
      %2572 = vmatpush.bf16.msra.mxu0 0
      %2573 = vmatpush.bf16.msra.mxu0 0
      %2574 = vmatpush.bf16.msra.mxu0 0
      %2575 = vmatpush.bf16.msra.mxu0 0
      %2576 = vmatpush.bf16.msra.mxu0 %v2567
      %2577 = vmatmul.bf16.gmra.mxu0 %v2564
      %v2578 = vpop.f32.mrf.mxu0
      %v2579 = vadd.f32 0.0, %v2578
      %v2580 = vpop.f32.mrf.mxu0
      %2581 = vdwg.mxu0
      %v2583 = vsel %vm1702, %v2081, 0
      %v2586 = vsel %vm2090, %v1055, 0
      %2588 = vmatpush.bf16.msra.mxu0 0
      %2589 = vmatpush.bf16.msra.mxu0 0
      %2590 = vmatpush.bf16.msra.mxu0 0
      %2591 = vmatpush.bf16.msra.mxu0 0
      %2592 = vmatpush.bf16.msra.mxu0 0
      %2593 = vmatpush.bf16.msra.mxu0 0
      %2594 = vmatpush.bf16.msra.mxu0 0
      %2595 = vmatpush.bf16.msra.mxu0 %v2586
      %2596 = vmatmul.bf16.gmra.mxu0 %v2583
      %v2597 = vpop.f32.mrf.mxu0
      %v2598 = vadd.f32 0.0, %v2597
      %v2599 = vpop.f32.mrf.mxu0
      %2600 = vdwg.mxu0
      %v2602 = vsel %vm1702, %v2082, 0
      %v2605 = vsel %vm2090, %v1056, 0
      %2607 = vmatpush.bf16.msra.mxu0 0
      %2608 = vmatpush.bf16.msra.mxu0 0
      %2609 = vmatpush.bf16.msra.mxu0 0
      %2610 = vmatpush.bf16.msra.mxu0 0
      %2611 = vmatpush.bf16.msra.mxu0 0
      %2612 = vmatpush.bf16.msra.mxu0 0
      %2613 = vmatpush.bf16.msra.mxu0 0
      %2614 = vmatpush.bf16.msra.mxu0 %v2605
      %2615 = vmatmul.bf16.gmra.mxu0 %v2602
      %v2616 = vpop.f32.mrf.mxu0
      %v2617 = vadd.f32 0.0, %v2616
      %v2618 = vpop.f32.mrf.mxu0
      %2619 = vdwg.mxu0
      %v2621 = vsel %vm1702, %v2083, 0
      %v2624 = vsel %vm2090, %v1057, 0
      %2626 = vmatpush.bf16.msra.mxu0 0
      %2627 = vmatpush.bf16.msra.mxu0 0
      %2628 = vmatpush.bf16.msra.mxu0 0
      %2629 = vmatpush.bf16.msra.mxu0 0
      %2630 = vmatpush.bf16.msra.mxu0 0
      %2631 = vmatpush.bf16.msra.mxu0 0
      %2632 = vmatpush.bf16.msra.mxu0 0
      %2633 = vmatpush.bf16.msra.mxu0 %v2624
      %2634 = vmatmul.bf16.gmra.mxu0 %v2621
      %v2635 = vpop.f32.mrf.mxu0
      %v2636 = vadd.f32 0.0, %v2635
      %v2637 = vpop.f32.mrf.mxu0
      %2638 = vdwg.mxu0
      %v2640 = vsel %vm1702, %v2084, 0
      %v2643 = vsel %vm2090, %v1058, 0
      %2645 = vmatpush.bf16.msra.mxu0 0
      %2646 = vmatpush.bf16.msra.mxu0 0
      %2647 = vmatpush.bf16.msra.mxu0 0
      %2648 = vmatpush.bf16.msra.mxu0 0
      %2649 = vmatpush.bf16.msra.mxu0 0
      %2650 = vmatpush.bf16.msra.mxu0 0
      %2651 = vmatpush.bf16.msra.mxu0 0
      %2652 = vmatpush.bf16.msra.mxu0 %v2643
      %2653 = vmatmul.bf16.gmra.mxu0 %v2640
      %v2654 = vpop.f32.mrf.mxu0
      %v2655 = vadd.f32 0.0, %v2654
      %v2656 = vpop.f32.mrf.mxu0
      %2657 = vdwg.mxu0
      %v2659 = vsel %vm1702, %v2085, 0
      %v2662 = vsel %vm2090, %v1059, 0
      %2664 = vmatpush.bf16.msra.mxu0 0
      %2665 = vmatpush.bf16.msra.mxu0 0
      %2666 = vmatpush.bf16.msra.mxu0 0
      %2667 = vmatpush.bf16.msra.mxu0 0
      %2668 = vmatpush.bf16.msra.mxu0 0
      %2669 = vmatpush.bf16.msra.mxu0 0
      %2670 = vmatpush.bf16.msra.mxu0 0
      %2671 = vmatpush.bf16.msra.mxu0 %v2662
      %2672 = vmatmul.bf16.gmra.mxu0 %v2659
      %v2673 = vpop.f32.mrf.mxu0
      %v2674 = vadd.f32 0.0, %v2673
      %v2675 = vpop.f32.mrf.mxu0
      %2676 = vdwg.mxu0
      %v2678 = vsel %vm1702, %v2086, 0
      %v2681 = vsel %vm2090, %v1060, 0
      %2683 = vmatpush.bf16.msra.mxu0 0
      %2684 = vmatpush.bf16.msra.mxu0 0
      %2685 = vmatpush.bf16.msra.mxu0 0
      %2686 = vmatpush.bf16.msra.mxu0 0
      %2687 = vmatpush.bf16.msra.mxu0 0
      %2688 = vmatpush.bf16.msra.mxu0 0
      %2689 = vmatpush.bf16.msra.mxu0 0
      %2690 = vmatpush.bf16.msra.mxu0 %v2681
      %2691 = vmatmul.bf16.gmra.mxu0 %v2678
      %v2692 = vpop.f32.mrf.mxu0
      %v2693 = vadd.f32 0.0, %v2692
      %v2694 = vpop.f32.mrf.mxu0
      %2695 = vdwg.mxu0
      %v2696 = vld [vmem:[%s7] sm:$0xf]
      %v2697 = vld [vmem:[%s7 + $0x4] sm:$0xf]
      %v2698 = vld [vmem:[%s7 + $0x8] sm:$0xf]
      %v2699 = vld [vmem:[%s7 + $0xc] sm:$0xf]
      %v2700 = vld [vmem:[%s7 + $0x10] sm:$0xf]
      %v2701 = vld [vmem:[%s7 + $0x14] sm:$0xf]
      %v2702 = vld [vmem:[%s7 + $0x18] sm:$0xf]
      %v2703 = vld [vmem:[%s7 + $0x1c] sm:$0xf]
      %v2704 = vld [vmem:[%s8] sm:$0x1]
      %v2705 = vpack.c.bf16 %v2123, %v2104
      %v2706 = vpack.c.bf16 %v2161, %v2142
      %v2707 = vpack.c.bf16 %v2199, %v2180
      %v2708 = vpack.c.bf16 %v2237, %v2218
      %v2711 = vunpack.c.l.b16 %v2696
      %v2712 = vunpack.c.l.b16 %v2697
      %v2713 = vpack.c.b16 %v2712, %v2711
      %v2716 = vsel %vm1061, %v2705, 0
      %v2719 = vsel %vm1061, %v2706, 0
      %v2722 = vsel %vm1061, %v2707, 0
      %v2725 = vsel %vm1061, %v2708, 0
      %2727 = vmatpush.bf16.msra.mxu0 0
      %2728 = vmatpush.bf16.msra.mxu0 0
      %2729 = vmatpush.bf16.msra.mxu0 0
      %2730 = vmatpush.bf16.msra.mxu0 0
      %2731 = vmatpush.bf16.msra.mxu0 0
      %2732 = vmatpush.bf16.msra.mxu0 0
      %2733 = vmatpush.bf16.msra.mxu0 0
      %2734 = vmatpush.bf16.msra.mxu0 %v2713
      %2735 = vmatmul.bf16.gmra.mxu0 %v2716
      %v2736 = vpop.f32.mrf.mxu0
      %v2737 = vadd.f32 0.0, %v2736
      %v2738 = vpop.f32.mrf.mxu0
      %v2739 = vadd.f32 0.0, %v2738
      %2740 = vmatmul.bf16.gmra.mxu0 %v2719
      %v2741 = vpop.f32.mrf.mxu0
      %v2742 = vadd.f32 0.0, %v2741
      %v2743 = vpop.f32.mrf.mxu0
      %v2744 = vadd.f32 0.0, %v2743
      %2745 = vmatmul.bf16.gmra.mxu0 %v2722
      %v2746 = vpop.f32.mrf.mxu0
      %v2747 = vadd.f32 0.0, %v2746
      %v2748 = vpop.f32.mrf.mxu0
      %v2749 = vadd.f32 0.0, %v2748
      %2750 = vmatmul.bf16.gmra.mxu0 %v2725
      %v2751 = vpop.f32.mrf.mxu0
      %v2752 = vadd.f32 0.0, %v2751
      %v2753 = vpop.f32.mrf.mxu0
      %v2754 = vadd.f32 0.0, %v2753
      %2755 = vdwg.mxu0
      %v2757 = vperm.slane %v2704, 0
      %v2759 = vadd.f32 %v2757, %v2737
      %v2760 = vadd.f32 %v2757, %v2739
      %v2761 = vadd.f32 %v2757, %v2742
      %v2762 = vadd.f32 %v2757, %v2744
      %v2763 = vadd.f32 %v2757, %v2747
      %v2764 = vadd.f32 %v2757, %v2749
      %v2765 = vadd.f32 %v2757, %v2752
      %v2766 = vadd.f32 %v2757, %v2754
      %v2767 = vpack.c.bf16 %v2275, %v2256
      %v2768 = vpack.c.bf16 %v2313, %v2294
      %v2769 = vpack.c.bf16 %v2351, %v2332
      %v2770 = vpack.c.bf16 %v2389, %v2370
      %v2773 = vunpack.c.l.b16 %v2698
      %v2774 = vunpack.c.l.b16 %v2699
      %v2775 = vpack.c.b16 %v2774, %v2773
      %v2778 = vsel %vm1061, %v2767, 0
      %v2781 = vsel %vm1061, %v2768, 0
      %v2784 = vsel %vm1061, %v2769, 0
      %v2787 = vsel %vm1061, %v2770, 0
      %2789 = vmatpush.bf16.msra.mxu0 0
      %2790 = vmatpush.bf16.msra.mxu0 0
      %2791 = vmatpush.bf16.msra.mxu0 0
      %2792 = vmatpush.bf16.msra.mxu0 0
      %2793 = vmatpush.bf16.msra.mxu0 0
      %2794 = vmatpush.bf16.msra.mxu0 0
      %2795 = vmatpush.bf16.msra.mxu0 0
      %2796 = vmatpush.bf16.msra.mxu0 %v2775
      %2797 = vmatmul.bf16.gmra.mxu0 %v2778
      %v2798 = vpop.f32.mrf.mxu0
      %v2799 = vadd.f32 0.0, %v2798
      %v2800 = vpop.f32.mrf.mxu0
      %v2801 = vadd.f32 0.0, %v2800
      %2802 = vmatmul.bf16.gmra.mxu0 %v2781
      %v2803 = vpop.f32.mrf.mxu0
      %v2804 = vadd.f32 0.0, %v2803
      %v2805 = vpop.f32.mrf.mxu0
      %v2806 = vadd.f32 0.0, %v2805
      %2807 = vmatmul.bf16.gmra.mxu0 %v2784
      %v2808 = vpop.f32.mrf.mxu0
      %v2809 = vadd.f32 0.0, %v2808
      %v2810 = vpop.f32.mrf.mxu0
      %v2811 = vadd.f32 0.0, %v2810
      %2812 = vmatmul.bf16.gmra.mxu0 %v2787
      %v2813 = vpop.f32.mrf.mxu0
      %v2814 = vadd.f32 0.0, %v2813
      %v2815 = vpop.f32.mrf.mxu0
      %v2816 = vadd.f32 0.0, %v2815
      %2817 = vdwg.mxu0
      %v2818 = vadd.f32 %v2759, %v2799
      %v2819 = vadd.f32 %v2760, %v2801
      %v2820 = vadd.f32 %v2761, %v2804
      %v2821 = vadd.f32 %v2762, %v2806
      %v2822 = vadd.f32 %v2763, %v2809
      %v2823 = vadd.f32 %v2764, %v2811
      %v2824 = vadd.f32 %v2765, %v2814
      %v2825 = vadd.f32 %v2766, %v2816
      %v2826 = vpack.c.bf16 %v2427, %v2408
      %v2827 = vpack.c.bf16 %v2465, %v2446
      %v2828 = vpack.c.bf16 %v2503, %v2484
      %v2829 = vpack.c.bf16 %v2541, %v2522
      %v2832 = vunpack.c.l.b16 %v2700
      %v2833 = vunpack.c.l.b16 %v2701
      %v2834 = vpack.c.b16 %v2833, %v2832
      %v2837 = vsel %vm1061, %v2826, 0
      %v2840 = vsel %vm1061, %v2827, 0
      %v2843 = vsel %vm1061, %v2828, 0
      %v2846 = vsel %vm1061, %v2829, 0
      %2848 = vmatpush.bf16.msra.mxu0 0
      %2849 = vmatpush.bf16.msra.mxu0 0
      %2850 = vmatpush.bf16.msra.mxu0 0
      %2851 = vmatpush.bf16.msra.mxu0 0
      %2852 = vmatpush.bf16.msra.mxu0 0
      %2853 = vmatpush.bf16.msra.mxu0 0
      %2854 = vmatpush.bf16.msra.mxu0 0
      %2855 = vmatpush.bf16.msra.mxu0 %v2834
      %2856 = vmatmul.bf16.gmra.mxu0 %v2837
      %v2857 = vpop.f32.mrf.mxu0
      %v2858 = vadd.f32 0.0, %v2857
      %v2859 = vpop.f32.mrf.mxu0
      %v2860 = vadd.f32 0.0, %v2859
      %2861 = vmatmul.bf16.gmra.mxu0 %v2840
      %v2862 = vpop.f32.mrf.mxu0
      %v2863 = vadd.f32 0.0, %v2862
      %v2864 = vpop.f32.mrf.mxu0
      %v2865 = vadd.f32 0.0, %v2864
      %2866 = vmatmul.bf16.gmra.mxu0 %v2843
      %v2867 = vpop.f32.mrf.mxu0
      %v2868 = vadd.f32 0.0, %v2867
      %v2869 = vpop.f32.mrf.mxu0
      %v2870 = vadd.f32 0.0, %v2869
      %2871 = vmatmul.bf16.gmra.mxu0 %v2846
      %v2872 = vpop.f32.mrf.mxu0
      %v2873 = vadd.f32 0.0, %v2872
      %v2874 = vpop.f32.mrf.mxu0
      %v2875 = vadd.f32 0.0, %v2874
      %2876 = vdwg.mxu0
      %v2877 = vadd.f32 %v2818, %v2858
      %v2878 = vadd.f32 %v2819, %v2860
      %v2879 = vadd.f32 %v2820, %v2863
      %v2880 = vadd.f32 %v2821, %v2865
      %v2881 = vadd.f32 %v2822, %v2868
      %v2882 = vadd.f32 %v2823, %v2870
      %v2883 = vadd.f32 %v2824, %v2873
      %v2884 = vadd.f32 %v2825, %v2875
      %v2885 = vpack.c.bf16 %v2579, %v2560
      %v2886 = vpack.c.bf16 %v2617, %v2598
      %v2887 = vpack.c.bf16 %v2655, %v2636
      %v2888 = vpack.c.bf16 %v2693, %v2674
      %v2891 = vunpack.c.l.b16 %v2702
      %v2892 = vunpack.c.l.b16 %v2703
      %v2893 = vpack.c.b16 %v2892, %v2891
      %v2896 = vsel %vm1061, %v2885, 0
      %v2899 = vsel %vm1061, %v2886, 0
      %v2902 = vsel %vm1061, %v2887, 0
      %v2905 = vsel %vm1061, %v2888, 0
      %2907 = vmatpush.bf16.msra.mxu0 0
      %2908 = vmatpush.bf16.msra.mxu0 0
      %2909 = vmatpush.bf16.msra.mxu0 0
      %2910 = vmatpush.bf16.msra.mxu0 0
      %2911 = vmatpush.bf16.msra.mxu0 0
      %2912 = vmatpush.bf16.msra.mxu0 0
      %2913 = vmatpush.bf16.msra.mxu0 0
      %2914 = vmatpush.bf16.msra.mxu0 %v2893
      %2915 = vmatmul.bf16.gmra.mxu0 %v2896
      %v2916 = vpop.f32.mrf.mxu0
      %v2917 = vadd.f32 0.0, %v2916
      %v2918 = vpop.f32.mrf.mxu0
      %v2919 = vadd.f32 0.0, %v2918
      %2920 = vmatmul.bf16.gmra.mxu0 %v2899
      %v2921 = vpop.f32.mrf.mxu0
      %v2922 = vadd.f32 0.0, %v2921
      %v2923 = vpop.f32.mrf.mxu0
      %v2924 = vadd.f32 0.0, %v2923
      %2925 = vmatmul.bf16.gmra.mxu0 %v2902
      %v2926 = vpop.f32.mrf.mxu0
      %v2927 = vadd.f32 0.0, %v2926
      %v2928 = vpop.f32.mrf.mxu0
      %v2929 = vadd.f32 0.0, %v2928
      %2930 = vmatmul.bf16.gmra.mxu0 %v2905
      %v2931 = vpop.f32.mrf.mxu0
      %v2932 = vadd.f32 0.0, %v2931
      %v2933 = vpop.f32.mrf.mxu0
      %v2934 = vadd.f32 0.0, %v2933
      %2935 = vdwg.mxu0
      %v2936 = vadd.f32 %v2877, %v2917
      %v2937 = vadd.f32 %v2878, %v2919
      %v2938 = vadd.f32 %v2879, %v2922
      %v2939 = vadd.f32 %v2880, %v2924
      %v2940 = vadd.f32 %v2881, %v2927
      %v2941 = vadd.f32 %v2882, %v2929
      %v2942 = vadd.f32 %v2883, %v2932
      %v2943 = vadd.f32 %v2884, %v2934
      %v2944 = vadd.f32 %v2936, %v553
      %v2945 = vadd.f32 %v2937, %v554
      %v2946 = vadd.f32 %v2938, %v555
      %v2947 = vadd.f32 %v2939, %v556
      %v2948 = vadd.f32 %v2940, %v557
      %v2949 = vadd.f32 %v2941, %v558
      %v2950 = vadd.f32 %v2942, %v559
      %v2951 = vadd.f32 %v2943, %v560
      %v2952 = vld [vmem:[%s9] sm:$0x1]
      %v2953 = vld [vmem:[%s10] sm:$0x1]
      %v2954 = vsel %vm585, %v2944, 0.0
      %2955 = vadd.xlane.f32.xlu0 %v2954
      %v2956 = vpop.xlane.xlu0 %2955
      %v2957 = vsel %vm585, %v2945, 0.0
      %2958 = vadd.xlane.f32.xlu0 %v2957
      %v2959 = vpop.xlane.xlu0 %2958
      %v2960 = vsel %vm585, %v2946, 0.0
      %2961 = vadd.xlane.f32.xlu0 %v2960
      %v2962 = vpop.xlane.xlu0 %2961
      %v2963 = vsel %vm585, %v2947, 0.0
      %2964 = vadd.xlane.f32.xlu0 %v2963
      %v2965 = vpop.xlane.xlu0 %2964
      %v2966 = vsel %vm585, %v2948, 0.0
      %2967 = vadd.xlane.f32.xlu0 %v2966
      %v2968 = vpop.xlane.xlu0 %2967
      %v2969 = vsel %vm585, %v2949, 0.0
      %2970 = vadd.xlane.f32.xlu0 %v2969
      %v2971 = vpop.xlane.xlu0 %2970
      %v2972 = vsel %vm585, %v2950, 0.0
      %2973 = vadd.xlane.f32.xlu0 %v2972
      %v2974 = vpop.xlane.xlu0 %2973
      %v2975 = vsel %vm585, %v2951, 0.0
      %2976 = vadd.xlane.f32.xlu0 %v2975
      %v2977 = vpop.xlane.xlu0 %2976
      %v2978 = vrcp.pop 32.0
      %v2979 = vmul.f32 32.0, %v2978
      %v2980 = vsub.f32 1.0, %v2979
      %v2981 = vmul.f32 %v2978, %v2980
      %v2982 = vadd.f32 %v2978, %v2981
      %vm2983 = vweird.f32 %v2978
      %v2984 = vsel %vm2983, %v2978, %v2982
      %v2985 = vmul.f32 %v2956, %v2984
      %v2986 = vmul.f32 %v2959, %v2984
      %v2987 = vmul.f32 %v2962, %v2984
      %v2988 = vmul.f32 %v2965, %v2984
      %v2989 = vmul.f32 %v2968, %v2984
      %v2990 = vmul.f32 %v2971, %v2984
      %v2991 = vmul.f32 %v2974, %v2984
      %v2992 = vmul.f32 %v2977, %v2984
      %v2993 = vsub.f32 %v2944, %v2985
      %v2994 = vsub.f32 %v2945, %v2986
      %v2995 = vsub.f32 %v2946, %v2987
      %v2996 = vsub.f32 %v2947, %v2988
      %v2997 = vsub.f32 %v2948, %v2989
      %v2998 = vsub.f32 %v2949, %v2990
      %v2999 = vsub.f32 %v2950, %v2991
      %v3000 = vsub.f32 %v2951, %v2992
      %v3001 = vmul.f32 %v2993, %v2993
      %v3002 = vmul.f32 %v2994, %v2994
      %v3003 = vmul.f32 %v2995, %v2995
      %v3004 = vmul.f32 %v2996, %v2996
      %v3005 = vmul.f32 %v2997, %v2997
      %v3006 = vmul.f32 %v2998, %v2998
      %v3007 = vmul.f32 %v2999, %v2999
      %v3008 = vmul.f32 %v3000, %v3000
      %v3009 = vsel %vm585, %v3001, 0.0
      %3010 = vadd.xlane.f32.xlu0 %v3009
      %v3011 = vpop.xlane.xlu0 %3010
      %v3012 = vsel %vm585, %v3002, 0.0
      %3013 = vadd.xlane.f32.xlu0 %v3012
      %v3014 = vpop.xlane.xlu0 %3013
      %v3015 = vsel %vm585, %v3003, 0.0
      %3016 = vadd.xlane.f32.xlu0 %v3015
      %v3017 = vpop.xlane.xlu0 %3016
      %v3018 = vsel %vm585, %v3004, 0.0
      %3019 = vadd.xlane.f32.xlu0 %v3018
      %v3020 = vpop.xlane.xlu0 %3019
      %v3021 = vsel %vm585, %v3005, 0.0
      %3022 = vadd.xlane.f32.xlu0 %v3021
      %v3023 = vpop.xlane.xlu0 %3022
      %v3024 = vsel %vm585, %v3006, 0.0
      %3025 = vadd.xlane.f32.xlu0 %v3024
      %v3026 = vpop.xlane.xlu0 %3025
      %v3027 = vsel %vm585, %v3007, 0.0
      %3028 = vadd.xlane.f32.xlu0 %v3027
      %v3029 = vpop.xlane.xlu0 %3028
      %v3030 = vsel %vm585, %v3008, 0.0
      %3031 = vadd.xlane.f32.xlu0 %v3030
      %v3032 = vpop.xlane.xlu0 %3031
      %v3033 = vmul.f32 %v3011, %v2984
      %v3034 = vmul.f32 %v3014, %v2984
      %v3035 = vmul.f32 %v3017, %v2984
      %v3036 = vmul.f32 %v3020, %v2984
      %v3037 = vmul.f32 %v3023, %v2984
      %v3038 = vmul.f32 %v3026, %v2984
      %v3039 = vmul.f32 %v3029, %v2984
      %v3040 = vmul.f32 %v3032, %v2984
      %v3041 = vadd.f32 %v3033, 1e-05
      %v3042 = vadd.f32 %v3034, 1e-05
      %v3043 = vadd.f32 %v3035, 1e-05
      %v3044 = vadd.f32 %v3036, 1e-05
      %v3045 = vadd.f32 %v3037, 1e-05
      %v3046 = vadd.f32 %v3038, 1e-05
      %v3047 = vadd.f32 %v3039, 1e-05
      %v3048 = vadd.f32 %v3040, 1e-05
      %v3049 = vrsqrt.pop %v3041
      %v3050 = vmul.f32 %v3049, %v3041
      %v3051 = vmul.f32 %v3050, %v3049
      %v3052 = vmul.f32 0.5, %v3051
      %v3053 = vsub.f32 1.5, %v3052
      %v3054 = vmul.f32 %v3049, %v3053
      %vm3055 = vweird.f32 %v3041
      %vm3056 = vweird.f32 %v3049
      %vm3057 = vmor %vm3055, %vm3056
      %v3058 = vsel %vm3057, %v3049, %v3054
      %v3059 = vrsqrt.pop %v3042
      %v3060 = vmul.f32 %v3059, %v3042
      %v3061 = vmul.f32 %v3060, %v3059
      %v3062 = vmul.f32 0.5, %v3061
      %v3063 = vsub.f32 1.5, %v3062
      %v3064 = vmul.f32 %v3059, %v3063
      %vm3065 = vweird.f32 %v3042
      %vm3066 = vweird.f32 %v3059
      %vm3067 = vmor %vm3065, %vm3066
      %v3068 = vsel %vm3067, %v3059, %v3064
      %v3069 = vrsqrt.pop %v3043
      %v3070 = vmul.f32 %v3069, %v3043
      %v3071 = vmul.f32 %v3070, %v3069
      %v3072 = vmul.f32 0.5, %v3071
      %v3073 = vsub.f32 1.5, %v3072
      %v3074 = vmul.f32 %v3069, %v3073
      %vm3075 = vweird.f32 %v3043
      %vm3076 = vweird.f32 %v3069
      %vm3077 = vmor %vm3075, %vm3076
      %v3078 = vsel %vm3077, %v3069, %v3074
      %v3079 = vrsqrt.pop %v3044
      %v3080 = vmul.f32 %v3079, %v3044
      %v3081 = vmul.f32 %v3080, %v3079
      %v3082 = vmul.f32 0.5, %v3081
      %v3083 = vsub.f32 1.5, %v3082
      %v3084 = vmul.f32 %v3079, %v3083
      %vm3085 = vweird.f32 %v3044
      %vm3086 = vweird.f32 %v3079
      %vm3087 = vmor %vm3085, %vm3086
      %v3088 = vsel %vm3087, %v3079, %v3084
      %v3089 = vrsqrt.pop %v3045
      %v3090 = vmul.f32 %v3089, %v3045
      %v3091 = vmul.f32 %v3090, %v3089
      %v3092 = vmul.f32 0.5, %v3091
      %v3093 = vsub.f32 1.5, %v3092
      %v3094 = vmul.f32 %v3089, %v3093
      %vm3095 = vweird.f32 %v3045
      %vm3096 = vweird.f32 %v3089
      %vm3097 = vmor %vm3095, %vm3096
      %v3098 = vsel %vm3097, %v3089, %v3094
      %v3099 = vrsqrt.pop %v3046
      %v3100 = vmul.f32 %v3099, %v3046
      %v3101 = vmul.f32 %v3100, %v3099
      %v3102 = vmul.f32 0.5, %v3101
      %v3103 = vsub.f32 1.5, %v3102
      %v3104 = vmul.f32 %v3099, %v3103
      %vm3105 = vweird.f32 %v3046
      %vm3106 = vweird.f32 %v3099
      %vm3107 = vmor %vm3105, %vm3106
      %v3108 = vsel %vm3107, %v3099, %v3104
      %v3109 = vrsqrt.pop %v3047
      %v3110 = vmul.f32 %v3109, %v3047
      %v3111 = vmul.f32 %v3110, %v3109
      %v3112 = vmul.f32 0.5, %v3111
      %v3113 = vsub.f32 1.5, %v3112
      %v3114 = vmul.f32 %v3109, %v3113
      %vm3115 = vweird.f32 %v3047
      %vm3116 = vweird.f32 %v3109
      %vm3117 = vmor %vm3115, %vm3116
      %v3118 = vsel %vm3117, %v3109, %v3114
      %v3119 = vrsqrt.pop %v3048
      %v3120 = vmul.f32 %v3119, %v3048
      %v3121 = vmul.f32 %v3120, %v3119
      %v3122 = vmul.f32 0.5, %v3121
      %v3123 = vsub.f32 1.5, %v3122
      %v3124 = vmul.f32 %v3119, %v3123
      %vm3125 = vweird.f32 %v3048
      %vm3126 = vweird.f32 %v3119
      %vm3127 = vmor %vm3125, %vm3126
      %v3128 = vsel %vm3127, %v3119, %v3124
      %v3129 = vmul.f32 %v2993, %v3058
      %v3130 = vmul.f32 %v2994, %v3068
      %v3131 = vmul.f32 %v2995, %v3078
      %v3132 = vmul.f32 %v2996, %v3088
      %v3133 = vmul.f32 %v2997, %v3098
      %v3134 = vmul.f32 %v2998, %v3108
      %v3135 = vmul.f32 %v2999, %v3118
      %v3136 = vmul.f32 %v3000, %v3128
      %v3138 = vperm.slane %v2952, 0
      %v3140 = vmul.f32 %v3129, %v3138
      %v3141 = vmul.f32 %v3130, %v3138
      %v3142 = vmul.f32 %v3131, %v3138
      %v3143 = vmul.f32 %v3132, %v3138
      %v3144 = vmul.f32 %v3133, %v3138
      %v3145 = vmul.f32 %v3134, %v3138
      %v3146 = vmul.f32 %v3135, %v3138
      %v3147 = vmul.f32 %v3136, %v3138
      %v3149 = vperm.slane %v2953, 0
      %v3151 = vadd.f32 %v3140, %v3149
      %v3152 = vadd.f32 %v3141, %v3149
      %v3153 = vadd.f32 %v3142, %v3149
      %v3154 = vadd.f32 %v3143, %v3149
      %v3155 = vadd.f32 %v3144, %v3149
      %v3156 = vadd.f32 %v3145, %v3149
      %v3157 = vadd.f32 %v3146, %v3149
      %v3158 = vadd.f32 %v3147, %v3149
      %v3159 = vpack.c.bf16 %v3152, %v3151
      %v3160 = vpack.c.bf16 %v3154, %v3153
      %v3161 = vpack.c.bf16 %v3156, %v3155
      %v3162 = vpack.c.bf16 %v3158, %v3157
      %v3163 = vld [vmem:[%s11] sm:$0xf]
      %v3164 = vld [vmem:[%s11 + $0x4] sm:$0xf]
      %v3165 = vld [vmem:[%s11 + $0x8] sm:$0xf]
      %v3166 = vld [vmem:[%s11 + $0xc] sm:$0xf]
      %v3167 = vld [vmem:[%s12] sm:$0x1]
      %v3169 = vperm.slane %v3167, 0
      %v3175 = vunpack.c.l.b16 %v3163
      %v3176 = vunpack.c.l.b16 %v3164
      %v3177 = vunpack.c.l.b16 %v3165
      %v3178 = vunpack.c.l.b16 %v3166
      %v3179 = vpack.c.b16 %v3176, %v3175
      %v3180 = vpack.c.b16 %v3178, %v3177
      %v3184 = vsel %vm585, %v3159, 0
      %v3187 = vsel %vm585, %v3160, 0
      %v3190 = vsel %vm585, %v3161, 0
      %v3193 = vsel %vm585, %v3162, 0
      %3195 = vmatpush.bf16.msra.mxu0 0
      %3196 = vmatpush.bf16.msra.mxu0 0
      %3197 = vmatpush.bf16.msra.mxu0 0
      %3198 = vmatpush.bf16.msra.mxu0 0
      %3199 = vmatpush.bf16.msra.mxu0 0
      %3200 = vmatpush.bf16.msra.mxu0 0
      %3201 = vmatpush.bf16.msra.mxu0 %v3180
      %3202 = vmatpush.bf16.msra.mxu0 %v3179
      %3203 = vmatmul.bf16.gmra.mxu0 %v3184
      %v3204 = vpop.f32.mrf.mxu0
      %v3205 = vadd.f32 %v3169, %v3204
      %v3206 = vpop.f32.mrf.mxu0
      %v3207 = vadd.f32 %v3169, %v3206
      %3208 = vmatmul.bf16.gmra.mxu0 %v3187
      %v3209 = vpop.f32.mrf.mxu0
      %v3210 = vadd.f32 %v3169, %v3209
      %v3211 = vpop.f32.mrf.mxu0
      %v3212 = vadd.f32 %v3169, %v3211
      %3213 = vmatmul.bf16.gmra.mxu0 %v3190
      %v3214 = vpop.f32.mrf.mxu0
      %v3215 = vadd.f32 %v3169, %v3214
      %v3216 = vpop.f32.mrf.mxu0
      %v3217 = vadd.f32 %v3169, %v3216
      %3218 = vmatmul.bf16.gmra.mxu0 %v3193
      %v3219 = vpop.f32.mrf.mxu0
      %v3220 = vadd.f32 %v3169, %v3219
      %v3221 = vpop.f32.mrf.mxu0
      %v3222 = vadd.f32 %v3169, %v3221
      %3223 = vdwg.mxu0
      %v3224 = vmul.f32 %v3205, 0.5
      %v3225 = vmul.f32 %v3207, 0.5
      %v3226 = vmul.f32 %v3210, 0.5
      %v3227 = vmul.f32 %v3212, 0.5
      %v3228 = vmul.f32 %v3215, 0.5
      %v3229 = vmul.f32 %v3217, 0.5
      %v3230 = vmul.f32 %v3220, 0.5
      %v3231 = vmul.f32 %v3222, 0.5
      %v3232 = vmul.f32 %v3205, 0.70710677
      %v3233 = vmul.f32 %v3207, 0.70710677
      %v3234 = vmul.f32 %v3210, 0.70710677
      %v3235 = vmul.f32 %v3212, 0.70710677
      %v3236 = vmul.f32 %v3215, 0.70710677
      %v3237 = vmul.f32 %v3217, 0.70710677
      %v3238 = vmul.f32 %v3220, 0.70710677
      %v3239 = vmul.f32 %v3222, 0.70710677
      %v3240 = vmul.f32 %v3232, %v3232
      %v3241 = vmin.f32 16.0, %v3240
      %v3242 = vmul.f32 %v3241, 2.1237322e-06
      %v3243 = vadd.f32 %v3242, 0.00028619796
      %v3244 = vmul.f32 %v3241, %v3243
      %v3245 = vadd.f32 %v3244, 0.0036580483
      %v3246 = vmul.f32 %v3241, %v3245
      %v3247 = vadd.f32 %v3246, 0.05243302
      %v3248 = vmul.f32 %v3241, %v3247
      %v3249 = vadd.f32 %v3248, 0.18741608
      %v3250 = vmul.f32 %v3241, %v3249
      %v3251 = vadd.f32 %v3250, 1.1283791
      %v3252 = vmul.f32 %v3232, %v3251
      %v3253 = vmul.f32 %v3241, 3.8918573e-05
      %v3254 = vadd.f32 %v3253, 0.001143296
      %v3255 = vmul.f32 %v3241, %v3254
      %v3256 = vadd.f32 %v3255, 0.014752088
      %v3257 = vmul.f32 %v3241, %v3256
      %v3258 = vadd.f32 %v3257, 0.112945676
      %v3259 = vmul.f32 %v3241, %v3258
      %v3260 = vadd.f32 %v3259, 0.4994258
      %v3261 = vmul.f32 %v3241, %v3260
      %v3262 = vadd.f32 %v3261, 1.0
      %v3263 = vrcp.pop %v3262
      %v3264 = vmul.f32 %v3262, %v3263
      %v3265 = vsub.f32 1.0, %v3264
      %v3266 = vmul.f32 %v3263, %v3265
      %v3267 = vadd.f32 %v3263, %v3266
      %vm3268 = vweird.f32 %v3262
      %vm3269 = vweird.f32 %v3263
      %vm3270 = vmor %vm3268, %vm3269
      %v3271 = vsel %vm3270, %v3263, %v3267
      %v3272 = vand.u32 2147483647, %v3262
      %vm3273 = vcmp.eq.f32.partialorder %v3272, 8.507059e+37
      %v3274 = vand.u32 %v3262, 2147483648
      %v3275 = vor.u32 1.1754944e-38, %v3274
      %v3276 = vsel %vm3273, %v3275, %v3271
      %v3277 = vmul.f32 %v3252, %v3276
      %v3278 = vmin.f32 %v3277, 1.0
      %v3279 = vmax.f32 %v3278, -1.0
      %v3280 = vmul.f32 %v3233, %v3233
      %v3281 = vmin.f32 16.0, %v3280
      %v3282 = vmul.f32 %v3281, 2.1237322e-06
      %v3283 = vadd.f32 %v3282, 0.00028619796
      %v3284 = vmul.f32 %v3281, %v3283
      %v3285 = vadd.f32 %v3284, 0.0036580483
      %v3286 = vmul.f32 %v3281, %v3285
      %v3287 = vadd.f32 %v3286, 0.05243302
      %v3288 = vmul.f32 %v3281, %v3287
      %v3289 = vadd.f32 %v3288, 0.18741608
      %v3290 = vmul.f32 %v3281, %v3289
      %v3291 = vadd.f32 %v3290, 1.1283791
      %v3292 = vmul.f32 %v3233, %v3291
      %v3293 = vmul.f32 %v3281, 3.8918573e-05
      %v3294 = vadd.f32 %v3293, 0.001143296
      %v3295 = vmul.f32 %v3281, %v3294
      %v3296 = vadd.f32 %v3295, 0.014752088
      %v3297 = vmul.f32 %v3281, %v3296
      %v3298 = vadd.f32 %v3297, 0.112945676
      %v3299 = vmul.f32 %v3281, %v3298
      %v3300 = vadd.f32 %v3299, 0.4994258
      %v3301 = vmul.f32 %v3281, %v3300
      %v3302 = vadd.f32 %v3301, 1.0
      %v3303 = vrcp.pop %v3302
      %v3304 = vmul.f32 %v3302, %v3303
      %v3305 = vsub.f32 1.0, %v3304
      %v3306 = vmul.f32 %v3303, %v3305
      %v3307 = vadd.f32 %v3303, %v3306
      %vm3308 = vweird.f32 %v3302
      %vm3309 = vweird.f32 %v3303
      %vm3310 = vmor %vm3308, %vm3309
      %v3311 = vsel %vm3310, %v3303, %v3307
      %v3312 = vand.u32 2147483647, %v3302
      %vm3313 = vcmp.eq.f32.partialorder %v3312, 8.507059e+37
      %v3314 = vand.u32 %v3302, 2147483648
      %v3315 = vor.u32 1.1754944e-38, %v3314
      %v3316 = vsel %vm3313, %v3315, %v3311
      %v3317 = vmul.f32 %v3292, %v3316
      %v3318 = vmin.f32 %v3317, 1.0
      %v3319 = vmax.f32 %v3318, -1.0
      %v3320 = vmul.f32 %v3234, %v3234
      %v3321 = vmin.f32 16.0, %v3320
      %v3322 = vmul.f32 %v3321, 2.1237322e-06
      %v3323 = vadd.f32 %v3322, 0.00028619796
      %v3324 = vmul.f32 %v3321, %v3323
      %v3325 = vadd.f32 %v3324, 0.0036580483
      %v3326 = vmul.f32 %v3321, %v3325
      %v3327 = vadd.f32 %v3326, 0.05243302
      %v3328 = vmul.f32 %v3321, %v3327
      %v3329 = vadd.f32 %v3328, 0.18741608
      %v3330 = vmul.f32 %v3321, %v3329
      %v3331 = vadd.f32 %v3330, 1.1283791
      %v3332 = vmul.f32 %v3234, %v3331
      %v3333 = vmul.f32 %v3321, 3.8918573e-05
      %v3334 = vadd.f32 %v3333, 0.001143296
      %v3335 = vmul.f32 %v3321, %v3334
      %v3336 = vadd.f32 %v3335, 0.014752088
      %v3337 = vmul.f32 %v3321, %v3336
      %v3338 = vadd.f32 %v3337, 0.112945676
      %v3339 = vmul.f32 %v3321, %v3338
      %v3340 = vadd.f32 %v3339, 0.4994258
      %v3341 = vmul.f32 %v3321, %v3340
      %v3342 = vadd.f32 %v3341, 1.0
      %v3343 = vrcp.pop %v3342
      %v3344 = vmul.f32 %v3342, %v3343
      %v3345 = vsub.f32 1.0, %v3344
      %v3346 = vmul.f32 %v3343, %v3345
      %v3347 = vadd.f32 %v3343, %v3346
      %vm3348 = vweird.f32 %v3342
      %vm3349 = vweird.f32 %v3343
      %vm3350 = vmor %vm3348, %vm3349
      %v3351 = vsel %vm3350, %v3343, %v3347
      %v3352 = vand.u32 2147483647, %v3342
      %vm3353 = vcmp.eq.f32.partialorder %v3352, 8.507059e+37
      %v3354 = vand.u32 %v3342, 2147483648
      %v3355 = vor.u32 1.1754944e-38, %v3354
      %v3356 = vsel %vm3353, %v3355, %v3351
      %v3357 = vmul.f32 %v3332, %v3356
      %v3358 = vmin.f32 %v3357, 1.0
      %v3359 = vmax.f32 %v3358, -1.0
      %v3360 = vmul.f32 %v3235, %v3235
      %v3361 = vmin.f32 16.0, %v3360
      %v3362 = vmul.f32 %v3361, 2.1237322e-06
      %v3363 = vadd.f32 %v3362, 0.00028619796
      %v3364 = vmul.f32 %v3361, %v3363
      %v3365 = vadd.f32 %v3364, 0.0036580483
      %v3366 = vmul.f32 %v3361, %v3365
      %v3367 = vadd.f32 %v3366, 0.05243302
      %v3368 = vmul.f32 %v3361, %v3367
      %v3369 = vadd.f32 %v3368, 0.18741608
      %v3370 = vmul.f32 %v3361, %v3369
      %v3371 = vadd.f32 %v3370, 1.1283791
      %v3372 = vmul.f32 %v3235, %v3371
      %v3373 = vmul.f32 %v3361, 3.8918573e-05
      %v3374 = vadd.f32 %v3373, 0.001143296
      %v3375 = vmul.f32 %v3361, %v3374
      %v3376 = vadd.f32 %v3375, 0.014752088
      %v3377 = vmul.f32 %v3361, %v3376
      %v3378 = vadd.f32 %v3377, 0.112945676
      %v3379 = vmul.f32 %v3361, %v3378
      %v3380 = vadd.f32 %v3379, 0.4994258
      %v3381 = vmul.f32 %v3361, %v3380
      %v3382 = vadd.f32 %v3381, 1.0
      %v3383 = vrcp.pop %v3382
      %v3384 = vmul.f32 %v3382, %v3383
      %v3385 = vsub.f32 1.0, %v3384
      %v3386 = vmul.f32 %v3383, %v3385
      %v3387 = vadd.f32 %v3383, %v3386
      %vm3388 = vweird.f32 %v3382
      %vm3389 = vweird.f32 %v3383
      %vm3390 = vmor %vm3388, %vm3389
      %v3391 = vsel %vm3390, %v3383, %v3387
      %v3392 = vand.u32 2147483647, %v3382
      %vm3393 = vcmp.eq.f32.partialorder %v3392, 8.507059e+37
      %v3394 = vand.u32 %v3382, 2147483648
      %v3395 = vor.u32 1.1754944e-38, %v3394
      %v3396 = vsel %vm3393, %v3395, %v3391
      %v3397 = vmul.f32 %v3372, %v3396
      %v3398 = vmin.f32 %v3397, 1.0
      %v3399 = vmax.f32 %v3398, -1.0
      %v3400 = vmul.f32 %v3236, %v3236
      %v3401 = vmin.f32 16.0, %v3400
      %v3402 = vmul.f32 %v3401, 2.1237322e-06
      %v3403 = vadd.f32 %v3402, 0.00028619796
      %v3404 = vmul.f32 %v3401, %v3403
      %v3405 = vadd.f32 %v3404, 0.0036580483
      %v3406 = vmul.f32 %v3401, %v3405
      %v3407 = vadd.f32 %v3406, 0.05243302
      %v3408 = vmul.f32 %v3401, %v3407
      %v3409 = vadd.f32 %v3408, 0.18741608
      %v3410 = vmul.f32 %v3401, %v3409
      %v3411 = vadd.f32 %v3410, 1.1283791
      %v3412 = vmul.f32 %v3236, %v3411
      %v3413 = vmul.f32 %v3401, 3.8918573e-05
      %v3414 = vadd.f32 %v3413, 0.001143296
      %v3415 = vmul.f32 %v3401, %v3414
      %v3416 = vadd.f32 %v3415, 0.014752088
      %v3417 = vmul.f32 %v3401, %v3416
      %v3418 = vadd.f32 %v3417, 0.112945676
      %v3419 = vmul.f32 %v3401, %v3418
      %v3420 = vadd.f32 %v3419, 0.4994258
      %v3421 = vmul.f32 %v3401, %v3420
      %v3422 = vadd.f32 %v3421, 1.0
      %v3423 = vrcp.pop %v3422
      %v3424 = vmul.f32 %v3422, %v3423
      %v3425 = vsub.f32 1.0, %v3424
      %v3426 = vmul.f32 %v3423, %v3425
      %v3427 = vadd.f32 %v3423, %v3426
      %vm3428 = vweird.f32 %v3422
      %vm3429 = vweird.f32 %v3423
      %vm3430 = vmor %vm3428, %vm3429
      %v3431 = vsel %vm3430, %v3423, %v3427
      %v3432 = vand.u32 2147483647, %v3422
      %vm3433 = vcmp.eq.f32.partialorder %v3432, 8.507059e+37
      %v3434 = vand.u32 %v3422, 2147483648
      %v3435 = vor.u32 1.1754944e-38, %v3434
      %v3436 = vsel %vm3433, %v3435, %v3431
      %v3437 = vmul.f32 %v3412, %v3436
      %v3438 = vmin.f32 %v3437, 1.0
      %v3439 = vmax.f32 %v3438, -1.0
      %v3440 = vmul.f32 %v3237, %v3237
      %v3441 = vmin.f32 16.0, %v3440
      %v3442 = vmul.f32 %v3441, 2.1237322e-06
      %v3443 = vadd.f32 %v3442, 0.00028619796
      %v3444 = vmul.f32 %v3441, %v3443
      %v3445 = vadd.f32 %v3444, 0.0036580483
      %v3446 = vmul.f32 %v3441, %v3445
      %v3447 = vadd.f32 %v3446, 0.05243302
      %v3448 = vmul.f32 %v3441, %v3447
      %v3449 = vadd.f32 %v3448, 0.18741608
      %v3450 = vmul.f32 %v3441, %v3449
      %v3451 = vadd.f32 %v3450, 1.1283791
      %v3452 = vmul.f32 %v3237, %v3451
      %v3453 = vmul.f32 %v3441, 3.8918573e-05
      %v3454 = vadd.f32 %v3453, 0.001143296
      %v3455 = vmul.f32 %v3441, %v3454
      %v3456 = vadd.f32 %v3455, 0.014752088
      %v3457 = vmul.f32 %v3441, %v3456
      %v3458 = vadd.f32 %v3457, 0.112945676
      %v3459 = vmul.f32 %v3441, %v3458
      %v3460 = vadd.f32 %v3459, 0.4994258
      %v3461 = vmul.f32 %v3441, %v3460
      %v3462 = vadd.f32 %v3461, 1.0
      %v3463 = vrcp.pop %v3462
      %v3464 = vmul.f32 %v3462, %v3463
      %v3465 = vsub.f32 1.0, %v3464
      %v3466 = vmul.f32 %v3463, %v3465
      %v3467 = vadd.f32 %v3463, %v3466
      %vm3468 = vweird.f32 %v3462
      %vm3469 = vweird.f32 %v3463
      %vm3470 = vmor %vm3468, %vm3469
      %v3471 = vsel %vm3470, %v3463, %v3467
      %v3472 = vand.u32 2147483647, %v3462
      %vm3473 = vcmp.eq.f32.partialorder %v3472, 8.507059e+37
      %v3474 = vand.u32 %v3462, 2147483648
      %v3475 = vor.u32 1.1754944e-38, %v3474
      %v3476 = vsel %vm3473, %v3475, %v3471
      %v3477 = vmul.f32 %v3452, %v3476
      %v3478 = vmin.f32 %v3477, 1.0
      %v3479 = vmax.f32 %v3478, -1.0
      %v3480 = vmul.f32 %v3238, %v3238
      %v3481 = vmin.f32 16.0, %v3480
      %v3482 = vmul.f32 %v3481, 2.1237322e-06
      %v3483 = vadd.f32 %v3482, 0.00028619796
      %v3484 = vmul.f32 %v3481, %v3483
      %v3485 = vadd.f32 %v3484, 0.0036580483
      %v3486 = vmul.f32 %v3481, %v3485
      %v3487 = vadd.f32 %v3486, 0.05243302
      %v3488 = vmul.f32 %v3481, %v3487
      %v3489 = vadd.f32 %v3488, 0.18741608
      %v3490 = vmul.f32 %v3481, %v3489
      %v3491 = vadd.f32 %v3490, 1.1283791
      %v3492 = vmul.f32 %v3238, %v3491
      %v3493 = vmul.f32 %v3481, 3.8918573e-05
      %v3494 = vadd.f32 %v3493, 0.001143296
      %v3495 = vmul.f32 %v3481, %v3494
      %v3496 = vadd.f32 %v3495, 0.014752088
      %v3497 = vmul.f32 %v3481, %v3496
      %v3498 = vadd.f32 %v3497, 0.112945676
      %v3499 = vmul.f32 %v3481, %v3498
      %v3500 = vadd.f32 %v3499, 0.4994258
      %v3501 = vmul.f32 %v3481, %v3500
      %v3502 = vadd.f32 %v3501, 1.0
      %v3503 = vrcp.pop %v3502
      %v3504 = vmul.f32 %v3502, %v3503
      %v3505 = vsub.f32 1.0, %v3504
      %v3506 = vmul.f32 %v3503, %v3505
      %v3507 = vadd.f32 %v3503, %v3506
      %vm3508 = vweird.f32 %v3502
      %vm3509 = vweird.f32 %v3503
      %vm3510 = vmor %vm3508, %vm3509
      %v3511 = vsel %vm3510, %v3503, %v3507
      %v3512 = vand.u32 2147483647, %v3502
      %vm3513 = vcmp.eq.f32.partialorder %v3512, 8.507059e+37
      %v3514 = vand.u32 %v3502, 2147483648
      %v3515 = vor.u32 1.1754944e-38, %v3514
      %v3516 = vsel %vm3513, %v3515, %v3511
      %v3517 = vmul.f32 %v3492, %v3516
      %v3518 = vmin.f32 %v3517, 1.0
      %v3519 = vmax.f32 %v3518, -1.0
      %v3520 = vmul.f32 %v3239, %v3239
      %v3521 = vmin.f32 16.0, %v3520
      %v3522 = vmul.f32 %v3521, 2.1237322e-06
      %v3523 = vadd.f32 %v3522, 0.00028619796
      %v3524 = vmul.f32 %v3521, %v3523
      %v3525 = vadd.f32 %v3524, 0.0036580483
      %v3526 = vmul.f32 %v3521, %v3525
      %v3527 = vadd.f32 %v3526, 0.05243302
      %v3528 = vmul.f32 %v3521, %v3527
      %v3529 = vadd.f32 %v3528, 0.18741608
      %v3530 = vmul.f32 %v3521, %v3529
      %v3531 = vadd.f32 %v3530, 1.1283791
      %v3532 = vmul.f32 %v3239, %v3531
      %v3533 = vmul.f32 %v3521, 3.8918573e-05
      %v3534 = vadd.f32 %v3533, 0.001143296
      %v3535 = vmul.f32 %v3521, %v3534
      %v3536 = vadd.f32 %v3535, 0.014752088
      %v3537 = vmul.f32 %v3521, %v3536
      %v3538 = vadd.f32 %v3537, 0.112945676
      %v3539 = vmul.f32 %v3521, %v3538
      %v3540 = vadd.f32 %v3539, 0.4994258
      %v3541 = vmul.f32 %v3521, %v3540
      %v3542 = vadd.f32 %v3541, 1.0
      %v3543 = vrcp.pop %v3542
      %v3544 = vmul.f32 %v3542, %v3543
      %v3545 = vsub.f32 1.0, %v3544
      %v3546 = vmul.f32 %v3543, %v3545
      %v3547 = vadd.f32 %v3543, %v3546
      %vm3548 = vweird.f32 %v3542
      %vm3549 = vweird.f32 %v3543
      %vm3550 = vmor %vm3548, %vm3549
      %v3551 = vsel %vm3550, %v3543, %v3547
      %v3552 = vand.u32 2147483647, %v3542
      %vm3553 = vcmp.eq.f32.partialorder %v3552, 8.507059e+37
      %v3554 = vand.u32 %v3542, 2147483648
      %v3555 = vor.u32 1.1754944e-38, %v3554
      %v3556 = vsel %vm3553, %v3555, %v3551
      %v3557 = vmul.f32 %v3532, %v3556
      %v3558 = vmin.f32 %v3557, 1.0
      %v3559 = vmax.f32 %v3558, -1.0
      %v3560 = vadd.f32 %v3279, 1.0
      %v3561 = vadd.f32 %v3319, 1.0
      %v3562 = vadd.f32 %v3359, 1.0
      %v3563 = vadd.f32 %v3399, 1.0
      %v3564 = vadd.f32 %v3439, 1.0
      %v3565 = vadd.f32 %v3479, 1.0
      %v3566 = vadd.f32 %v3519, 1.0
      %v3567 = vadd.f32 %v3559, 1.0
      %v3568 = vmul.f32 %v3224, %v3560
      %v3569 = vmul.f32 %v3225, %v3561
      %v3570 = vmul.f32 %v3226, %v3562
      %v3571 = vmul.f32 %v3227, %v3563
      %v3572 = vmul.f32 %v3228, %v3564
      %v3573 = vmul.f32 %v3229, %v3565
      %v3574 = vmul.f32 %v3230, %v3566
      %v3575 = vmul.f32 %v3231, %v3567
      %v3576 = vpack.c.bf16 %v3569, %v3568
      %v3577 = vpack.c.bf16 %v3571, %v3570
      %v3578 = vpack.c.bf16 %v3573, %v3572
      %v3579 = vpack.c.bf16 %v3575, %v3574
      %v3580 = vld [vmem:[%s13] sm:$0xf]
      %v3581 = vld [vmem:[%s13 + $0x4] sm:$0xf]
      %v3582 = vld [vmem:[%s13 + $0x8] sm:$0xf]
      %v3583 = vld [vmem:[%s13 + $0xc] sm:$0xf]
      %v3584 = vld [vmem:[%s13 + $0x10] sm:$0xf]
      %v3585 = vld [vmem:[%s13 + $0x14] sm:$0xf]
      %v3586 = vld [vmem:[%s13 + $0x18] sm:$0xf]
      %v3587 = vld [vmem:[%s13 + $0x1c] sm:$0xf]
      %v3588 = vld [vmem:[%s14] sm:$0x1]
      %v3590 = vperm.slane %v3588, 0
      %v3600 = vunpack.c.l.b16 %v3580
      %v3601 = vunpack.c.l.b16 %v3581
      %v3602 = vunpack.c.l.b16 %v3582
      %v3603 = vunpack.c.l.b16 %v3583
      %v3604 = vunpack.c.l.b16 %v3584
      %v3605 = vunpack.c.l.b16 %v3585
      %v3606 = vunpack.c.l.b16 %v3586
      %v3607 = vunpack.c.l.b16 %v3587
      %v3608 = vpack.c.b16 %v3601, %v3600
      %v3609 = vpack.c.b16 %v3603, %v3602
      %v3610 = vpack.c.b16 %v3605, %v3604
      %v3611 = vpack.c.b16 %v3607, %v3606
      %vm3616 = vcmask 523264
      %v3618 = vsel %vm3616, %v3576, 0
      %v3621 = vsel %vm3616, %v3577, 0
      %v3624 = vsel %vm3616, %v3578, 0
      %v3627 = vsel %vm3616, %v3579, 0
      %3629 = vmatpush.bf16.msra.mxu0 0
      %3630 = vmatpush.bf16.msra.mxu0 0
      %3631 = vmatpush.bf16.msra.mxu0 0
      %3632 = vmatpush.bf16.msra.mxu0 0
      %3633 = vmatpush.bf16.msra.mxu0 %v3611
      %3634 = vmatpush.bf16.msra.mxu0 %v3610
      %3635 = vmatpush.bf16.msra.mxu0 %v3609
      %3636 = vmatpush.bf16.msra.mxu0 %v3608
      %3637 = vmatmul.bf16.gmra.mxu0 %v3618
      %v3638 = vpop.f32.mrf.mxu0
      %v3639 = vadd.f32 %v3590, %v3638
      %v3640 = vpop.f32.mrf.mxu0
      %v3641 = vadd.f32 %v3590, %v3640
      %3642 = vmatmul.bf16.gmra.mxu0 %v3621
      %v3643 = vpop.f32.mrf.mxu0
      %v3644 = vadd.f32 %v3590, %v3643
      %v3645 = vpop.f32.mrf.mxu0
      %v3646 = vadd.f32 %v3590, %v3645
      %3647 = vmatmul.bf16.gmra.mxu0 %v3624
      %v3648 = vpop.f32.mrf.mxu0
      %v3649 = vadd.f32 %v3590, %v3648
      %v3650 = vpop.f32.mrf.mxu0
      %v3651 = vadd.f32 %v3590, %v3650
      %3652 = vmatmul.bf16.gmra.mxu0 %v3627
      %v3653 = vpop.f32.mrf.mxu0
      %v3654 = vadd.f32 %v3590, %v3653
      %v3655 = vpop.f32.mrf.mxu0
      %v3656 = vadd.f32 %v3590, %v3655
      %3657 = vdwg.mxu0
      %v3658 = vadd.f32 %v3639, %v3151
      %v3659 = vadd.f32 %v3641, %v3152
      %v3660 = vadd.f32 %v3644, %v3153
      %v3661 = vadd.f32 %v3646, %v3154
      %v3662 = vadd.f32 %v3649, %v3155
      %v3663 = vadd.f32 %v3651, %v3156
      %v3664 = vadd.f32 %v3654, %v3157
      %v3665 = vadd.f32 %v3656, %v3158
      %v3666 = vld [vmem:[%s15] sm:$0x1]
      %v3667 = vld [vmem:[%s16] sm:$0x1]
      %v3668 = vsel %vm585, %v3658, 0.0
      %3669 = vadd.xlane.f32.xlu0 %v3668
      %v3670 = vpop.xlane.xlu0 %3669
      %v3671 = vsel %vm585, %v3659, 0.0
      %3672 = vadd.xlane.f32.xlu0 %v3671
      %v3673 = vpop.xlane.xlu0 %3672
      %v3674 = vsel %vm585, %v3660, 0.0
      %3675 = vadd.xlane.f32.xlu0 %v3674
      %v3676 = vpop.xlane.xlu0 %3675
      %v3677 = vsel %vm585, %v3661, 0.0
      %3678 = vadd.xlane.f32.xlu0 %v3677
      %v3679 = vpop.xlane.xlu0 %3678
      %v3680 = vsel %vm585, %v3662, 0.0
      %3681 = vadd.xlane.f32.xlu0 %v3680
      %v3682 = vpop.xlane.xlu0 %3681
      %v3683 = vsel %vm585, %v3663, 0.0
      %3684 = vadd.xlane.f32.xlu0 %v3683
      %v3685 = vpop.xlane.xlu0 %3684
      %v3686 = vsel %vm585, %v3664, 0.0
      %3687 = vadd.xlane.f32.xlu0 %v3686
      %v3688 = vpop.xlane.xlu0 %3687
      %v3689 = vsel %vm585, %v3665, 0.0
      %3690 = vadd.xlane.f32.xlu0 %v3689
      %v3691 = vpop.xlane.xlu0 %3690
      %v3692 = vmul.f32 %v3670, %v2984
      %v3693 = vmul.f32 %v3673, %v2984
      %v3694 = vmul.f32 %v3676, %v2984
      %v3695 = vmul.f32 %v3679, %v2984
      %v3696 = vmul.f32 %v3682, %v2984
      %v3697 = vmul.f32 %v3685, %v2984
      %v3698 = vmul.f32 %v3688, %v2984
      %v3699 = vmul.f32 %v3691, %v2984
      %v3700 = vsub.f32 %v3658, %v3692
      %v3701 = vsub.f32 %v3659, %v3693
      %v3702 = vsub.f32 %v3660, %v3694
      %v3703 = vsub.f32 %v3661, %v3695
      %v3704 = vsub.f32 %v3662, %v3696
      %v3705 = vsub.f32 %v3663, %v3697
      %v3706 = vsub.f32 %v3664, %v3698
      %v3707 = vsub.f32 %v3665, %v3699
      %v3708 = vmul.f32 %v3700, %v3700
      %v3709 = vmul.f32 %v3701, %v3701
      %v3710 = vmul.f32 %v3702, %v3702
      %v3711 = vmul.f32 %v3703, %v3703
      %v3712 = vmul.f32 %v3704, %v3704
      %v3713 = vmul.f32 %v3705, %v3705
      %v3714 = vmul.f32 %v3706, %v3706
      %v3715 = vmul.f32 %v3707, %v3707
      %v3716 = vsel %vm585, %v3708, 0.0
      %3717 = vadd.xlane.f32.xlu0 %v3716
      %v3718 = vpop.xlane.xlu0 %3717
      %v3719 = vsel %vm585, %v3709, 0.0
      %3720 = vadd.xlane.f32.xlu0 %v3719
      %v3721 = vpop.xlane.xlu0 %3720
      %v3722 = vsel %vm585, %v3710, 0.0
      %3723 = vadd.xlane.f32.xlu0 %v3722
      %v3724 = vpop.xlane.xlu0 %3723
      %v3725 = vsel %vm585, %v3711, 0.0
      %3726 = vadd.xlane.f32.xlu0 %v3725
      %v3727 = vpop.xlane.xlu0 %3726
      %v3728 = vsel %vm585, %v3712, 0.0
      %3729 = vadd.xlane.f32.xlu0 %v3728
      %v3730 = vpop.xlane.xlu0 %3729
      %v3731 = vsel %vm585, %v3713, 0.0
      %3732 = vadd.xlane.f32.xlu0 %v3731
      %v3733 = vpop.xlane.xlu0 %3732
      %v3734 = vsel %vm585, %v3714, 0.0
      %3735 = vadd.xlane.f32.xlu0 %v3734
      %v3736 = vpop.xlane.xlu0 %3735
      %v3737 = vsel %vm585, %v3715, 0.0
      %3738 = vadd.xlane.f32.xlu0 %v3737
      %v3739 = vpop.xlane.xlu0 %3738
      %v3740 = vmul.f32 %v3718, %v2984
      %v3741 = vmul.f32 %v3721, %v2984
      %v3742 = vmul.f32 %v3724, %v2984
      %v3743 = vmul.f32 %v3727, %v2984
      %v3744 = vmul.f32 %v3730, %v2984
      %v3745 = vmul.f32 %v3733, %v2984
      %v3746 = vmul.f32 %v3736, %v2984
      %v3747 = vmul.f32 %v3739, %v2984
      %v3748 = vadd.f32 %v3740, 1e-05
      %v3749 = vadd.f32 %v3741, 1e-05
      %v3750 = vadd.f32 %v3742, 1e-05
      %v3751 = vadd.f32 %v3743, 1e-05
      %v3752 = vadd.f32 %v3744, 1e-05
      %v3753 = vadd.f32 %v3745, 1e-05
      %v3754 = vadd.f32 %v3746, 1e-05
      %v3755 = vadd.f32 %v3747, 1e-05
      %v3756 = vrsqrt.pop %v3748
      %v3757 = vmul.f32 %v3756, %v3748
      %v3758 = vmul.f32 %v3757, %v3756
      %v3759 = vmul.f32 0.5, %v3758
      %v3760 = vsub.f32 1.5, %v3759
      %v3761 = vmul.f32 %v3756, %v3760
      %vm3762 = vweird.f32 %v3748
      %vm3763 = vweird.f32 %v3756
      %vm3764 = vmor %vm3762, %vm3763
      %v3765 = vsel %vm3764, %v3756, %v3761
      %v3766 = vrsqrt.pop %v3749
      %v3767 = vmul.f32 %v3766, %v3749
      %v3768 = vmul.f32 %v3767, %v3766
      %v3769 = vmul.f32 0.5, %v3768
      %v3770 = vsub.f32 1.5, %v3769
      %v3771 = vmul.f32 %v3766, %v3770
      %vm3772 = vweird.f32 %v3749
      %vm3773 = vweird.f32 %v3766
      %vm3774 = vmor %vm3772, %vm3773
      %v3775 = vsel %vm3774, %v3766, %v3771
      %v3776 = vrsqrt.pop %v3750
      %v3777 = vmul.f32 %v3776, %v3750
      %v3778 = vmul.f32 %v3777, %v3776
      %v3779 = vmul.f32 0.5, %v3778
      %v3780 = vsub.f32 1.5, %v3779
      %v3781 = vmul.f32 %v3776, %v3780
      %vm3782 = vweird.f32 %v3750
      %vm3783 = vweird.f32 %v3776
      %vm3784 = vmor %vm3782, %vm3783
      %v3785 = vsel %vm3784, %v3776, %v3781
      %v3786 = vrsqrt.pop %v3751
      %v3787 = vmul.f32 %v3786, %v3751
      %v3788 = vmul.f32 %v3787, %v3786
      %v3789 = vmul.f32 0.5, %v3788
      %v3790 = vsub.f32 1.5, %v3789
      %v3791 = vmul.f32 %v3786, %v3790
      %vm3792 = vweird.f32 %v3751
      %vm3793 = vweird.f32 %v3786
      %vm3794 = vmor %vm3792, %vm3793
      %v3795 = vsel %vm3794, %v3786, %v3791
      %v3796 = vrsqrt.pop %v3752
      %v3797 = vmul.f32 %v3796, %v3752
      %v3798 = vmul.f32 %v3797, %v3796
      %v3799 = vmul.f32 0.5, %v3798
      %v3800 = vsub.f32 1.5, %v3799
      %v3801 = vmul.f32 %v3796, %v3800
      %vm3802 = vweird.f32 %v3752
      %vm3803 = vweird.f32 %v3796
      %vm3804 = vmor %vm3802, %vm3803
      %v3805 = vsel %vm3804, %v3796, %v3801
      %v3806 = vrsqrt.pop %v3753
      %v3807 = vmul.f32 %v3806, %v3753
      %v3808 = vmul.f32 %v3807, %v3806
      %v3809 = vmul.f32 0.5, %v3808
      %v3810 = vsub.f32 1.5, %v3809
      %v3811 = vmul.f32 %v3806, %v3810
      %vm3812 = vweird.f32 %v3753
      %vm3813 = vweird.f32 %v3806
      %vm3814 = vmor %vm3812, %vm3813
      %v3815 = vsel %vm3814, %v3806, %v3811
      %v3816 = vrsqrt.pop %v3754
      %v3817 = vmul.f32 %v3816, %v3754
      %v3818 = vmul.f32 %v3817, %v3816
      %v3819 = vmul.f32 0.5, %v3818
      %v3820 = vsub.f32 1.5, %v3819
      %v3821 = vmul.f32 %v3816, %v3820
      %vm3822 = vweird.f32 %v3754
      %vm3823 = vweird.f32 %v3816
      %vm3824 = vmor %vm3822, %vm3823
      %v3825 = vsel %vm3824, %v3816, %v3821
      %v3826 = vrsqrt.pop %v3755
      %v3827 = vmul.f32 %v3826, %v3755
      %v3828 = vmul.f32 %v3827, %v3826
      %v3829 = vmul.f32 0.5, %v3828
      %v3830 = vsub.f32 1.5, %v3829
      %v3831 = vmul.f32 %v3826, %v3830
      %vm3832 = vweird.f32 %v3755
      %vm3833 = vweird.f32 %v3826
      %vm3834 = vmor %vm3832, %vm3833
      %v3835 = vsel %vm3834, %v3826, %v3831
      %v3836 = vmul.f32 %v3700, %v3765
      %v3837 = vmul.f32 %v3701, %v3775
      %v3838 = vmul.f32 %v3702, %v3785
      %v3839 = vmul.f32 %v3703, %v3795
      %v3840 = vmul.f32 %v3704, %v3805
      %v3841 = vmul.f32 %v3705, %v3815
      %v3842 = vmul.f32 %v3706, %v3825
      %v3843 = vmul.f32 %v3707, %v3835
      %v3845 = vperm.slane %v3666, 0
      %v3847 = vmul.f32 %v3836, %v3845
      %v3848 = vmul.f32 %v3837, %v3845
      %v3849 = vmul.f32 %v3838, %v3845
      %v3850 = vmul.f32 %v3839, %v3845
      %v3851 = vmul.f32 %v3840, %v3845
      %v3852 = vmul.f32 %v3841, %v3845
      %v3853 = vmul.f32 %v3842, %v3845
      %v3854 = vmul.f32 %v3843, %v3845
      %v3856 = vperm.slane %v3667, 0
      %v3858 = vadd.f32 %v3847, %v3856
      %v3859 = vadd.f32 %v3848, %v3856
      %v3860 = vadd.f32 %v3849, %v3856
      %v3861 = vadd.f32 %v3850, %v3856
      %v3862 = vadd.f32 %v3851, %v3856
      %v3863 = vadd.f32 %v3852, %v3856
      %v3864 = vadd.f32 %v3853, %v3856
      %v3865 = vadd.f32 %v3854, %v3856
      %3866 = vst.msk [vmem:[%s550] sm:$0xff] %vm585, %v3858
      %3867 = vst.msk [vmem:[%s550 + $0x8] sm:$0xff] %vm585, %v3859
      %3868 = vst.msk [vmem:[%s550 + $0x10] sm:$0xff] %vm585, %v3860
      %3869 = vst.msk [vmem:[%s550 + $0x18] sm:$0xff] %vm585, %v3861
      %3870 = vst.msk [vmem:[%s550 + $0x20] sm:$0xff] %vm585, %v3862
      %3871 = vst.msk [vmem:[%s550 + $0x28] sm:$0xff] %vm585, %v3863
      %3872 = vst.msk [vmem:[%s550 + $0x30] sm:$0xff] %vm585, %v3864
      %3873 = vst.msk [vmem:[%s550 + $0x38] sm:$0xff] %vm585, %v3865
      %s3874 = smul.u32 8, %s28
      %p3875 = scmp.lt.s32.totalorder %s3874, 15
      %s3876 = scalar_select %p3875, %s3874, 15
      %s3877 = smul.addr %s3876, 8
      %s3878 = scalar_lea.vmem %s17, %s3877
      // Predicated region
      $region89: #{tpu_custom_call.1} parent=87 // pred_check
        %p3879 = pneg %p408
      $region90: #{tpu_custom_call.1} parent=87 // pred_check_branch
        %3881 = sbr.rel (%p3879) target = $region92
      $region91: #{tpu_custom_call.1} parent=87 // pred_region
        %s3882 = smul.u32 8, %s28
      $region92: #{tpu_custom_call.1} parent=87 // pred_fallthru
        _
    $region88: #{tpu_custom_call.1} parent=5 // pred_fallthru
      _
    %p3883 = scmp.le.s32.totalorder 2, %s23
    // Predicated region
    $region93: #{tpu_custom_call.1} parent=5 // pred_check
      %p3884 = pneg %p3883
    $region94: #{tpu_custom_call.1} parent=5 // pred_check_branch
      %3886 = sbr.rel (%p3884) target = $region96
    $region95: #{tpu_custom_call.1} parent=5 // pred_region
      %s3887 = ssub.s32 %s23, 2
      // Predicated region
      $region97: #{tpu_custom_call.1} parent=95 // pred_check
        %p3888 = pneg %p414
      $region98: #{tpu_custom_call.1} parent=95 // pred_check_branch
        %3890 = sbr.rel (%p3888) target = $region100
      $region99: #{tpu_custom_call.1} parent=95 // pred_region
        %s3891 = smul.u32 8, %s29
        %p3892 = scmp.lt.s32.totalorder %s3891, 15
        %s3893 = scalar_select %p3892, %s3891, 15
        %s3894 = smul.addr %s3893, 8
        %s3895 = scalar_lea.vmem %s17, %s3894
      $region100: #{tpu_custom_call.1} parent=95 // pred_fallthru
        _
    $region96: #{tpu_custom_call.1} parent=5 // pred_fallthru
      _
  $region6: #{tpu_custom_call.1} parent=0 // loop_footer
    %s27 = sadd.s32 1, %s23
  $region7: #{tpu_custom_call.1} parent=0 // loop_footer_branch
    %22 = sbr.rel target = $region3
  $region8: #{tpu_custom_call.1} parent=0 // loop_exit
    _

</llo_original>
